<compile_context>
chip_gen: v7x
topology: tpu7x:2x2x1
jax: 0.10.0
libtpu: 0.0.40
codegen_flags: <defaults>
</compile_context>

<pallas_src>
import functools

import jax
import jax.numpy as jnp
from jax import lax
from jax.experimental import pallas as pl
from jax.experimental.pallas import tpu as pltpu


def _pad8(n):
    return ((n + 7) // 8) * 8


# ---------------------------------------------------------------------------
# Derived geometry for the flat-lane layout (per image; the batched widths
# just add (bt-1)*H*W).
# ---------------------------------------------------------------------------
def _lenet_dims(H0, W0, KH=5, KW=5):
    OH1, OW1 = H0 - KH + 1, W0 - KW + 1
    assert OH1 % 2 == 0 and OW1 % 2 == 0
    PH1, PW1 = OH1 // 2, OW1 // 2
    OH2, OW2 = PH1 - KH + 1, PW1 - KW + 1
    assert OH2 % 2 == 0 and OW2 % 2 == 0
    PH2, PW2 = OH2 // 2, OW2 // 2
    return dict(
        OH1=OH1, OW1=OW1, PH1=PH1, PW1=PW1, OH2=OH2, OW2=OW2,
        PH2=PH2, PW2=PW2,
        L1=(OH1 - 1) * W0 + OW1,                    # conv1 accumulator width
        L1p=(OH1 - 2) * W0 + OW1 - 1,               # pooled1 (sparse) width
        L2=2 * (OH2 - 1) * W0 + 2 * (OW2 - 1) + 1,  # conv2 accumulator width
        L2p=4 * (PH2 - 1) * W0 + 4 * (PW2 - 1) + 1, # pooled2 (sparse) width
    )


# ---------------------------------------------------------------------------
# Fused kernel: one grid step == one batch tile of `Bt` images.
# ---------------------------------------------------------------------------
def _lenet_kernel(
    x_ref,                       # (C0p, Bt*HW)        bf16  (channel-padded)
    w1_ref, b1_ref,              # (OC1p, KK*C0p) bf16, (OC1p, 1) f32
    w2_ref, b2_ref,              # (OC2, KK*OC1p) bf16, (OC2, 1) f32
    f1_ref, g1_ref,              # (F1, KKf*OC2)  bf16, (F1, 1)  f32
    f2_ref, g2_ref,              # (F2, F1)       bf16, (F2, 1)  f32
    f3_ref, g3_ref,              # (NC, F2)       bf16, (NC, 1)  f32
    o_ref,                       # (NC, Bt)       f32  logits (batch on lanes)
    p1_ref, a1_ref, s1_ref,      # VMEM scratch
    p2_ref, a2_ref, s2_ref, pf_ref,
    *, W0, KH, KW, HW, Bt, C0p, OC1p, OC2,
    L1, L1p, L2, L2p, PH2, PW2,
):
    f32, bf16 = jnp.float32, jnp.bfloat16
    LB1 = (Bt - 1) * HW + L1
    LB1p = (Bt - 1) * HW + L1p
    LB2 = (Bt - 1) * HW + L2
    LB2p = (Bt - 1) * HW + L2p

    # ---- conv1: im2col patch (25 aligned slab copies) then ONE matmul -----
    for kh in range(KH):
        for kw in range(KW):
            t = kh * KW + kw
            p1_ref[pl.ds(t * C0p, C0p), :] = x_ref[:, pl.ds(kh * W0 + kw, LB1)]
    a1 = jnp.dot(w1_ref[...], p1_ref[...], preferred_element_type=f32)
    a1_ref[...] = jnp.maximum(a1 + b1_ref[...], 0.0).astype(bf16)

    # ---- maxpool1 (2x2/2): shifted-slice max on the bf16 map ---------------
    s1_ref[...] = jnp.maximum(
        jnp.maximum(a1_ref[:, pl.ds(0, LB1p)], a1_ref[:, pl.ds(1, LB1p)]),
        jnp.maximum(a1_ref[:, pl.ds(W0, LB1p)], a1_ref[:, pl.ds(W0 + 1, LB1p)]))

    # ---- conv2: im2col (tap stride 2 in the flat domain), one matmul -------
    for kh in range(KH):
        for kw in range(KW):
            t = kh * KW + kw
            p2_ref[pl.ds(t * OC1p, OC1p), :] = (
                s1_ref[:, pl.ds(2 * kh * W0 + 2 * kw, LB2)])
    a2 = jnp.dot(w2_ref[...], p2_ref[...], preferred_element_type=f32)
    a2_ref[...] = jnp.maximum(a2 + b2_ref[...], 0.0).astype(bf16)

    # ---- maxpool2 (2x2/2): valid at anchors 4p*W0 + 4q ----------------------
    s2_ref[...] = jnp.maximum(
        jnp.maximum(a2_ref[:, pl.ds(0, LB2p)], a2_ref[:, pl.ds(2, LB2p)]),
        jnp.maximum(a2_ref[:, pl.ds(2 * W0, LB2p)],
                    a2_ref[:, pl.ds(2 * W0 + 2, LB2p)]))

    # ---- fc1 feature compaction: sparse pooled map -> (400, Bt) patch ------
    # row order (t = p*PW2 + q, c) matches the repacked fc1 weight (== torch
    # (c, h, w) flatten).  Batch ends up on the lane axis.
    for t in range(PH2 * PW2):
        p, q = divmod(t, PW2)
        anchor = 4 * p * W0 + 4 * q
        cols = [s2_ref[:, pl.ds(b * HW + anchor, 1)] for b in range(Bt)]
        pf_ref[pl.ds(t * OC2, OC2), :] = jnp.concatenate(cols, axis=1)

    # ---- fc1/fc2/fc3: single matmuls with batch on lanes -------------------
    y = jnp.dot(f1_ref[...], pf_ref[...], preferred_element_type=f32)
    y = jnp.maximum(y + g1_ref[...], 0.0).astype(bf16)
    y = jnp.dot(f2_ref[...], y, preferred_element_type=f32)
    y = jnp.maximum(y + g2_ref[...], 0.0).astype(bf16)
    y = jnp.dot(f3_ref[...], y, preferred_element_type=f32)
    o_ref[...] = y + g3_ref[...]


# ---------------------------------------------------------------------------
# One-time weight repack (PyTorch layout -> kernel layout).  Channel dims are
# zero-padded to multiples of 8 so every in-kernel slab store is aligned and
# every padded value is a genuine zero (megacore / uninitialized-VMEM safe).
# ---------------------------------------------------------------------------
def prepare_params(params, input_size=32):
    bf16, f32 = jnp.bfloat16, jnp.float32
    w1 = params["conv1_w"]                      # (OC1, C0, KH, KW)
    w2 = params["conv2_w"]                      # (OC2, OC1, KH, KW)
    OC1, C0, KH, KW = w1.shape
    OC2 = w2.shape[0]
    KK = KH * KW
    C0p, OC1p = _pad8(C0), _pad8(OC1)
    d = _lenet_dims(input_size, input_size, KH, KW)
    PH2, PW2 = d["PH2"], d["PW2"]
    fc1 = params["fc1_w"]                       # (F1, OC2*PH2*PW2)
    F1 = fc1.shape[0]
    assert fc1.shape[1] == OC2 * PH2 * PW2

    w1r = w1.reshape(OC1, C0, KK).transpose(0, 2, 1)          # (OC1, KK, C0)
    w1r = jnp.pad(w1r, ((0, OC1p - OC1), (0, 0), (0, C0p - C0)))
    w2r = w2.reshape(OC2, OC1, KK).transpose(0, 2, 1)         # (OC2, KK, OC1)
    w2r = jnp.pad(w2r, ((0, 0), (0, 0), (0, OC1p - OC1)))
    b1 = jnp.pad(params["conv1_b"], (0, OC1p - OC1))

    return {
        "w1": w1r.reshape(OC1p, KK * C0p).astype(bf16),
        "b1": b1.reshape(OC1p, 1).astype(f32),
        "w2": w2r.reshape(OC2, KK * OC1p).astype(bf16),
        "b2": params["conv2_b"].reshape(OC2, 1).astype(f32),
        "f1": fc1.reshape(F1, OC2, PH2 * PW2).transpose(0, 2, 1)
                 .reshape(F1, PH2 * PW2 * OC2).astype(bf16),
        "g1": params["fc1_b"].reshape(F1, 1).astype(f32),
        "f2": params["fc2_w"].astype(bf16),
        "g2": params["fc2_b"].reshape(-1, 1).astype(f32),
        "f3": params["fc3_w"].astype(bf16),
        "g3": params["fc3_b"].reshape(-1, 1).astype(f32),
    }


# ---------------------------------------------------------------------------
# Forward pass: a single pallas_call over batch tiles.
# ---------------------------------------------------------------------------
@functools.partial(jax.jit, static_argnames=("batch_tile",))
def lenet_forward(prep, x, batch_tile=8):
    B, C0, H0, W0 = x.shape
    HW = H0 * W0
    C0p = _pad8(C0)
    OC1p = prep["w1"].shape[0]
    KK = prep["w1"].shape[1] // C0p
    KH = KW = int(round(KK ** 0.5))             # square kernels (LeNet)
    assert KH * KW == KK
    OC2 = prep["w2"].shape[0]
    NC = prep["f3"].shape[0]
    d = _lenet_dims(H0, W0, KH, KW)

    # >= 2 grid steps whenever B >= 2 (keeps both v7x TCs busy).
    bt = max(1, min(batch_tile, (B + 1) // 2))
    nsteps = -(-B // bt)
    Bp = nsteps * bt

    # One fused XLA pass: pad batch & channels, put images contiguously on the
    # lane axis, cast to bf16.
    xq = jnp.pad(x.reshape(B, C0, HW), ((0, Bp - B), (0, C0p - C0), (0, 0)))
    xf = jnp.transpose(xq, (1, 0, 2)).reshape(C0p, Bp * HW).astype(jnp.bfloat16)

    LB1 = (bt - 1) * HW + d["L1"]
    LB1p = (bt - 1) * HW + d["L1p"]
    LB2 = (bt - 1) * HW + d["L2"]
    LB2p = (bt - 1) * HW + d["L2p"]

    kernel = functools.partial(
        _lenet_kernel, W0=W0, KH=KH, KW=KW, HW=HW, Bt=bt,
        C0p=C0p, OC1p=OC1p, OC2=OC2,
        L1=d["L1"], L1p=d["L1p"], L2=d["L2"], L2p=d["L2p"],
        PH2=d["PH2"], PW2=d["PW2"])

    def fixed(shape):
        zeros = (0,) * len(shape)
        return pl.BlockSpec(shape, lambda i, _z=zeros: _z)  # VMEM-resident

    out = pl.pallas_call(
        kernel,
        out_shape=jax.ShapeDtypeStruct((nsteps, NC, bt), jnp.float32),
        grid=(nsteps,),
        in_specs=[
            pl.BlockSpec((C0p, bt * HW), lambda i: (0, i)),
            fixed(prep["w1"].shape), fixed(prep["b1"].shape),
            fixed(prep["w2"].shape), fixed(prep["b2"].shape),
            fixed(prep["f1"].shape), fixed(prep["g1"].shape),
            fixed(prep["f2"].shape), fixed(prep["g2"].shape),
            fixed(prep["f3"].shape), fixed(prep["g3"].shape),
        ],
        out_specs=pl.BlockSpec((None, NC, bt), lambda i: (i, 0, 0)),
        scratch_shapes=[
            pltpu.VMEM((KK * C0p, LB1), jnp.bfloat16),   # conv1 im2col patch
            pltpu.VMEM((OC1p, LB1), jnp.bfloat16),       # conv1 relu map
            pltpu.VMEM((OC1p, LB1p), jnp.bfloat16),      # pooled1 (sparse)
            pltpu.VMEM((KK * OC1p, LB2), jnp.bfloat16),  # conv2 im2col patch
            pltpu.VMEM((OC2, LB2), jnp.bfloat16),        # conv2 relu map
            pltpu.VMEM((OC2, LB2p), jnp.bfloat16),       # pooled2 (sparse)
            pltpu.VMEM((d["PH2"] * d["PW2"] * OC2, bt), jnp.bfloat16),  # fc1 patch
        ],
        compiler_params=pltpu.CompilerParams(
            dimension_semantics=("parallel",),
            vmem_limit_bytes=48 * 1024 * 1024),
    )(xf, prep["w1"], prep["b1"], prep["w2"], prep["b2"],
      prep["f1"], prep["g1"], prep["f2"], prep["g2"],
      prep["f3"], prep["g3"])

    return out.transpose(0, 2, 1).reshape(Bp, NC)[:B]


# ---------------------------------------------------------------------------
# Parameter init (PyTorch default U(-1/sqrt(fan_in), 1/sqrt(fan_in))) and a
# pure-JAX reference for correctness checking.
# ---------------------------------------------------------------------------
def init_lenet_params(key, num_classes=10, input_size=32):
    fc1_in = 16 * 5 * 5 if input_size == 32 else 16 * 4 * 4

    def uniform(k, shape, fan_in):
        bound = 1.0 / jnp.sqrt(jnp.asarray(fan_in, jnp.float32))
        return jax.random.uniform(k, shape, jnp.float32, -bound, bound)

    keys = jax.random.split(key, 10)
    return {
        "conv1_w": uniform(keys[0], (6, 3, 5, 5), 3 * 5 * 5),
        "conv1_b": uniform(keys[1], (6,), 3 * 5 * 5),
        "conv2_w": uniform(keys[2], (16, 6, 5, 5), 6 * 5 * 5),
        "conv2_b": uniform(keys[3], (16,), 6 * 5 * 5),
        "fc1_w": uniform(keys[4], (120, fc1_in), fc1_in),
        "fc1_b": uniform(keys[5], (120,), fc1_in),
        "fc2_w": uniform(keys[6], (84, 120), 120),
        "fc2_b": uniform(keys[7], (84,), 120),
        "fc3_w": uniform(keys[8], (num_classes, 84), 84),
        "fc3_b": uniform(keys[9], (num_classes,), 84),
    }


def lenet_reference(params, x):
    dn = ("NCHW", "OIHW", "NCHW")
    out = lax.conv_general_dilated(x, params["conv1_w"], (1, 1), "VALID",
                                   dimension_numbers=dn)
    out = jax.nn.relu(out + params["conv1_b"][None, :, None, None])
    out = lax.reduce_window(out, -jnp.inf, lax.max,
                            (1, 1, 2, 2), (1, 1, 2, 2), "VALID")
    out = lax.conv_general_dilated(out, params["conv2_w"], (1, 1), "VALID",
                                   dimension_numbers=dn)
    out = jax.nn.relu(out + params["conv2_b"][None, :, None, None])
    out = lax.reduce_window(out, -jnp.inf, lax.max,
                            (1, 1, 2, 2), (1, 1, 2, 2), "VALID")
    out = out.reshape(out.shape[0], -1)
    out = jax.nn.relu(out @ params["fc1_w"].T + params["fc1_b"])
    out = jax.nn.relu(out @ params["fc2_w"].T + params["fc2_b"])
    return out @ params["fc3_w"].T + params["fc3_b"]


if __name__ == "__main__":
    key = jax.random.PRNGKey(0)
    pkey, xkey = jax.random.split(key)

    num_classes, input_size = 10, 32
    params = init_lenet_params(pkey, num_classes=num_classes,
                               input_size=input_size)
    prep = prepare_params(params, input_size=input_size)     # one-time repack

    # Small deterministic check (bt == 1, 2 grid steps).
    batch = 2
    x = jax.random.normal(xkey, (batch, 3, input_size, input_size),
                          jnp.float32)
    logits = jax.block_until_ready(lenet_forward(prep, x))
    assert logits.shape == (batch, num_classes), logits.shape
    assert bool(jnp.all(jnp.isfinite(logits)))
    ref = lenet_reference(params, x)
    assert jnp.allclose(logits, ref, atol=5e-2, rtol=5e-2), (
        float(jnp.max(jnp.abs(logits - ref))))

    # Exercise the batched (bt > 1) path: batch on the lane axis.
    batch8 = 8
    x8 = jax.random.normal(jax.random.PRNGKey(1),
                           (batch8, 3, input_size, input_size), jnp.float32)
    logits8 = jax.block_until_ready(lenet_forward(prep, x8))
    ref8 = lenet_reference(params, x8)
    assert logits8.shape == (batch8, num_classes)
    assert jnp.allclose(logits8, ref8, atol=5e-2, rtol=5e-2), (
        float(jnp.max(jnp.abs(logits8 - ref8))))

    print("KERNEL_OK")
</pallas_src>

<mosaic_0001>
module attributes {stable_mosaic.version = 11 : i64} {
  func.func @_lenet_kernel(%arg0: i32, %arg1: memref<8x1024xbf16, #tpu.memory_space<vmem>>, %arg2: memref<8x200xbf16, #tpu.memory_space<vmem>>, %arg3: memref<8x1xf32, #tpu.memory_space<vmem>>, %arg4: memref<16x200xbf16, #tpu.memory_space<vmem>>, %arg5: memref<16x1xf32, #tpu.memory_space<vmem>>, %arg6: memref<120x400xbf16, #tpu.memory_space<vmem>>, %arg7: memref<120x1xf32, #tpu.memory_space<vmem>>, %arg8: memref<84x120xbf16, #tpu.memory_space<vmem>>, %arg9: memref<84x1xf32, #tpu.memory_space<vmem>>, %arg10: memref<10x84xbf16, #tpu.memory_space<vmem>>, %arg11: memref<10x1xf32, #tpu.memory_space<vmem>>, %arg12: memref<1x10x1xf32, #tpu.memory_space<vmem>>, %arg13: memref<200x892xbf16, #tpu.memory_space<vmem>>, %arg14: memref<8x892xbf16, #tpu.memory_space<vmem>>, %arg15: memref<8x859xbf16, #tpu.memory_space<vmem>>, %arg16: memref<200x595xbf16, #tpu.memory_space<vmem>>, %arg17: memref<16x595xbf16, #tpu.memory_space<vmem>>, %arg18: memref<16x529xbf16, #tpu.memory_space<vmem>>, %arg19: memref<400x1xbf16, #tpu.memory_space<vmem>>) attributes {dimension_semantics = [#tpu.dimension_semantics<parallel>], iteration_bounds = array<i64: 2>, scalar_prefetch = 0 : i64, scratch_operands = 7 : i64, tpu.core_type = #tpu.core_type<tc>, window_params = [{transform_indices = @transform_0, window_bounds = array<i64: 8, 1024>}, {pipeline_mode = #tpu.pipeline_mode<synchronous>, transform_indices = @transform_1, window_bounds = array<i64: 8, 200>}, {pipeline_mode = #tpu.pipeline_mode<synchronous>, transform_indices = @transform_2, window_bounds = array<i64: 8, 1>}, {pipeline_mode = #tpu.pipeline_mode<synchronous>, transform_indices = @transform_3, window_bounds = array<i64: 16, 200>}, {pipeline_mode = #tpu.pipeline_mode<synchronous>, transform_indices = @transform_4, window_bounds = array<i64: 16, 1>}, {pipeline_mode = #tpu.pipeline_mode<synchronous>, transform_indices = @transform_5, window_bounds = array<i64: 120, 400>}, {pipeline_mode = #tpu.pipeline_mode<synchronous>, transform_indices = @transform_6, window_bounds = array<i64: 120, 1>}, {pipeline_mode = #tpu.pipeline_mode<synchronous>, transform_indices = @transform_7, window_bounds = array<i64: 84, 120>}, {pipeline_mode = #tpu.pipeline_mode<synchronous>, transform_indices = @transform_8, window_bounds = array<i64: 84, 1>}, {pipeline_mode = #tpu.pipeline_mode<synchronous>, transform_indices = @transform_9, window_bounds = array<i64: 10, 84>}, {pipeline_mode = #tpu.pipeline_mode<synchronous>, transform_indices = @transform_10, window_bounds = array<i64: 10, 1>}, {transform_indices = @transform_11, window_bounds = array<i64: 1, 10, 1>}]} {
    %c0 = arith.constant 0 : index
    %c0_0 = arith.constant 0 : index
    %0 = vector.load %arg1[%c0, %c0_0] : memref<8x1024xbf16, #tpu.memory_space<vmem>>, vector<8x892xbf16>
    %c0_1 = arith.constant 0 : index
    %c0_2 = arith.constant 0 : index
    %1 = vector.load %arg13[%c0_1, %c0_2] : memref<200x892xbf16, #tpu.memory_space<vmem>>, vector<8x892xbf16>
    tpu.vector_store %arg13[%c0_1, %c0_2], %0 {strides = array<i32>} : memref<200x892xbf16, #tpu.memory_space<vmem>>, vector<8x892xbf16>,
    %c0_3 = arith.constant 0 : index
    %c1 = arith.constant 1 : index
    %2 = vector.load %arg1[%c0_3, %c1] : memref<8x1024xbf16, #tpu.memory_space<vmem>>, vector<8x892xbf16>
    %c8 = arith.constant 8 : index
    %c0_4 = arith.constant 0 : index
    %3 = vector.load %arg13[%c8, %c0_4] : memref<200x892xbf16, #tpu.memory_space<vmem>>, vector<8x892xbf16>
    tpu.vector_store %arg13[%c8, %c0_4], %2 {strides = array<i32>} : memref<200x892xbf16, #tpu.memory_space<vmem>>, vector<8x892xbf16>,
    %c0_5 = arith.constant 0 : index
    %c2 = arith.constant 2 : index
    %4 = vector.load %arg1[%c0_5, %c2] : memref<8x1024xbf16, #tpu.memory_space<vmem>>, vector<8x892xbf16>
    %c16 = arith.constant 16 : index
    %c0_6 = arith.constant 0 : index
    %5 = vector.load %arg13[%c16, %c0_6] : memref<200x892xbf16, #tpu.memory_space<vmem>>, vector<8x892xbf16>
    tpu.vector_store %arg13[%c16, %c0_6], %4 {strides = array<i32>} : memref<200x892xbf16, #tpu.memory_space<vmem>>, vector<8x892xbf16>,
    %c0_7 = arith.constant 0 : index
    %c3 = arith.constant 3 : index
    %6 = vector.load %arg1[%c0_7, %c3] : memref<8x1024xbf16, #tpu.memory_space<vmem>>, vector<8x892xbf16>
    %c24 = arith.constant 24 : index
    %c0_8 = arith.constant 0 : index
    %7 = vector.load %arg13[%c24, %c0_8] : memref<200x892xbf16, #tpu.memory_space<vmem>>, vector<8x892xbf16>
    tpu.vector_store %arg13[%c24, %c0_8], %6 {strides = array<i32>} : memref<200x892xbf16, #tpu.memory_space<vmem>>, vector<8x892xbf16>,
    %c0_9 = arith.constant 0 : index
    %c4 = arith.constant 4 : index
    %8 = vector.load %arg1[%c0_9, %c4] : memref<8x1024xbf16, #tpu.memory_space<vmem>>, vector<8x892xbf16>
    %c32 = arith.constant 32 : index
    %c0_10 = arith.constant 0 : index
    %9 = vector.load %arg13[%c32, %c0_10] : memref<200x892xbf16, #tpu.memory_space<vmem>>, vector<8x892xbf16>
    tpu.vector_store %arg13[%c32, %c0_10], %8 {strides = array<i32>} : memref<200x892xbf16, #tpu.memory_space<vmem>>, vector<8x892xbf16>,
    %c0_11 = arith.constant 0 : index
    %c32_12 = arith.constant 32 : index
    %10 = vector.load %arg1[%c0_11, %c32_12] : memref<8x1024xbf16, #tpu.memory_space<vmem>>, vector<8x892xbf16>
    %c40 = arith.constant 40 : index
    %c0_13 = arith.constant 0 : index
    %11 = vector.load %arg13[%c40, %c0_13] : memref<200x892xbf16, #tpu.memory_space<vmem>>, vector<8x892xbf16>
    tpu.vector_store %arg13[%c40, %c0_13], %10 {strides = array<i32>} : memref<200x892xbf16, #tpu.memory_space<vmem>>, vector<8x892xbf16>,
    %c0_14 = arith.constant 0 : index
    %c33 = arith.constant 33 : index
    %12 = vector.load %arg1[%c0_14, %c33] : memref<8x1024xbf16, #tpu.memory_space<vmem>>, vector<8x892xbf16>
    %c48 = arith.constant 48 : index
    %c0_15 = arith.constant 0 : index
    %13 = vector.load %arg13[%c48, %c0_15] : memref<200x892xbf16, #tpu.memory_space<vmem>>, vector<8x892xbf16>
    tpu.vector_store %arg13[%c48, %c0_15], %12 {strides = array<i32>} : memref<200x892xbf16, #tpu.memory_space<vmem>>, vector<8x892xbf16>,
    %c0_16 = arith.constant 0 : index
    %c34 = arith.constant 34 : index
    %14 = vector.load %arg1[%c0_16, %c34] : memref<8x1024xbf16, #tpu.memory_space<vmem>>, vector<8x892xbf16>
    %c56 = arith.constant 56 : index
    %c0_17 = arith.constant 0 : index
    %15 = vector.load %arg13[%c56, %c0_17] : memref<200x892xbf16, #tpu.memory_space<vmem>>, vector<8x892xbf16>
    tpu.vector_store %arg13[%c56, %c0_17], %14 {strides = array<i32>} : memref<200x892xbf16, #tpu.memory_space<vmem>>, vector<8x892xbf16>,
    %c0_18 = arith.constant 0 : index
    %c35 = arith.constant 35 : index
    %16 = vector.load %arg1[%c0_18, %c35] : memref<8x1024xbf16, #tpu.memory_space<vmem>>, vector<8x892xbf16>
    %c64 = arith.constant 64 : index
    %c0_19 = arith.constant 0 : index
    %17 = vector.load %arg13[%c64, %c0_19] : memref<200x892xbf16, #tpu.memory_space<vmem>>, vector<8x892xbf16>
    tpu.vector_store %arg13[%c64, %c0_19], %16 {strides = array<i32>} : memref<200x892xbf16, #tpu.memory_space<vmem>>, vector<8x892xbf16>,
    %c0_20 = arith.constant 0 : index
    %c36 = arith.constant 36 : index
    %18 = vector.load %arg1[%c0_20, %c36] : memref<8x1024xbf16, #tpu.memory_space<vmem>>, vector<8x892xbf16>
    %c72 = arith.constant 72 : index
    %c0_21 = arith.constant 0 : index
    %19 = vector.load %arg13[%c72, %c0_21] : memref<200x892xbf16, #tpu.memory_space<vmem>>, vector<8x892xbf16>
    tpu.vector_store %arg13[%c72, %c0_21], %18 {strides = array<i32>} : memref<200x892xbf16, #tpu.memory_space<vmem>>, vector<8x892xbf16>,
    %c0_22 = arith.constant 0 : index
    %c64_23 = arith.constant 64 : index
    %20 = vector.load %arg1[%c0_22, %c64_23] : memref<8x1024xbf16, #tpu.memory_space<vmem>>, vector<8x892xbf16>
    %c80 = arith.constant 80 : index
    %c0_24 = arith.constant 0 : index
    %21 = vector.load %arg13[%c80, %c0_24] : memref<200x892xbf16, #tpu.memory_space<vmem>>, vector<8x892xbf16>
    tpu.vector_store %arg13[%c80, %c0_24], %20 {strides = array<i32>} : memref<200x892xbf16, #tpu.memory_space<vmem>>, vector<8x892xbf16>,
    %c0_25 = arith.constant 0 : index
    %c65 = arith.constant 65 : index
    %22 = vector.load %arg1[%c0_25, %c65] : memref<8x1024xbf16, #tpu.memory_space<vmem>>, vector<8x892xbf16>
    %c88 = arith.constant 88 : index
    %c0_26 = arith.constant 0 : index
    %23 = vector.load %arg13[%c88, %c0_26] : memref<200x892xbf16, #tpu.memory_space<vmem>>, vector<8x892xbf16>
    tpu.vector_store %arg13[%c88, %c0_26], %22 {strides = array<i32>} : memref<200x892xbf16, #tpu.memory_space<vmem>>, vector<8x892xbf16>,
    %c0_27 = arith.constant 0 : index
    %c66 = arith.constant 66 : index
    %24 = vector.load %arg1[%c0_27, %c66] : memref<8x1024xbf16, #tpu.memory_space<vmem>>, vector<8x892xbf16>
    %c96 = arith.constant 96 : index
    %c0_28 = arith.constant 0 : index
    %25 = vector.load %arg13[%c96, %c0_28] : memref<200x892xbf16, #tpu.memory_space<vmem>>, vector<8x892xbf16>
    tpu.vector_store %arg13[%c96, %c0_28], %24 {strides = array<i32>} : memref<200x892xbf16, #tpu.memory_space<vmem>>, vector<8x892xbf16>,
    %c0_29 = arith.constant 0 : index
    %c67 = arith.constant 67 : index
    %26 = vector.load %arg1[%c0_29, %c67] : memref<8x1024xbf16, #tpu.memory_space<vmem>>, vector<8x892xbf16>
    %c104 = arith.constant 104 : index
    %c0_30 = arith.constant 0 : index
    %27 = vector.load %arg13[%c104, %c0_30] : memref<200x892xbf16, #tpu.memory_space<vmem>>, vector<8x892xbf16>
    tpu.vector_store %arg13[%c104, %c0_30], %26 {strides = array<i32>} : memref<200x892xbf16, #tpu.memory_space<vmem>>, vector<8x892xbf16>,
    %c0_31 = arith.constant 0 : index
    %c68 = arith.constant 68 : index
    %28 = vector.load %arg1[%c0_31, %c68] : memref<8x1024xbf16, #tpu.memory_space<vmem>>, vector<8x892xbf16>
    %c112 = arith.constant 112 : index
    %c0_32 = arith.constant 0 : index
    %29 = vector.load %arg13[%c112, %c0_32] : memref<200x892xbf16, #tpu.memory_space<vmem>>, vector<8x892xbf16>
    tpu.vector_store %arg13[%c112, %c0_32], %28 {strides = array<i32>} : memref<200x892xbf16, #tpu.memory_space<vmem>>, vector<8x892xbf16>,
    %c0_33 = arith.constant 0 : index
    %c96_34 = arith.constant 96 : index
    %30 = vector.load %arg1[%c0_33, %c96_34] : memref<8x1024xbf16, #tpu.memory_space<vmem>>, vector<8x892xbf16>
    %c120 = arith.constant 120 : index
    %c0_35 = arith.constant 0 : index
    %31 = vector.load %arg13[%c120, %c0_35] : memref<200x892xbf16, #tpu.memory_space<vmem>>, vector<8x892xbf16>
    tpu.vector_store %arg13[%c120, %c0_35], %30 {strides = array<i32>} : memref<200x892xbf16, #tpu.memory_space<vmem>>, vector<8x892xbf16>,
    %c0_36 = arith.constant 0 : index
    %c97 = arith.constant 97 : index
    %32 = vector.load %arg1[%c0_36, %c97] : memref<8x1024xbf16, #tpu.memory_space<vmem>>, vector<8x892xbf16>
    %c128 = arith.constant 128 : index
    %c0_37 = arith.constant 0 : index
    %33 = vector.load %arg13[%c128, %c0_37] : memref<200x892xbf16, #tpu.memory_space<vmem>>, vector<8x892xbf16>
    tpu.vector_store %arg13[%c128, %c0_37], %32 {strides = array<i32>} : memref<200x892xbf16, #tpu.memory_space<vmem>>, vector<8x892xbf16>,
    %c0_38 = arith.constant 0 : index
    %c98 = arith.constant 98 : index
    %34 = vector.load %arg1[%c0_38, %c98] : memref<8x1024xbf16, #tpu.memory_space<vmem>>, vector<8x892xbf16>
    %c136 = arith.constant 136 : index
    %c0_39 = arith.constant 0 : index
    %35 = vector.load %arg13[%c136, %c0_39] : memref<200x892xbf16, #tpu.memory_space<vmem>>, vector<8x892xbf16>
    tpu.vector_store %arg13[%c136, %c0_39], %34 {strides = array<i32>} : memref<200x892xbf16, #tpu.memory_space<vmem>>, vector<8x892xbf16>,
    %c0_40 = arith.constant 0 : index
    %c99 = arith.constant 99 : index
    %36 = vector.load %arg1[%c0_40, %c99] : memref<8x1024xbf16, #tpu.memory_space<vmem>>, vector<8x892xbf16>
    %c144 = arith.constant 144 : index
    %c0_41 = arith.constant 0 : index
    %37 = vector.load %arg13[%c144, %c0_41] : memref<200x892xbf16, #tpu.memory_space<vmem>>, vector<8x892xbf16>
    tpu.vector_store %arg13[%c144, %c0_41], %36 {strides = array<i32>} : memref<200x892xbf16, #tpu.memory_space<vmem>>, vector<8x892xbf16>,
    %c0_42 = arith.constant 0 : index
    %c100 = arith.constant 100 : index
    %38 = vector.load %arg1[%c0_42, %c100] : memref<8x1024xbf16, #tpu.memory_space<vmem>>, vector<8x892xbf16>
    %c152 = arith.constant 152 : index
    %c0_43 = arith.constant 0 : index
    %39 = vector.load %arg13[%c152, %c0_43] : memref<200x892xbf16, #tpu.memory_space<vmem>>, vector<8x892xbf16>
    tpu.vector_store %arg13[%c152, %c0_43], %38 {strides = array<i32>} : memref<200x892xbf16, #tpu.memory_space<vmem>>, vector<8x892xbf16>,
    %c0_44 = arith.constant 0 : index
    %c128_45 = arith.constant 128 : index
    %40 = vector.load %arg1[%c0_44, %c128_45] : memref<8x1024xbf16, #tpu.memory_space<vmem>>, vector<8x892xbf16>
    %c160 = arith.constant 160 : index
    %c0_46 = arith.constant 0 : index
    %41 = vector.load %arg13[%c160, %c0_46] : memref<200x892xbf16, #tpu.memory_space<vmem>>, vector<8x892xbf16>
    tpu.vector_store %arg13[%c160, %c0_46], %40 {strides = array<i32>} : memref<200x892xbf16, #tpu.memory_space<vmem>>, vector<8x892xbf16>,
    %c0_47 = arith.constant 0 : index
    %c129 = arith.constant 129 : index
    %42 = vector.load %arg1[%c0_47, %c129] : memref<8x1024xbf16, #tpu.memory_space<vmem>>, vector<8x892xbf16>
    %c168 = arith.constant 168 : index
    %c0_48 = arith.constant 0 : index
    %43 = vector.load %arg13[%c168, %c0_48] : memref<200x892xbf16, #tpu.memory_space<vmem>>, vector<8x892xbf16>
    tpu.vector_store %arg13[%c168, %c0_48], %42 {strides = array<i32>} : memref<200x892xbf16, #tpu.memory_space<vmem>>, vector<8x892xbf16>,
    %c0_49 = arith.constant 0 : index
    %c130 = arith.constant 130 : index
    %44 = vector.load %arg1[%c0_49, %c130] : memref<8x1024xbf16, #tpu.memory_space<vmem>>, vector<8x892xbf16>
    %c176 = arith.constant 176 : index
    %c0_50 = arith.constant 0 : index
    %45 = vector.load %arg13[%c176, %c0_50] : memref<200x892xbf16, #tpu.memory_space<vmem>>, vector<8x892xbf16>
    tpu.vector_store %arg13[%c176, %c0_50], %44 {strides = array<i32>} : memref<200x892xbf16, #tpu.memory_space<vmem>>, vector<8x892xbf16>,
    %c0_51 = arith.constant 0 : index
    %c131 = arith.constant 131 : index
    %46 = vector.load %arg1[%c0_51, %c131] : memref<8x1024xbf16, #tpu.memory_space<vmem>>, vector<8x892xbf16>
    %c184 = arith.constant 184 : index
    %c0_52 = arith.constant 0 : index
    %47 = vector.load %arg13[%c184, %c0_52] : memref<200x892xbf16, #tpu.memory_space<vmem>>, vector<8x892xbf16>
    tpu.vector_store %arg13[%c184, %c0_52], %46 {strides = array<i32>} : memref<200x892xbf16, #tpu.memory_space<vmem>>, vector<8x892xbf16>,
    %c0_53 = arith.constant 0 : index
    %c132 = arith.constant 132 : index
    %48 = vector.load %arg1[%c0_53, %c132] : memref<8x1024xbf16, #tpu.memory_space<vmem>>, vector<8x892xbf16>
    %c192 = arith.constant 192 : index
    %c0_54 = arith.constant 0 : index
    %49 = vector.load %arg13[%c192, %c0_54] : memref<200x892xbf16, #tpu.memory_space<vmem>>, vector<8x892xbf16>
    tpu.vector_store %arg13[%c192, %c0_54], %48 {strides = array<i32>} : memref<200x892xbf16, #tpu.memory_space<vmem>>, vector<8x892xbf16>,
    %c0_55 = arith.constant 0 : index
    %c0_56 = arith.constant 0 : index
    %50 = vector.load %arg2[%c0_55, %c0_56] : memref<8x200xbf16, #tpu.memory_space<vmem>>, vector<8x200xbf16>
    %c0_57 = arith.constant 0 : index
    %c0_58 = arith.constant 0 : index
    %51 = vector.load %arg13[%c0_57, %c0_58] : memref<200x892xbf16, #tpu.memory_space<vmem>>, vector<200x892xbf16>
    %cst = arith.constant dense<0.000000e+00> : vector<8x892xf32>
    %52 = tpu.matmul %50, %51, %cst {dimension_numbers = #tpu.dot_dimension_numbers<[1], [0], [0], [1], [0, 0, 1, 1], [], []>} : vector<8x200xbf16>, vector<200x892xbf16>, vector<8x892xf32> -> vector<8x892xf32>
    %c0_59 = arith.constant 0 : index
    %c0_60 = arith.constant 0 : index
    %53 = vector.load %arg3[%c0_59, %c0_60] : memref<8x1xf32, #tpu.memory_space<vmem>>, vector<8x1xf32>
    %54 = vector.broadcast %53 : vector<8x1xf32> to vector<8x892xf32>
    %55 = arith.addf %52, %54 : vector<8x892xf32>
    %cst_61 = arith.constant 0.000000e+00 : f32
    %56 = vector.broadcast %cst_61 : f32 to vector<8x892xf32>
    %57 = arith.maximumf %55, %56 : vector<8x892xf32>
    %58 = arith.truncf %57 : vector<8x892xf32> to vector<8x892xbf16>
    %c0_62 = arith.constant 0 : index
    %c0_63 = arith.constant 0 : index
    %59 = vector.load %arg14[%c0_62, %c0_63] : memref<8x892xbf16, #tpu.memory_space<vmem>>, vector<8x892xbf16>
    tpu.vector_store %arg14[%c0_62, %c0_63], %58 {strides = array<i32>} : memref<8x892xbf16, #tpu.memory_space<vmem>>, vector<8x892xbf16>,
    %c0_64 = arith.constant 0 : index
    %c0_65 = arith.constant 0 : index
    %60 = vector.load %arg14[%c0_64, %c0_65] : memref<8x892xbf16, #tpu.memory_space<vmem>>, vector<8x859xbf16>
    %c0_66 = arith.constant 0 : index
    %c1_67 = arith.constant 1 : index
    %61 = vector.load %arg14[%c0_66, %c1_67] : memref<8x892xbf16, #tpu.memory_space<vmem>>, vector<8x859xbf16>
    %62 = arith.maximumf %60, %61 : vector<8x859xbf16>
    %c0_68 = arith.constant 0 : index
    %c32_69 = arith.constant 32 : index
    %63 = vector.load %arg14[%c0_68, %c32_69] : memref<8x892xbf16, #tpu.memory_space<vmem>>, vector<8x859xbf16>
    %c0_70 = arith.constant 0 : index
    %c33_71 = arith.constant 33 : index
    %64 = vector.load %arg14[%c0_70, %c33_71] : memref<8x892xbf16, #tpu.memory_space<vmem>>, vector<8x859xbf16>
    %65 = arith.maximumf %63, %64 : vector<8x859xbf16>
    %66 = arith.maximumf %62, %65 : vector<8x859xbf16>
    %c0_72 = arith.constant 0 : index
    %c0_73 = arith.constant 0 : index
    %67 = vector.load %arg15[%c0_72, %c0_73] : memref<8x859xbf16, #tpu.memory_space<vmem>>, vector<8x859xbf16>
    tpu.vector_store %arg15[%c0_72, %c0_73], %66 {strides = array<i32>} : memref<8x859xbf16, #tpu.memory_space<vmem>>, vector<8x859xbf16>,
    %c0_74 = arith.constant 0 : index
    %c0_75 = arith.constant 0 : index
    %68 = vector.load %arg15[%c0_74, %c0_75] : memref<8x859xbf16, #tpu.memory_space<vmem>>, vector<8x595xbf16>
    %c0_76 = arith.constant 0 : index
    %c0_77 = arith.constant 0 : index
    %69 = vector.load %arg16[%c0_76, %c0_77] : memref<200x595xbf16, #tpu.memory_space<vmem>>, vector<8x595xbf16>
    tpu.vector_store %arg16[%c0_76, %c0_77], %68 {strides = array<i32>} : memref<200x595xbf16, #tpu.memory_space<vmem>>, vector<8x595xbf16>,
    %c0_78 = arith.constant 0 : index
    %c2_79 = arith.constant 2 : index
    %70 = vector.load %arg15[%c0_78, %c2_79] : memref<8x859xbf16, #tpu.memory_space<vmem>>, vector<8x595xbf16>
    %c8_80 = arith.constant 8 : index
    %c0_81 = arith.constant 0 : index
    %71 = vector.load %arg16[%c8_80, %c0_81] : memref<200x595xbf16, #tpu.memory_space<vmem>>, vector<8x595xbf16>
    tpu.vector_store %arg16[%c8_80, %c0_81], %70 {strides = array<i32>} : memref<200x595xbf16, #tpu.memory_space<vmem>>, vector<8x595xbf16>,
    %c0_82 = arith.constant 0 : index
    %c4_83 = arith.constant 4 : index
    %72 = vector.load %arg15[%c0_82, %c4_83] : memref<8x859xbf16, #tpu.memory_space<vmem>>, vector<8x595xbf16>
    %c16_84 = arith.constant 16 : index
    %c0_85 = arith.constant 0 : index
    %73 = vector.load %arg16[%c16_84, %c0_85] : memref<200x595xbf16, #tpu.memory_space<vmem>>, vector<8x595xbf16>
    tpu.vector_store %arg16[%c16_84, %c0_85], %72 {strides = array<i32>} : memref<200x595xbf16, #tpu.memory_space<vmem>>, vector<8x595xbf16>,
    %c0_86 = arith.constant 0 : index
    %c6 = arith.constant 6 : index
    %74 = vector.load %arg15[%c0_86, %c6] : memref<8x859xbf16, #tpu.memory_space<vmem>>, vector<8x595xbf16>
    %c24_87 = arith.constant 24 : index
    %c0_88 = arith.constant 0 : index
    %75 = vector.load %arg16[%c24_87, %c0_88] : memref<200x595xbf16, #tpu.memory_space<vmem>>, vector<8x595xbf16>
    tpu.vector_store %arg16[%c24_87, %c0_88], %74 {strides = array<i32>} : memref<200x595xbf16, #tpu.memory_space<vmem>>, vector<8x595xbf16>,
    %c0_89 = arith.constant 0 : index
    %c8_90 = arith.constant 8 : index
    %76 = vector.load %arg15[%c0_89, %c8_90] : memref<8x859xbf16, #tpu.memory_space<vmem>>, vector<8x595xbf16>
    %c32_91 = arith.constant 32 : index
    %c0_92 = arith.constant 0 : index
    %77 = vector.load %arg16[%c32_91, %c0_92] : memref<200x595xbf16, #tpu.memory_space<vmem>>, vector<8x595xbf16>
    tpu.vector_store %arg16[%c32_91, %c0_92], %76 {strides = array<i32>} : memref<200x595xbf16, #tpu.memory_space<vmem>>, vector<8x595xbf16>,
    %c0_93 = arith.constant 0 : index
    %c64_94 = arith.constant 64 : index
    %78 = vector.load %arg15[%c0_93, %c64_94] : memref<8x859xbf16, #tpu.memory_space<vmem>>, vector<8x595xbf16>
    %c40_95 = arith.constant 40 : index
    %c0_96 = arith.constant 0 : index
    %79 = vector.load %arg16[%c40_95, %c0_96] : memref<200x595xbf16, #tpu.memory_space<vmem>>, vector<8x595xbf16>
    tpu.vector_store %arg16[%c40_95, %c0_96], %78 {strides = array<i32>} : memref<200x595xbf16, #tpu.memory_space<vmem>>, vector<8x595xbf16>,
    %c0_97 = arith.constant 0 : index
    %c66_98 = arith.constant 66 : index
    %80 = vector.load %arg15[%c0_97, %c66_98] : memref<8x859xbf16, #tpu.memory_space<vmem>>, vector<8x595xbf16>
    %c48_99 = arith.constant 48 : index
    %c0_100 = arith.constant 0 : index
    %81 = vector.load %arg16[%c48_99, %c0_100] : memref<200x595xbf16, #tpu.memory_space<vmem>>, vector<8x595xbf16>
    tpu.vector_store %arg16[%c48_99, %c0_100], %80 {strides = array<i32>} : memref<200x595xbf16, #tpu.memory_space<vmem>>, vector<8x595xbf16>,
    %c0_101 = arith.constant 0 : index
    %c68_102 = arith.constant 68 : index
    %82 = vector.load %arg15[%c0_101, %c68_102] : memref<8x859xbf16, #tpu.memory_space<vmem>>, vector<8x595xbf16>
    %c56_103 = arith.constant 56 : index
    %c0_104 = arith.constant 0 : index
    %83 = vector.load %arg16[%c56_103, %c0_104] : memref<200x595xbf16, #tpu.memory_space<vmem>>, vector<8x595xbf16>
    tpu.vector_store %arg16[%c56_103, %c0_104], %82 {strides = array<i32>} : memref<200x595xbf16, #tpu.memory_space<vmem>>, vector<8x595xbf16>,
    %c0_105 = arith.constant 0 : index
    %c70 = arith.constant 70 : index
    %84 = vector.load %arg15[%c0_105, %c70] : memref<8x859xbf16, #tpu.memory_space<vmem>>, vector<8x595xbf16>
    %c64_106 = arith.constant 64 : index
    %c0_107 = arith.constant 0 : index
    %85 = vector.load %arg16[%c64_106, %c0_107] : memref<200x595xbf16, #tpu.memory_space<vmem>>, vector<8x595xbf16>
    tpu.vector_store %arg16[%c64_106, %c0_107], %84 {strides = array<i32>} : memref<200x595xbf16, #tpu.memory_space<vmem>>, vector<8x595xbf16>,
    %c0_108 = arith.constant 0 : index
    %c72_109 = arith.constant 72 : index
    %86 = vector.load %arg15[%c0_108, %c72_109] : memref<8x859xbf16, #tpu.memory_space<vmem>>, vector<8x595xbf16>
    %c72_110 = arith.constant 72 : index
    %c0_111 = arith.constant 0 : index
    %87 = vector.load %arg16[%c72_110, %c0_111] : memref<200x595xbf16, #tpu.memory_space<vmem>>, vector<8x595xbf16>
    tpu.vector_store %arg16[%c72_110, %c0_111], %86 {strides = array<i32>} : memref<200x595xbf16, #tpu.memory_space<vmem>>, vector<8x595xbf16>,
    %c0_112 = arith.constant 0 : index
    %c128_113 = arith.constant 128 : index
    %88 = vector.load %arg15[%c0_112, %c128_113] : memref<8x859xbf16, #tpu.memory_space<vmem>>, vector<8x595xbf16>
    %c80_114 = arith.constant 80 : index
    %c0_115 = arith.constant 0 : index
    %89 = vector.load %arg16[%c80_114, %c0_115] : memref<200x595xbf16, #tpu.memory_space<vmem>>, vector<8x595xbf16>
    tpu.vector_store %arg16[%c80_114, %c0_115], %88 {strides = array<i32>} : memref<200x595xbf16, #tpu.memory_space<vmem>>, vector<8x595xbf16>,
    %c0_116 = arith.constant 0 : index
    %c130_117 = arith.constant 130 : index
    %90 = vector.load %arg15[%c0_116, %c130_117] : memref<8x859xbf16, #tpu.memory_space<vmem>>, vector<8x595xbf16>
    %c88_118 = arith.constant 88 : index
    %c0_119 = arith.constant 0 : index
    %91 = vector.load %arg16[%c88_118, %c0_119] : memref<200x595xbf16, #tpu.memory_space<vmem>>, vector<8x595xbf16>
    tpu.vector_store %arg16[%c88_118, %c0_119], %90 {strides = array<i32>} : memref<200x595xbf16, #tpu.memory_space<vmem>>, vector<8x595xbf16>,
    %c0_120 = arith.constant 0 : index
    %c132_121 = arith.constant 132 : index
    %92 = vector.load %arg15[%c0_120, %c132_121] : memref<8x859xbf16, #tpu.memory_space<vmem>>, vector<8x595xbf16>
    %c96_122 = arith.constant 96 : index
    %c0_123 = arith.constant 0 : index
    %93 = vector.load %arg16[%c96_122, %c0_123] : memref<200x595xbf16, #tpu.memory_space<vmem>>, vector<8x595xbf16>
    tpu.vector_store %arg16[%c96_122, %c0_123], %92 {strides = array<i32>} : memref<200x595xbf16, #tpu.memory_space<vmem>>, vector<8x595xbf16>,
    %c0_124 = arith.constant 0 : index
    %c134 = arith.constant 134 : index
    %94 = vector.load %arg15[%c0_124, %c134] : memref<8x859xbf16, #tpu.memory_space<vmem>>, vector<8x595xbf16>
    %c104_125 = arith.constant 104 : index
    %c0_126 = arith.constant 0 : index
    %95 = vector.load %arg16[%c104_125, %c0_126] : memref<200x595xbf16, #tpu.memory_space<vmem>>, vector<8x595xbf16>
    tpu.vector_store %arg16[%c104_125, %c0_126], %94 {strides = array<i32>} : memref<200x595xbf16, #tpu.memory_space<vmem>>, vector<8x595xbf16>,
    %c0_127 = arith.constant 0 : index
    %c136_128 = arith.constant 136 : index
    %96 = vector.load %arg15[%c0_127, %c136_128] : memref<8x859xbf16, #tpu.memory_space<vmem>>, vector<8x595xbf16>
    %c112_129 = arith.constant 112 : index
    %c0_130 = arith.constant 0 : index
    %97 = vector.load %arg16[%c112_129, %c0_130] : memref<200x595xbf16, #tpu.memory_space<vmem>>, vector<8x595xbf16>
    tpu.vector_store %arg16[%c112_129, %c0_130], %96 {strides = array<i32>} : memref<200x595xbf16, #tpu.memory_space<vmem>>, vector<8x595xbf16>,
    %c0_131 = arith.constant 0 : index
    %c192_132 = arith.constant 192 : index
    %98 = vector.load %arg15[%c0_131, %c192_132] : memref<8x859xbf16, #tpu.memory_space<vmem>>, vector<8x595xbf16>
    %c120_133 = arith.constant 120 : index
    %c0_134 = arith.constant 0 : index
    %99 = vector.load %arg16[%c120_133, %c0_134] : memref<200x595xbf16, #tpu.memory_space<vmem>>, vector<8x595xbf16>
    tpu.vector_store %arg16[%c120_133, %c0_134], %98 {strides = array<i32>} : memref<200x595xbf16, #tpu.memory_space<vmem>>, vector<8x595xbf16>,
    %c0_135 = arith.constant 0 : index
    %c194 = arith.constant 194 : index
    %100 = vector.load %arg15[%c0_135, %c194] : memref<8x859xbf16, #tpu.memory_space<vmem>>, vector<8x595xbf16>
    %c128_136 = arith.constant 128 : index
    %c0_137 = arith.constant 0 : index
    %101 = vector.load %arg16[%c128_136, %c0_137] : memref<200x595xbf16, #tpu.memory_space<vmem>>, vector<8x595xbf16>
    tpu.vector_store %arg16[%c128_136, %c0_137], %100 {strides = array<i32>} : memref<200x595xbf16, #tpu.memory_space<vmem>>, vector<8x595xbf16>,
    %c0_138 = arith.constant 0 : index
    %c196 = arith.constant 196 : index
    %102 = vector.load %arg15[%c0_138, %c196] : memref<8x859xbf16, #tpu.memory_space<vmem>>, vector<8x595xbf16>
    %c136_139 = arith.constant 136 : index
    %c0_140 = arith.constant 0 : index
    %103 = vector.load %arg16[%c136_139, %c0_140] : memref<200x595xbf16, #tpu.memory_space<vmem>>, vector<8x595xbf16>
    tpu.vector_store %arg16[%c136_139, %c0_140], %102 {strides = array<i32>} : memref<200x595xbf16, #tpu.memory_space<vmem>>, vector<8x595xbf16>,
    %c0_141 = arith.constant 0 : index
    %c198 = arith.constant 198 : index
    %104 = vector.load %arg15[%c0_141, %c198] : memref<8x859xbf16, #tpu.memory_space<vmem>>, vector<8x595xbf16>
    %c144_142 = arith.constant 144 : index
    %c0_143 = arith.constant 0 : index
    %105 = vector.load %arg16[%c144_142, %c0_143] : memref<200x595xbf16, #tpu.memory_space<vmem>>, vector<8x595xbf16>
    tpu.vector_store %arg16[%c144_142, %c0_143], %104 {strides = array<i32>} : memref<200x595xbf16, #tpu.memory_space<vmem>>, vector<8x595xbf16>,
    %c0_144 = arith.constant 0 : index
    %c200 = arith.constant 200 : index
    %106 = vector.load %arg15[%c0_144, %c200] : memref<8x859xbf16, #tpu.memory_space<vmem>>, vector<8x595xbf16>
    %c152_145 = arith.constant 152 : index
    %c0_146 = arith.constant 0 : index
    %107 = vector.load %arg16[%c152_145, %c0_146] : memref<200x595xbf16, #tpu.memory_space<vmem>>, vector<8x595xbf16>
    tpu.vector_store %arg16[%c152_145, %c0_146], %106 {strides = array<i32>} : memref<200x595xbf16, #tpu.memory_space<vmem>>, vector<8x595xbf16>,
    %c0_147 = arith.constant 0 : index
    %c256 = arith.constant 256 : index
    %108 = vector.load %arg15[%c0_147, %c256] : memref<8x859xbf16, #tpu.memory_space<vmem>>, vector<8x595xbf16>
    %c160_148 = arith.constant 160 : index
    %c0_149 = arith.constant 0 : index
    %109 = vector.load %arg16[%c160_148, %c0_149] : memref<200x595xbf16, #tpu.memory_space<vmem>>, vector<8x595xbf16>
    tpu.vector_store %arg16[%c160_148, %c0_149], %108 {strides = array<i32>} : memref<200x595xbf16, #tpu.memory_space<vmem>>, vector<8x595xbf16>,
    %c0_150 = arith.constant 0 : index
    %c258 = arith.constant 258 : index
    %110 = vector.load %arg15[%c0_150, %c258] : memref<8x859xbf16, #tpu.memory_space<vmem>>, vector<8x595xbf16>
    %c168_151 = arith.constant 168 : index
    %c0_152 = arith.constant 0 : index
    %111 = vector.load %arg16[%c168_151, %c0_152] : memref<200x595xbf16, #tpu.memory_space<vmem>>, vector<8x595xbf16>
    tpu.vector_store %arg16[%c168_151, %c0_152], %110 {strides = array<i32>} : memref<200x595xbf16, #tpu.memory_space<vmem>>, vector<8x595xbf16>,
    %c0_153 = arith.constant 0 : index
    %c260 = arith.constant 260 : index
    %112 = vector.load %arg15[%c0_153, %c260] : memref<8x859xbf16, #tpu.memory_space<vmem>>, vector<8x595xbf16>
    %c176_154 = arith.constant 176 : index
    %c0_155 = arith.constant 0 : index
    %113 = vector.load %arg16[%c176_154, %c0_155] : memref<200x595xbf16, #tpu.memory_space<vmem>>, vector<8x595xbf16>
    tpu.vector_store %arg16[%c176_154, %c0_155], %112 {strides = array<i32>} : memref<200x595xbf16, #tpu.memory_space<vmem>>, vector<8x595xbf16>,
    %c0_156 = arith.constant 0 : index
    %c262 = arith.constant 262 : index
    %114 = vector.load %arg15[%c0_156, %c262] : memref<8x859xbf16, #tpu.memory_space<vmem>>, vector<8x595xbf16>
    %c184_157 = arith.constant 184 : index
    %c0_158 = arith.constant 0 : index
    %115 = vector.load %arg16[%c184_157, %c0_158] : memref<200x595xbf16, #tpu.memory_space<vmem>>, vector<8x595xbf16>
    tpu.vector_store %arg16[%c184_157, %c0_158], %114 {strides = array<i32>} : memref<200x595xbf16, #tpu.memory_space<vmem>>, vector<8x595xbf16>,
    %c0_159 = arith.constant 0 : index
    %c264 = arith.constant 264 : index
    %116 = vector.load %arg15[%c0_159, %c264] : memref<8x859xbf16, #tpu.memory_space<vmem>>, vector<8x595xbf16>
    %c192_160 = arith.constant 192 : index
    %c0_161 = arith.constant 0 : index
    %117 = vector.load %arg16[%c192_160, %c0_161] : memref<200x595xbf16, #tpu.memory_space<vmem>>, vector<8x595xbf16>
    tpu.vector_store %arg16[%c192_160, %c0_161], %116 {strides = array<i32>} : memref<200x595xbf16, #tpu.memory_space<vmem>>, vector<8x595xbf16>,
    %c0_162 = arith.constant 0 : index
    %c0_163 = arith.constant 0 : index
    %118 = vector.load %arg4[%c0_162, %c0_163] : memref<16x200xbf16, #tpu.memory_space<vmem>>, vector<16x200xbf16>
    %c0_164 = arith.constant 0 : index
    %c0_165 = arith.constant 0 : index
    %119 = vector.load %arg16[%c0_164, %c0_165] : memref<200x595xbf16, #tpu.memory_space<vmem>>, vector<200x595xbf16>
    %cst_166 = arith.constant dense<0.000000e+00> : vector<16x595xf32>
    %120 = tpu.matmul %118, %119, %cst_166 {dimension_numbers = #tpu.dot_dimension_numbers<[1], [0], [0], [1], [0, 0, 1, 1], [], []>} : vector<16x200xbf16>, vector<200x595xbf16>, vector<16x595xf32> -> vector<16x595xf32>
    %c0_167 = arith.constant 0 : index
    %c0_168 = arith.constant 0 : index
    %121 = vector.load %arg5[%c0_167, %c0_168] : memref<16x1xf32, #tpu.memory_space<vmem>>, vector<16x1xf32>
    %122 = vector.broadcast %121 : vector<16x1xf32> to vector<16x595xf32>
    %123 = arith.addf %120, %122 : vector<16x595xf32>
    %cst_169 = arith.constant 0.000000e+00 : f32
    %124 = vector.broadcast %cst_169 : f32 to vector<16x595xf32>
    %125 = arith.maximumf %123, %124 : vector<16x595xf32>
    %126 = arith.truncf %125 : vector<16x595xf32> to vector<16x595xbf16>
    %c0_170 = arith.constant 0 : index
    %c0_171 = arith.constant 0 : index
    %127 = vector.load %arg17[%c0_170, %c0_171] : memref<16x595xbf16, #tpu.memory_space<vmem>>, vector<16x595xbf16>
    tpu.vector_store %arg17[%c0_170, %c0_171], %126 {strides = array<i32>} : memref<16x595xbf16, #tpu.memory_space<vmem>>, vector<16x595xbf16>,
    %c0_172 = arith.constant 0 : index
    %c0_173 = arith.constant 0 : index
    %128 = vector.load %arg17[%c0_172, %c0_173] : memref<16x595xbf16, #tpu.memory_space<vmem>>, vector<16x529xbf16>
    %c0_174 = arith.constant 0 : index
    %c2_175 = arith.constant 2 : index
    %129 = vector.load %arg17[%c0_174, %c2_175] : memref<16x595xbf16, #tpu.memory_space<vmem>>, vector<16x529xbf16>
    %130 = arith.maximumf %128, %129 : vector<16x529xbf16>
    %c0_176 = arith.constant 0 : index
    %c64_177 = arith.constant 64 : index
    %131 = vector.load %arg17[%c0_176, %c64_177] : memref<16x595xbf16, #tpu.memory_space<vmem>>, vector<16x529xbf16>
    %c0_178 = arith.constant 0 : index
    %c66_179 = arith.constant 66 : index
    %132 = vector.load %arg17[%c0_178, %c66_179] : memref<16x595xbf16, #tpu.memory_space<vmem>>, vector<16x529xbf16>
    %133 = arith.maximumf %131, %132 : vector<16x529xbf16>
    %134 = arith.maximumf %130, %133 : vector<16x529xbf16>
    %c0_180 = arith.constant 0 : index
    %c0_181 = arith.constant 0 : index
    %135 = vector.load %arg18[%c0_180, %c0_181] : memref<16x529xbf16, #tpu.memory_space<vmem>>, vector<16x529xbf16>
    tpu.vector_store %arg18[%c0_180, %c0_181], %134 {strides = array<i32>} : memref<16x529xbf16, #tpu.memory_space<vmem>>, vector<16x529xbf16>,
    %c0_182 = arith.constant 0 : index
    %c0_183 = arith.constant 0 : index
    %136 = vector.load %arg18[%c0_182, %c0_183] : memref<16x529xbf16, #tpu.memory_space<vmem>>, vector<16x1xbf16>
    %c0_184 = arith.constant 0 : index
    %c0_185 = arith.constant 0 : index
    %137 = vector.load %arg19[%c0_184, %c0_185] : memref<400x1xbf16, #tpu.memory_space<vmem>>, vector<16x1xbf16>
    tpu.vector_store %arg19[%c0_184, %c0_185], %136 {strides = array<i32>} : memref<400x1xbf16, #tpu.memory_space<vmem>>, vector<16x1xbf16>,
    %c0_186 = arith.constant 0 : index
    %c4_187 = arith.constant 4 : index
    %138 = vector.load %arg18[%c0_186, %c4_187] : memref<16x529xbf16, #tpu.memory_space<vmem>>, vector<16x1xbf16>
    %c16_188 = arith.constant 16 : index
    %c0_189 = arith.constant 0 : index
    %139 = vector.load %arg19[%c16_188, %c0_189] : memref<400x1xbf16, #tpu.memory_space<vmem>>, vector<16x1xbf16>
    tpu.vector_store %arg19[%c16_188, %c0_189], %138 {strides = array<i32>} : memref<400x1xbf16, #tpu.memory_space<vmem>>, vector<16x1xbf16>,
    %c0_190 = arith.constant 0 : index
    %c8_191 = arith.constant 8 : index
    %140 = vector.load %arg18[%c0_190, %c8_191] : memref<16x529xbf16, #tpu.memory_space<vmem>>, vector<16x1xbf16>
    %c32_192 = arith.constant 32 : index
    %c0_193 = arith.constant 0 : index
    %141 = vector.load %arg19[%c32_192, %c0_193] : memref<400x1xbf16, #tpu.memory_space<vmem>>, vector<16x1xbf16>
    tpu.vector_store %arg19[%c32_192, %c0_193], %140 {strides = array<i32>} : memref<400x1xbf16, #tpu.memory_space<vmem>>, vector<16x1xbf16>,
    %c0_194 = arith.constant 0 : index
    %c12 = arith.constant 12 : index
    %142 = vector.load %arg18[%c0_194, %c12] : memref<16x529xbf16, #tpu.memory_space<vmem>>, vector<16x1xbf16>
    %c48_195 = arith.constant 48 : index
    %c0_196 = arith.constant 0 : index
    %143 = vector.load %arg19[%c48_195, %c0_196] : memref<400x1xbf16, #tpu.memory_space<vmem>>, vector<16x1xbf16>
    tpu.vector_store %arg19[%c48_195, %c0_196], %142 {strides = array<i32>} : memref<400x1xbf16, #tpu.memory_space<vmem>>, vector<16x1xbf16>,
    %c0_197 = arith.constant 0 : index
    %c16_198 = arith.constant 16 : index
    %144 = vector.load %arg18[%c0_197, %c16_198] : memref<16x529xbf16, #tpu.memory_space<vmem>>, vector<16x1xbf16>
    %c64_199 = arith.constant 64 : index
    %c0_200 = arith.constant 0 : index
    %145 = vector.load %arg19[%c64_199, %c0_200] : memref<400x1xbf16, #tpu.memory_space<vmem>>, vector<16x1xbf16>
    tpu.vector_store %arg19[%c64_199, %c0_200], %144 {strides = array<i32>} : memref<400x1xbf16, #tpu.memory_space<vmem>>, vector<16x1xbf16>,
    %c0_201 = arith.constant 0 : index
    %c128_202 = arith.constant 128 : index
    %146 = vector.load %arg18[%c0_201, %c128_202] : memref<16x529xbf16, #tpu.memory_space<vmem>>, vector<16x1xbf16>
    %c80_203 = arith.constant 80 : index
    %c0_204 = arith.constant 0 : index
    %147 = vector.load %arg19[%c80_203, %c0_204] : memref<400x1xbf16, #tpu.memory_space<vmem>>, vector<16x1xbf16>
    tpu.vector_store %arg19[%c80_203, %c0_204], %146 {strides = array<i32>} : memref<400x1xbf16, #tpu.memory_space<vmem>>, vector<16x1xbf16>,
    %c0_205 = arith.constant 0 : index
    %c132_206 = arith.constant 132 : index
    %148 = vector.load %arg18[%c0_205, %c132_206] : memref<16x529xbf16, #tpu.memory_space<vmem>>, vector<16x1xbf16>
    %c96_207 = arith.constant 96 : index
    %c0_208 = arith.constant 0 : index
    %149 = vector.load %arg19[%c96_207, %c0_208] : memref<400x1xbf16, #tpu.memory_space<vmem>>, vector<16x1xbf16>
    tpu.vector_store %arg19[%c96_207, %c0_208], %148 {strides = array<i32>} : memref<400x1xbf16, #tpu.memory_space<vmem>>, vector<16x1xbf16>,
    %c0_209 = arith.constant 0 : index
    %c136_210 = arith.constant 136 : index
    %150 = vector.load %arg18[%c0_209, %c136_210] : memref<16x529xbf16, #tpu.memory_space<vmem>>, vector<16x1xbf16>
    %c112_211 = arith.constant 112 : index
    %c0_212 = arith.constant 0 : index
    %151 = vector.load %arg19[%c112_211, %c0_212] : memref<400x1xbf16, #tpu.memory_space<vmem>>, vector<16x1xbf16>
    tpu.vector_store %arg19[%c112_211, %c0_212], %150 {strides = array<i32>} : memref<400x1xbf16, #tpu.memory_space<vmem>>, vector<16x1xbf16>,
    %c0_213 = arith.constant 0 : index
    %c140 = arith.constant 140 : index
    %152 = vector.load %arg18[%c0_213, %c140] : memref<16x529xbf16, #tpu.memory_space<vmem>>, vector<16x1xbf16>
    %c128_214 = arith.constant 128 : index
    %c0_215 = arith.constant 0 : index
    %153 = vector.load %arg19[%c128_214, %c0_215] : memref<400x1xbf16, #tpu.memory_space<vmem>>, vector<16x1xbf16>
    tpu.vector_store %arg19[%c128_214, %c0_215], %152 {strides = array<i32>} : memref<400x1xbf16, #tpu.memory_space<vmem>>, vector<16x1xbf16>,
    %c0_216 = arith.constant 0 : index
    %c144_217 = arith.constant 144 : index
    %154 = vector.load %arg18[%c0_216, %c144_217] : memref<16x529xbf16, #tpu.memory_space<vmem>>, vector<16x1xbf16>
    %c144_218 = arith.constant 144 : index
    %c0_219 = arith.constant 0 : index
    %155 = vector.load %arg19[%c144_218, %c0_219] : memref<400x1xbf16, #tpu.memory_space<vmem>>, vector<16x1xbf16>
    tpu.vector_store %arg19[%c144_218, %c0_219], %154 {strides = array<i32>} : memref<400x1xbf16, #tpu.memory_space<vmem>>, vector<16x1xbf16>,
    %c0_220 = arith.constant 0 : index
    %c256_221 = arith.constant 256 : index
    %156 = vector.load %arg18[%c0_220, %c256_221] : memref<16x529xbf16, #tpu.memory_space<vmem>>, vector<16x1xbf16>
    %c160_222 = arith.constant 160 : index
    %c0_223 = arith.constant 0 : index
    %157 = vector.load %arg19[%c160_222, %c0_223] : memref<400x1xbf16, #tpu.memory_space<vmem>>, vector<16x1xbf16>
    tpu.vector_store %arg19[%c160_222, %c0_223], %156 {strides = array<i32>} : memref<400x1xbf16, #tpu.memory_space<vmem>>, vector<16x1xbf16>,
    %c0_224 = arith.constant 0 : index
    %c260_225 = arith.constant 260 : index
    %158 = vector.load %arg18[%c0_224, %c260_225] : memref<16x529xbf16, #tpu.memory_space<vmem>>, vector<16x1xbf16>
    %c176_226 = arith.constant 176 : index
    %c0_227 = arith.constant 0 : index
    %159 = vector.load %arg19[%c176_226, %c0_227] : memref<400x1xbf16, #tpu.memory_space<vmem>>, vector<16x1xbf16>
    tpu.vector_store %arg19[%c176_226, %c0_227], %158 {strides = array<i32>} : memref<400x1xbf16, #tpu.memory_space<vmem>>, vector<16x1xbf16>,
    %c0_228 = arith.constant 0 : index
    %c264_229 = arith.constant 264 : index
    %160 = vector.load %arg18[%c0_228, %c264_229] : memref<16x529xbf16, #tpu.memory_space<vmem>>, vector<16x1xbf16>
    %c192_230 = arith.constant 192 : index
    %c0_231 = arith.constant 0 : index
    %161 = vector.load %arg19[%c192_230, %c0_231] : memref<400x1xbf16, #tpu.memory_space<vmem>>, vector<16x1xbf16>
    tpu.vector_store %arg19[%c192_230, %c0_231], %160 {strides = array<i32>} : memref<400x1xbf16, #tpu.memory_space<vmem>>, vector<16x1xbf16>,
    %c0_232 = arith.constant 0 : index
    %c268 = arith.constant 268 : index
    %162 = vector.load %arg18[%c0_232, %c268] : memref<16x529xbf16, #tpu.memory_space<vmem>>, vector<16x1xbf16>
    %c208 = arith.constant 208 : index
    %c0_233 = arith.constant 0 : index
    %163 = vector.load %arg19[%c208, %c0_233] : memref<400x1xbf16, #tpu.memory_space<vmem>>, vector<16x1xbf16>
    tpu.vector_store %arg19[%c208, %c0_233], %162 {strides = array<i32>} : memref<400x1xbf16, #tpu.memory_space<vmem>>, vector<16x1xbf16>,
    %c0_234 = arith.constant 0 : index
    %c272 = arith.constant 272 : index
    %164 = vector.load %arg18[%c0_234, %c272] : memref<16x529xbf16, #tpu.memory_space<vmem>>, vector<16x1xbf16>
    %c224 = arith.constant 224 : index
    %c0_235 = arith.constant 0 : index
    %165 = vector.load %arg19[%c224, %c0_235] : memref<400x1xbf16, #tpu.memory_space<vmem>>, vector<16x1xbf16>
    tpu.vector_store %arg19[%c224, %c0_235], %164 {strides = array<i32>} : memref<400x1xbf16, #tpu.memory_space<vmem>>, vector<16x1xbf16>,
    %c0_236 = arith.constant 0 : index
    %c384 = arith.constant 384 : index
    %166 = vector.load %arg18[%c0_236, %c384] : memref<16x529xbf16, #tpu.memory_space<vmem>>, vector<16x1xbf16>
    %c240 = arith.constant 240 : index
    %c0_237 = arith.constant 0 : index
    %167 = vector.load %arg19[%c240, %c0_237] : memref<400x1xbf16, #tpu.memory_space<vmem>>, vector<16x1xbf16>
    tpu.vector_store %arg19[%c240, %c0_237], %166 {strides = array<i32>} : memref<400x1xbf16, #tpu.memory_space<vmem>>, vector<16x1xbf16>,
    %c0_238 = arith.constant 0 : index
    %c388 = arith.constant 388 : index
    %168 = vector.load %arg18[%c0_238, %c388] : memref<16x529xbf16, #tpu.memory_space<vmem>>, vector<16x1xbf16>
    %c256_239 = arith.constant 256 : index
    %c0_240 = arith.constant 0 : index
    %169 = vector.load %arg19[%c256_239, %c0_240] : memref<400x1xbf16, #tpu.memory_space<vmem>>, vector<16x1xbf16>
    tpu.vector_store %arg19[%c256_239, %c0_240], %168 {strides = array<i32>} : memref<400x1xbf16, #tpu.memory_space<vmem>>, vector<16x1xbf16>,
    %c0_241 = arith.constant 0 : index
    %c392 = arith.constant 392 : index
    %170 = vector.load %arg18[%c0_241, %c392] : memref<16x529xbf16, #tpu.memory_space<vmem>>, vector<16x1xbf16>
    %c272_242 = arith.constant 272 : index
    %c0_243 = arith.constant 0 : index
    %171 = vector.load %arg19[%c272_242, %c0_243] : memref<400x1xbf16, #tpu.memory_space<vmem>>, vector<16x1xbf16>
    tpu.vector_store %arg19[%c272_242, %c0_243], %170 {strides = array<i32>} : memref<400x1xbf16, #tpu.memory_space<vmem>>, vector<16x1xbf16>,
    %c0_244 = arith.constant 0 : index
    %c396 = arith.constant 396 : index
    %172 = vector.load %arg18[%c0_244, %c396] : memref<16x529xbf16, #tpu.memory_space<vmem>>, vector<16x1xbf16>
    %c288 = arith.constant 288 : index
    %c0_245 = arith.constant 0 : index
    %173 = vector.load %arg19[%c288, %c0_245] : memref<400x1xbf16, #tpu.memory_space<vmem>>, vector<16x1xbf16>
    tpu.vector_store %arg19[%c288, %c0_245], %172 {strides = array<i32>} : memref<400x1xbf16, #tpu.memory_space<vmem>>, vector<16x1xbf16>,
    %c0_246 = arith.constant 0 : index
    %c400 = arith.constant 400 : index
    %174 = vector.load %arg18[%c0_246, %c400] : memref<16x529xbf16, #tpu.memory_space<vmem>>, vector<16x1xbf16>
    %c304 = arith.constant 304 : index
    %c0_247 = arith.constant 0 : index
    %175 = vector.load %arg19[%c304, %c0_247] : memref<400x1xbf16, #tpu.memory_space<vmem>>, vector<16x1xbf16>
    tpu.vector_store %arg19[%c304, %c0_247], %174 {strides = array<i32>} : memref<400x1xbf16, #tpu.memory_space<vmem>>, vector<16x1xbf16>,
    %c0_248 = arith.constant 0 : index
    %c512 = arith.constant 512 : index
    %176 = vector.load %arg18[%c0_248, %c512] : memref<16x529xbf16, #tpu.memory_space<vmem>>, vector<16x1xbf16>
    %c320 = arith.constant 320 : index
    %c0_249 = arith.constant 0 : index
    %177 = vector.load %arg19[%c320, %c0_249] : memref<400x1xbf16, #tpu.memory_space<vmem>>, vector<16x1xbf16>
    tpu.vector_store %arg19[%c320, %c0_249], %176 {strides = array<i32>} : memref<400x1xbf16, #tpu.memory_space<vmem>>, vector<16x1xbf16>,
    %c0_250 = arith.constant 0 : index
    %c516 = arith.constant 516 : index
    %178 = vector.load %arg18[%c0_250, %c516] : memref<16x529xbf16, #tpu.memory_space<vmem>>, vector<16x1xbf16>
    %c336 = arith.constant 336 : index
    %c0_251 = arith.constant 0 : index
    %179 = vector.load %arg19[%c336, %c0_251] : memref<400x1xbf16, #tpu.memory_space<vmem>>, vector<16x1xbf16>
    tpu.vector_store %arg19[%c336, %c0_251], %178 {strides = array<i32>} : memref<400x1xbf16, #tpu.memory_space<vmem>>, vector<16x1xbf16>,
    %c0_252 = arith.constant 0 : index
    %c520 = arith.constant 520 : index
    %180 = vector.load %arg18[%c0_252, %c520] : memref<16x529xbf16, #tpu.memory_space<vmem>>, vector<16x1xbf16>
    %c352 = arith.constant 352 : index
    %c0_253 = arith.constant 0 : index
    %181 = vector.load %arg19[%c352, %c0_253] : memref<400x1xbf16, #tpu.memory_space<vmem>>, vector<16x1xbf16>
    tpu.vector_store %arg19[%c352, %c0_253], %180 {strides = array<i32>} : memref<400x1xbf16, #tpu.memory_space<vmem>>, vector<16x1xbf16>,
    %c0_254 = arith.constant 0 : index
    %c524 = arith.constant 524 : index
    %182 = vector.load %arg18[%c0_254, %c524] : memref<16x529xbf16, #tpu.memory_space<vmem>>, vector<16x1xbf16>
    %c368 = arith.constant 368 : index
    %c0_255 = arith.constant 0 : index
    %183 = vector.load %arg19[%c368, %c0_255] : memref<400x1xbf16, #tpu.memory_space<vmem>>, vector<16x1xbf16>
    tpu.vector_store %arg19[%c368, %c0_255], %182 {strides = array<i32>} : memref<400x1xbf16, #tpu.memory_space<vmem>>, vector<16x1xbf16>,
    %c0_256 = arith.constant 0 : index
    %c528 = arith.constant 528 : index
    %184 = vector.load %arg18[%c0_256, %c528] : memref<16x529xbf16, #tpu.memory_space<vmem>>, vector<16x1xbf16>
    %c384_257 = arith.constant 384 : index
    %c0_258 = arith.constant 0 : index
    %185 = vector.load %arg19[%c384_257, %c0_258] : memref<400x1xbf16, #tpu.memory_space<vmem>>, vector<16x1xbf16>
    tpu.vector_store %arg19[%c384_257, %c0_258], %184 {strides = array<i32>} : memref<400x1xbf16, #tpu.memory_space<vmem>>, vector<16x1xbf16>,
    %c0_259 = arith.constant 0 : index
    %c0_260 = arith.constant 0 : index
    %186 = vector.load %arg6[%c0_259, %c0_260] : memref<120x400xbf16, #tpu.memory_space<vmem>>, vector<120x400xbf16>
    %c0_261 = arith.constant 0 : index
    %c0_262 = arith.constant 0 : index
    %187 = vector.load %arg19[%c0_261, %c0_262] : memref<400x1xbf16, #tpu.memory_space<vmem>>, vector<400x1xbf16>
    %cst_263 = arith.constant dense<0.000000e+00> : vector<120x1xf32>
    %188 = tpu.matmul %186, %187, %cst_263 {dimension_numbers = #tpu.dot_dimension_numbers<[1], [0], [0], [1], [0, 0, 1, 1], [], []>} : vector<120x400xbf16>, vector<400x1xbf16>, vector<120x1xf32> -> vector<120x1xf32>
    %c0_264 = arith.constant 0 : index
    %c0_265 = arith.constant 0 : index
    %189 = vector.load %arg7[%c0_264, %c0_265] : memref<120x1xf32, #tpu.memory_space<vmem>>, vector<120x1xf32>
    %190 = arith.addf %188, %189 : vector<120x1xf32>
    %cst_266 = arith.constant 0.000000e+00 : f32
    %191 = vector.broadcast %cst_266 : f32 to vector<120x1xf32>
    %192 = arith.maximumf %190, %191 : vector<120x1xf32>
    %193 = arith.truncf %192 : vector<120x1xf32> to vector<120x1xbf16>
    %c0_267 = arith.constant 0 : index
    %c0_268 = arith.constant 0 : index
    %194 = vector.load %arg8[%c0_267, %c0_268] : memref<84x120xbf16, #tpu.memory_space<vmem>>, vector<84x120xbf16>
    %cst_269 = arith.constant dense<0.000000e+00> : vector<84x1xf32>
    %195 = tpu.matmul %194, %193, %cst_269 {dimension_numbers = #tpu.dot_dimension_numbers<[1], [0], [0], [1], [0, 0, 1, 1], [], []>} : vector<84x120xbf16>, vector<120x1xbf16>, vector<84x1xf32> -> vector<84x1xf32>
    %c0_270 = arith.constant 0 : index
    %c0_271 = arith.constant 0 : index
    %196 = vector.load %arg9[%c0_270, %c0_271] : memref<84x1xf32, #tpu.memory_space<vmem>>, vector<84x1xf32>
    %197 = arith.addf %195, %196 : vector<84x1xf32>
    %cst_272 = arith.constant 0.000000e+00 : f32
    %198 = vector.broadcast %cst_272 : f32 to vector<84x1xf32>
    %199 = arith.maximumf %197, %198 : vector<84x1xf32>
    %200 = arith.truncf %199 : vector<84x1xf32> to vector<84x1xbf16>
    %c0_273 = arith.constant 0 : index
    %c0_274 = arith.constant 0 : index
    %201 = vector.load %arg10[%c0_273, %c0_274] : memref<10x84xbf16, #tpu.memory_space<vmem>>, vector<10x84xbf16>
    %cst_275 = arith.constant dense<0.000000e+00> : vector<10x1xf32>
    %202 = tpu.matmul %201, %200, %cst_275 {dimension_numbers = #tpu.dot_dimension_numbers<[1], [0], [0], [1], [0, 0, 1, 1], [], []>} : vector<10x84xbf16>, vector<84x1xbf16>, vector<10x1xf32> -> vector<10x1xf32>
    %c0_276 = arith.constant 0 : index
    %c0_277 = arith.constant 0 : index
    %203 = vector.load %arg11[%c0_276, %c0_277] : memref<10x1xf32, #tpu.memory_space<vmem>>, vector<10x1xf32>
    %204 = arith.addf %202, %203 : vector<10x1xf32>
    %c0_278 = arith.constant 0 : index
    %c0_279 = arith.constant 0 : index
    %c0_280 = arith.constant 0 : index
    %205 = vector.load %arg12[%c0_278, %c0_279, %c0_280] : memref<1x10x1xf32, #tpu.memory_space<vmem>>, vector<1x10x1xf32>
    %206 = vector.shape_cast %205 : vector<1x10x1xf32> to vector<10x1xf32>
    %207 = vector.shape_cast %204 : vector<10x1xf32> to vector<1x10x1xf32>
    tpu.vector_store %arg12[%c0_278, %c0_279, %c0_280], %207 {strides = array<i32>} : memref<1x10x1xf32, #tpu.memory_space<vmem>>, vector<1x10x1xf32>,
    return
  }
  func.func @transform_0(%arg0: i32) -> (i32, i32) {
    %c0_i32 = arith.constant 0 : i32
    %c0_i32_0 = arith.constant 0 : i32
    return %c0_i32, %arg0 : i32, i32
  }
  func.func @transform_1(%arg0: i32) -> (i32, i32) {
    %c0_i32 = arith.constant 0 : i32
    %c0_i32_0 = arith.constant 0 : i32
    %c0_i32_1 = arith.constant 0 : i32
    return %c0_i32, %c0_i32_0 : i32, i32
  }
  func.func @transform_2(%arg0: i32) -> (i32, i32) {
    %c0_i32 = arith.constant 0 : i32
    %c0_i32_0 = arith.constant 0 : i32
    %c0_i32_1 = arith.constant 0 : i32
    return %c0_i32, %c0_i32_0 : i32, i32
  }
  func.func @transform_3(%arg0: i32) -> (i32, i32) {
    %c0_i32 = arith.constant 0 : i32
    %c0_i32_0 = arith.constant 0 : i32
    %c0_i32_1 = arith.constant 0 : i32
    return %c0_i32, %c0_i32_0 : i32, i32
  }
  func.func @transform_4(%arg0: i32) -> (i32, i32) {
    %c0_i32 = arith.constant 0 : i32
    %c0_i32_0 = arith.constant 0 : i32
    %c0_i32_1 = arith.constant 0 : i32
    return %c0_i32, %c0_i32_0 : i32, i32
  }
  func.func @transform_5(%arg0: i32) -> (i32, i32) {
    %c0_i32 = arith.constant 0 : i32
    %c0_i32_0 = arith.constant 0 : i32
    %c0_i32_1 = arith.constant 0 : i32
    return %c0_i32, %c0_i32_0 : i32, i32
  }
  func.func @transform_6(%arg0: i32) -> (i32, i32) {
    %c0_i32 = arith.constant 0 : i32
    %c0_i32_0 = arith.constant 0 : i32
    %c0_i32_1 = arith.constant 0 : i32
    return %c0_i32, %c0_i32_0 : i32, i32
  }
  func.func @transform_7(%arg0: i32) -> (i32, i32) {
    %c0_i32 = arith.constant 0 : i32
    %c0_i32_0 = arith.constant 0 : i32
    %c0_i32_1 = arith.constant 0 : i32
    return %c0_i32, %c0_i32_0 : i32, i32
  }
  func.func @transform_8(%arg0: i32) -> (i32, i32) {
    %c0_i32 = arith.constant 0 : i32
    %c0_i32_0 = arith.constant 0 : i32
    %c0_i32_1 = arith.constant 0 : i32
    return %c0_i32, %c0_i32_0 : i32, i32
  }
  func.func @transform_9(%arg0: i32) -> (i32, i32) {
    %c0_i32 = arith.constant 0 : i32
    %c0_i32_0 = arith.constant 0 : i32
    %c0_i32_1 = arith.constant 0 : i32
    return %c0_i32, %c0_i32_0 : i32, i32
  }
  func.func @transform_10(%arg0: i32) -> (i32, i32) {
    %c0_i32 = arith.constant 0 : i32
    %c0_i32_0 = arith.constant 0 : i32
    %c0_i32_1 = arith.constant 0 : i32
    return %c0_i32, %c0_i32_0 : i32, i32
  }
  func.func @transform_11(%arg0: i32) -> (i32, i32, i32) {
    %c0_i32 = arith.constant 0 : i32
    %c0_i32_0 = arith.constant 0 : i32
    %c0_i32_1 = arith.constant 0 : i32
    return %arg0, %c0_i32, %c0_i32_0 : i32, i32, i32
  }
}

</mosaic_0001>

<llo_original>
// kernel: lenet_forward.1
$region0: #{lenet_forward.1}
  #allocation0 [shape = 'u32[]', space=smem, size = 0x4, offset = 0x4, fixed_abs, tag = 'smem constant byte address 0x4 - core index']
  #allocation1 [shape = 'u32[144,128]{1,0:T(1,128)}', space=vmem, size = 0x12000, scoped, tag = 'internal scratch']
  #allocation2 [shape = 'bf16[200,892]{1,0:T(8,128)(2,1)}', space=vmem, size = 0x57800, scoped, tag = 'scratch operand']
  #allocation3 [shape = 'bf16[8,892]{1,0:T(8,128)(2,1)}', space=vmem, size = 0x3800, scoped, tag = 'scratch operand']
  #allocation4 [shape = 'bf16[8,859]{1,0:T(8,128)(2,1)}', space=vmem, size = 0x3800, scoped, tag = 'scratch operand']
  #allocation5 [shape = 'bf16[200,595]{1,0:T(8,128)(2,1)}', space=vmem, size = 0x3e800, scoped, tag = 'scratch operand']
  #allocation6 [shape = 'bf16[16,595]{1,0:T(16,128)(2,1)}', space=vmem, size = 0x5000, scoped, tag = 'scratch operand']
  #allocation7 [shape = 'bf16[16,529]{1,0:T(16,128)(2,1)}', space=vmem, size = 0x5000, scoped, tag = 'scratch operand']
  #allocation8 [shape = 'bf16[400,1]{1,0:T(16,128)(2,1)}', space=vmem, size = 0x19000, scoped, tag = 'scratch operand']
  %s0 = inlined_call_operand.vmem [shape: bf16[8,2048], index: 0, kind: input, shape index: {}]
  %s1 = inlined_call_operand.vmem [shape: bf16[8,200], index: 1, kind: input, shape index: {}]
  %s2 = inlined_call_operand.vmem [shape: f32[8,1], index: 2, kind: input, shape index: {}]
  %s3 = inlined_call_operand.vmem [shape: bf16[16,200], index: 3, kind: input, shape index: {}]
  %s4 = inlined_call_operand.vmem [shape: f32[16,1], index: 4, kind: input, shape index: {}]
  %s5 = inlined_call_operand.vmem [shape: bf16[120,400], index: 5, kind: input, shape index: {}]
  %s6 = inlined_call_operand.vmem [shape: f32[120,1], index: 6, kind: input, shape index: {}]
  %s7 = inlined_call_operand.vmem [shape: bf16[84,120], index: 7, kind: input, shape index: {}]
  %s8 = inlined_call_operand.vmem [shape: f32[84,1], index: 8, kind: input, shape index: {}]
  %s9 = inlined_call_operand.vmem [shape: bf16[10,84], index: 9, kind: input, shape index: {}]
  %s10 = inlined_call_operand.vmem [shape: f32[10,1], index: 10, kind: input, shape index: {}]
  %s11 = inlined_call_operand.vmem [shape: f32[2,10,1], index: 11, kind: output, shape index: {}]
  %s12 = sld [smem:[#allocation0]]
  $region77: #{lenet_forward.1} parent=0
    _
  %s14 = ssub.s32 1, %s12
  %s15 = scalar_select 0, %s14, %s12
  loop: start=0, step=1, limit=4
  $region2: #{lenet_forward.1} parent=0 // loop_pre_header
    _
  $region3: #{lenet_forward.1} parent=0 // loop_header
    %s17 = sphi 0, %s21
    %p18 = scmp.ge.s32.totalorder %s17, 4
    %s27 = sphi 0, %s29
    %s30 = sphi 0, %s27
    %s31 = sphi 0, %s30
    %s47 = sphi 0, %s31
    %s51 = sphi 0, %s51
    %s53 = sphi 0, %s51
    %s54 = sphi 0, %s53
    %s68 = sphi 0, %s54
    %s72 = sphi 0, %s72
    %s74 = sphi 0, %s72
    %s75 = sphi 0, %s74
    %s89 = sphi 0, %s75
    %s93 = sphi 0, %s93
    %s95 = sphi 0, %s93
    %s96 = sphi 0, %s95
    %s110 = sphi 0, %s96
    %s114 = sphi 0, %s114
    %s116 = sphi 0, %s114
    %s117 = sphi 0, %s116
    %s131 = sphi 0, %s117
    %s135 = sphi 0, %s135
    %s137 = sphi 0, %s135
    %s138 = sphi 0, %s137
    %s152 = sphi 0, %s138
    %s156 = sphi 0, %s156
    %s158 = sphi 0, %s156
    %s159 = sphi 0, %s158
    %s173 = sphi 0, %s159
    %s177 = sphi 0, %s177
    %s179 = sphi 0, %s177
    %s180 = sphi 0, %s179
    %s194 = sphi 0, %s180
    %s198 = sphi 0, %s198
    %s200 = sphi 0, %s198
    %s201 = sphi 0, %s200
    %s215 = sphi 0, %s201
    %s219 = sphi 0, %s219
    %s221 = sphi 0, %s219
    %s222 = sphi 0, %s221
    %s236 = sphi 0, %s222
    %s240 = sphi 0, %s240
    %s242 = sphi 0, %s240
    %s243 = sphi 0, %s242
    %s257 = sphi 0, %s243
    %s263 = sphi 0, %s265
    %s266 = sphi 0, %s263
    %s267 = sphi 0, %s266
    %s283 = sphi 0, %s267
  $region4: #{lenet_forward.1} parent=0 // loop_header_branch
    %20 = sbr.rel (%p18) target = $region8
  $region5: #{lenet_forward.1} parent=0 // loop_body
    %s22 = ssub.s32 %s17, 1
    %s23 = ssub.s32 %s17, 2
    %s24 = sadd.s32 %s17, 1
    %s25 = ssub.s32 %s17, %s24
    %p26 = scmp.eq.s32.totalorder %s25, 0
    %s28 = sadd.s32 %s27, 1
    %s29 = scalar_select %p26, %s27, %s28
    %p32 = pneg %p26
    %p33 = scmp.eq.s32.totalorder %s17, 1
    %p34 = por %p32, %p33
    %p35 = scmp.ne.s32.totalorder %s27, %s30
    %p36 = scmp.eq.s32.totalorder %s17, 0
    %p37 = por %p35, %p36
    %p38 = scmp.ne.s32.totalorder %s27, %s30
    %p39 = scmp.eq.s32.totalorder %s22, 1
    %p40 = por %p38, %p39
    %p41 = scmp.ne.s32.totalorder %s30, %s31
    %p42 = scmp.eq.s32.totalorder %s22, 0
    %p43 = por %p41, %p42
    %p44 = scmp.ne.s32.totalorder %s30, %s31
    %p45 = scmp.eq.s32.totalorder %s23, 1
    %p46 = por %p44, %p45
    %p48 = scmp.ne.s32.totalorder %s31, %s47
    %p49 = scmp.eq.s32.totalorder %s23, 0
    %p50 = por %p48, %p49
    %s52 = sadd.s32 %s51, 1
    %p55 = scmp.eq.s32.totalorder %s17, 1
    %p56 = scmp.ne.s32.totalorder %s51, %s53
    %p57 = scmp.eq.s32.totalorder %s17, 0
    %p58 = por %p56, %p57
    %p59 = scmp.ne.s32.totalorder %s51, %s53
    %p60 = scmp.eq.s32.totalorder %s22, 1
    %p61 = por %p59, %p60
    %p62 = scmp.ne.s32.totalorder %s53, %s54
    %p63 = scmp.eq.s32.totalorder %s22, 0
    %p64 = por %p62, %p63
    %p65 = scmp.ne.s32.totalorder %s53, %s54
    %p66 = scmp.eq.s32.totalorder %s23, 1
    %p67 = por %p65, %p66
    %p69 = scmp.ne.s32.totalorder %s54, %s68
    %p70 = scmp.eq.s32.totalorder %s23, 0
    %p71 = por %p69, %p70
    %s73 = sadd.s32 %s72, 1
    %p76 = scmp.eq.s32.totalorder %s17, 1
    %p77 = scmp.ne.s32.totalorder %s72, %s74
    %p78 = scmp.eq.s32.totalorder %s17, 0
    %p79 = por %p77, %p78
    %p80 = scmp.ne.s32.totalorder %s72, %s74
    %p81 = scmp.eq.s32.totalorder %s22, 1
    %p82 = por %p80, %p81
    %p83 = scmp.ne.s32.totalorder %s74, %s75
    %p84 = scmp.eq.s32.totalorder %s22, 0
    %p85 = por %p83, %p84
    %p86 = scmp.ne.s32.totalorder %s74, %s75
    %p87 = scmp.eq.s32.totalorder %s23, 1
    %p88 = por %p86, %p87
    %p90 = scmp.ne.s32.totalorder %s75, %s89
    %p91 = scmp.eq.s32.totalorder %s23, 0
    %p92 = por %p90, %p91
    %s94 = sadd.s32 %s93, 1
    %p97 = scmp.eq.s32.totalorder %s17, 1
    %p98 = scmp.ne.s32.totalorder %s93, %s95
    %p99 = scmp.eq.s32.totalorder %s17, 0
    %p100 = por %p98, %p99
    %p101 = scmp.ne.s32.totalorder %s93, %s95
    %p102 = scmp.eq.s32.totalorder %s22, 1
    %p103 = por %p101, %p102
    %p104 = scmp.ne.s32.totalorder %s95, %s96
    %p105 = scmp.eq.s32.totalorder %s22, 0
    %p106 = por %p104, %p105
    %p107 = scmp.ne.s32.totalorder %s95, %s96
    %p108 = scmp.eq.s32.totalorder %s23, 1
    %p109 = por %p107, %p108
    %p111 = scmp.ne.s32.totalorder %s96, %s110
    %p112 = scmp.eq.s32.totalorder %s23, 0
    %p113 = por %p111, %p112
    %s115 = sadd.s32 %s114, 1
    %p118 = scmp.eq.s32.totalorder %s17, 1
    %p119 = scmp.ne.s32.totalorder %s114, %s116
    %p120 = scmp.eq.s32.totalorder %s17, 0
    %p121 = por %p119, %p120
    %p122 = scmp.ne.s32.totalorder %s114, %s116
    %p123 = scmp.eq.s32.totalorder %s22, 1
    %p124 = por %p122, %p123
    %p125 = scmp.ne.s32.totalorder %s116, %s117
    %p126 = scmp.eq.s32.totalorder %s22, 0
    %p127 = por %p125, %p126
    %p128 = scmp.ne.s32.totalorder %s116, %s117
    %p129 = scmp.eq.s32.totalorder %s23, 1
    %p130 = por %p128, %p129
    %p132 = scmp.ne.s32.totalorder %s117, %s131
    %p133 = scmp.eq.s32.totalorder %s23, 0
    %p134 = por %p132, %p133
    %s136 = sadd.s32 %s135, 1
    %p139 = scmp.eq.s32.totalorder %s17, 1
    %p140 = scmp.ne.s32.totalorder %s135, %s137
    %p141 = scmp.eq.s32.totalorder %s17, 0
    %p142 = por %p140, %p141
    %p143 = scmp.ne.s32.totalorder %s135, %s137
    %p144 = scmp.eq.s32.totalorder %s22, 1
    %p145 = por %p143, %p144
    %p146 = scmp.ne.s32.totalorder %s137, %s138
    %p147 = scmp.eq.s32.totalorder %s22, 0
    %p148 = por %p146, %p147
    %p149 = scmp.ne.s32.totalorder %s137, %s138
    %p150 = scmp.eq.s32.totalorder %s23, 1
    %p151 = por %p149, %p150
    %p153 = scmp.ne.s32.totalorder %s138, %s152
    %p154 = scmp.eq.s32.totalorder %s23, 0
    %p155 = por %p153, %p154
    %s157 = sadd.s32 %s156, 1
    %p160 = scmp.eq.s32.totalorder %s17, 1
    %p161 = scmp.ne.s32.totalorder %s156, %s158
    %p162 = scmp.eq.s32.totalorder %s17, 0
    %p163 = por %p161, %p162
    %p164 = scmp.ne.s32.totalorder %s156, %s158
    %p165 = scmp.eq.s32.totalorder %s22, 1
    %p166 = por %p164, %p165
    %p167 = scmp.ne.s32.totalorder %s158, %s159
    %p168 = scmp.eq.s32.totalorder %s22, 0
    %p169 = por %p167, %p168
    %p170 = scmp.ne.s32.totalorder %s158, %s159
    %p171 = scmp.eq.s32.totalorder %s23, 1
    %p172 = por %p170, %p171
    %p174 = scmp.ne.s32.totalorder %s159, %s173
    %p175 = scmp.eq.s32.totalorder %s23, 0
    %p176 = por %p174, %p175
    %s178 = sadd.s32 %s177, 1
    %p181 = scmp.eq.s32.totalorder %s17, 1
    %p182 = scmp.ne.s32.totalorder %s177, %s179
    %p183 = scmp.eq.s32.totalorder %s17, 0
    %p184 = por %p182, %p183
    %p185 = scmp.ne.s32.totalorder %s177, %s179
    %p186 = scmp.eq.s32.totalorder %s22, 1
    %p187 = por %p185, %p186
    %p188 = scmp.ne.s32.totalorder %s179, %s180
    %p189 = scmp.eq.s32.totalorder %s22, 0
    %p190 = por %p188, %p189
    %p191 = scmp.ne.s32.totalorder %s179, %s180
    %p192 = scmp.eq.s32.totalorder %s23, 1
    %p193 = por %p191, %p192
    %p195 = scmp.ne.s32.totalorder %s180, %s194
    %p196 = scmp.eq.s32.totalorder %s23, 0
    %p197 = por %p195, %p196
    %s199 = sadd.s32 %s198, 1
    %p202 = scmp.eq.s32.totalorder %s17, 1
    %p203 = scmp.ne.s32.totalorder %s198, %s200
    %p204 = scmp.eq.s32.totalorder %s17, 0
    %p205 = por %p203, %p204
    %p206 = scmp.ne.s32.totalorder %s198, %s200
    %p207 = scmp.eq.s32.totalorder %s22, 1
    %p208 = por %p206, %p207
    %p209 = scmp.ne.s32.totalorder %s200, %s201
    %p210 = scmp.eq.s32.totalorder %s22, 0
    %p211 = por %p209, %p210
    %p212 = scmp.ne.s32.totalorder %s200, %s201
    %p213 = scmp.eq.s32.totalorder %s23, 1
    %p214 = por %p212, %p213
    %p216 = scmp.ne.s32.totalorder %s201, %s215
    %p217 = scmp.eq.s32.totalorder %s23, 0
    %p218 = por %p216, %p217
    %s220 = sadd.s32 %s219, 1
    %p223 = scmp.eq.s32.totalorder %s17, 1
    %p224 = scmp.ne.s32.totalorder %s219, %s221
    %p225 = scmp.eq.s32.totalorder %s17, 0
    %p226 = por %p224, %p225
    %p227 = scmp.ne.s32.totalorder %s219, %s221
    %p228 = scmp.eq.s32.totalorder %s22, 1
    %p229 = por %p227, %p228
    %p230 = scmp.ne.s32.totalorder %s221, %s222
    %p231 = scmp.eq.s32.totalorder %s22, 0
    %p232 = por %p230, %p231
    %p233 = scmp.ne.s32.totalorder %s221, %s222
    %p234 = scmp.eq.s32.totalorder %s23, 1
    %p235 = por %p233, %p234
    %p237 = scmp.ne.s32.totalorder %s222, %s236
    %p238 = scmp.eq.s32.totalorder %s23, 0
    %p239 = por %p237, %p238
    %s241 = sadd.s32 %s240, 1
    %p244 = scmp.eq.s32.totalorder %s17, 1
    %p245 = scmp.ne.s32.totalorder %s240, %s242
    %p246 = scmp.eq.s32.totalorder %s17, 0
    %p247 = por %p245, %p246
    %p248 = scmp.ne.s32.totalorder %s240, %s242
    %p249 = scmp.eq.s32.totalorder %s22, 1
    %p250 = por %p248, %p249
    %p251 = scmp.ne.s32.totalorder %s242, %s243
    %p252 = scmp.eq.s32.totalorder %s22, 0
    %p253 = por %p251, %p252
    %p254 = scmp.ne.s32.totalorder %s242, %s243
    %p255 = scmp.eq.s32.totalorder %s23, 1
    %p256 = por %p254, %p255
    %p258 = scmp.ne.s32.totalorder %s243, %s257
    %p259 = scmp.eq.s32.totalorder %s23, 0
    %p260 = por %p258, %p259
    %s261 = ssub.s32 %s17, %s24
    %p262 = scmp.eq.s32.totalorder %s261, 0
    %s264 = sadd.s32 %s263, 1
    %s265 = scalar_select %p262, %s263, %s264
    %p268 = pneg %p262
    %p269 = scmp.eq.s32.totalorder %s17, 1
    %p270 = por %p268, %p269
    %p271 = scmp.ne.s32.totalorder %s263, %s266
    %p272 = scmp.eq.s32.totalorder %s17, 0
    %p273 = por %p271, %p272
    %p274 = scmp.ne.s32.totalorder %s263, %s266
    %p275 = scmp.eq.s32.totalorder %s22, 1
    %p276 = por %p274, %p275
    %p277 = scmp.ne.s32.totalorder %s266, %s267
    %p278 = scmp.eq.s32.totalorder %s22, 0
    %p279 = por %p277, %p278
    %p280 = scmp.ne.s32.totalorder %s266, %s267
    %p281 = scmp.eq.s32.totalorder %s23, 1
    %p282 = por %p280, %p281
    %p284 = scmp.ne.s32.totalorder %s267, %s283
    %p285 = scmp.eq.s32.totalorder %s23, 0
    %p286 = por %p284, %p285
    %p287 = scmp.le.s32.totalorder 1, %s17
    %p288 = scmp.lt.s32.totalorder %s17, 3
    %p289 = pnand %p287, %p288
    %p290 = pneg %p289
    // Predicated region
    $region9: #{lenet_forward.1} parent=5 // pred_check
      _
    $region10: #{lenet_forward.1} parent=5 // pred_check_branch
      %292 = sbr.rel (%p289) target = $region12
    $region11: #{lenet_forward.1} parent=5 // pred_region
      %s293 = ssub.s32 %s17, 1
      // Predicated region
      $region13: #{lenet_forward.1} parent=11 // pred_check
        %p294 = pneg %p64
      $region14: #{lenet_forward.1} parent=11 // pred_check_branch
        %296 = sbr.rel (%p294) target = $region16
      $region15: #{lenet_forward.1} parent=11 // pred_region
        _
      $region16: #{lenet_forward.1} parent=11 // pred_fallthru
        _
      // Predicated region
      $region17: #{lenet_forward.1} parent=11 // pred_check
        %p297 = pneg %p85
      $region18: #{lenet_forward.1} parent=11 // pred_check_branch
        %299 = sbr.rel (%p297) target = $region20
      $region19: #{lenet_forward.1} parent=11 // pred_region
        _
      $region20: #{lenet_forward.1} parent=11 // pred_fallthru
        _
      // Predicated region
      $region21: #{lenet_forward.1} parent=11 // pred_check
        %p300 = pneg %p106
      $region22: #{lenet_forward.1} parent=11 // pred_check_branch
        %302 = sbr.rel (%p300) target = $region24
      $region23: #{lenet_forward.1} parent=11 // pred_region
        _
      $region24: #{lenet_forward.1} parent=11 // pred_fallthru
        _
      // Predicated region
      $region25: #{lenet_forward.1} parent=11 // pred_check
        %p303 = pneg %p127
      $region26: #{lenet_forward.1} parent=11 // pred_check_branch
        %305 = sbr.rel (%p303) target = $region28
      $region27: #{lenet_forward.1} parent=11 // pred_region
        _
      $region28: #{lenet_forward.1} parent=11 // pred_fallthru
        _
      // Predicated region
      $region29: #{lenet_forward.1} parent=11 // pred_check
        %p306 = pneg %p148
      $region30: #{lenet_forward.1} parent=11 // pred_check_branch
        %308 = sbr.rel (%p306) target = $region32
      $region31: #{lenet_forward.1} parent=11 // pred_region
        _
      $region32: #{lenet_forward.1} parent=11 // pred_fallthru
        _
      // Predicated region
      $region33: #{lenet_forward.1} parent=11 // pred_check
        %p309 = pneg %p169
      $region34: #{lenet_forward.1} parent=11 // pred_check_branch
        %311 = sbr.rel (%p309) target = $region36
      $region35: #{lenet_forward.1} parent=11 // pred_region
        _
      $region36: #{lenet_forward.1} parent=11 // pred_fallthru
        _
      // Predicated region
      $region37: #{lenet_forward.1} parent=11 // pred_check
        %p312 = pneg %p190
      $region38: #{lenet_forward.1} parent=11 // pred_check_branch
        %314 = sbr.rel (%p312) target = $region40
      $region39: #{lenet_forward.1} parent=11 // pred_region
        _
      $region40: #{lenet_forward.1} parent=11 // pred_fallthru
        _
      // Predicated region
      $region41: #{lenet_forward.1} parent=11 // pred_check
        %p315 = pneg %p211
      $region42: #{lenet_forward.1} parent=11 // pred_check_branch
        %317 = sbr.rel (%p315) target = $region44
      $region43: #{lenet_forward.1} parent=11 // pred_region
        _
      $region44: #{lenet_forward.1} parent=11 // pred_fallthru
        _
      // Predicated region
      $region45: #{lenet_forward.1} parent=11 // pred_check
        %p318 = pneg %p232
      $region46: #{lenet_forward.1} parent=11 // pred_check_branch
        %320 = sbr.rel (%p318) target = $region48
      $region47: #{lenet_forward.1} parent=11 // pred_region
        _
      $region48: #{lenet_forward.1} parent=11 // pred_fallthru
        _
      // Predicated region
      $region49: #{lenet_forward.1} parent=11 // pred_check
        %p321 = pneg %p253
      $region50: #{lenet_forward.1} parent=11 // pred_check_branch
        %323 = sbr.rel (%p321) target = $region52
      $region51: #{lenet_forward.1} parent=11 // pred_region
        _
      $region52: #{lenet_forward.1} parent=11 // pred_fallthru
        _
    $region12: #{lenet_forward.1} parent=5 // pred_fallthru
      _
    %p324 = scmp.lt.s32.totalorder %s17, 2
    // Predicated region
    $region53: #{lenet_forward.1} parent=5 // pred_check
      %p325 = pneg %p324
    $region54: #{lenet_forward.1} parent=5 // pred_check_branch
      %327 = sbr.rel (%p325) target = $region56
    $region55: #{lenet_forward.1} parent=5 // pred_region
      // Predicated region
      $region57: #{lenet_forward.1} parent=55 // pred_check
        %p328 = pneg %p37
      $region58: #{lenet_forward.1} parent=55 // pred_check_branch
        %330 = sbr.rel (%p328) target = $region60
      $region59: #{lenet_forward.1} parent=55 // pred_region
        %s331 = smul.u32 8, %s17
        %p332 = scmp.lt.s32.totalorder %s331, 15
        %s333 = scalar_select %p332, %s331, 15
        %s334 = smul.addr %s333, 4
        %s335 = scalar_lea.vmem %s0, %s334
        %s336 = smul.u32 8, %s17
      $region60: #{lenet_forward.1} parent=55 // pred_fallthru
        _
    $region56: #{lenet_forward.1} parent=5 // pred_fallthru
      _
    %p337 = scmp.le.s32.totalorder 1, %s17
    %p338 = scmp.lt.s32.totalorder %s17, 3
    %p339 = pnand %p337, %p338
    %p340 = pneg %p339
    // Predicated region
    $region61: #{lenet_forward.1} parent=5 // pred_check
      _
    $region62: #{lenet_forward.1} parent=5 // pred_check_branch
      %342 = sbr.rel (%p339) target = $region64
    $region63: #{lenet_forward.1} parent=5 // pred_region
      %s343 = ssub.s32 %s17, 1
      %s344 = smul.u32 8, %s22
      %p345 = scmp.lt.s32.totalorder %s344, 15
      %s346 = scalar_select %p345, %s344, 15
      %s347 = smul.addr %s346, 4
      %s348 = scalar_lea.vmem %s0, %s347
      %p349 = pneg %p43
      %p350 = pneg %p40
      %p351 = pneg %p64
      %p352 = pneg %p61
      %p353 = pneg %p85
      %p354 = pneg %p82
      %p355 = pneg %p106
      %p356 = pneg %p103
      %p357 = pneg %p127
      %p358 = pneg %p124
      %p359 = pneg %p148
      %p360 = pneg %p145
      %p361 = pneg %p169
      %p362 = pneg %p166
      %p363 = pneg %p190
      %p364 = pneg %p187
      %p365 = pneg %p211
      %p366 = pneg %p208
      %p367 = pneg %p232
      %p368 = pneg %p229
      %p369 = pneg %p253
      %p370 = pneg %p250
      %p371 = pneg %p279
      %p372 = pneg %p276
      %p373 = scmp.lt.s32.totalorder %s22, 1
      %s374 = scalar_select %p373, %s22, 1
      %s375 = smul.addr %s374, 2
      %s376 = smul.addr %s375, 8
      %s377 = scalar_lea.vmem %s11, %s376
      %s378 = smul.u32 8, %s22
      %p379 = scmp.lt.s32.totalorder %s378, 15
      %s380 = scalar_select %p379, %s378, 15
      %s381 = smul.addr %s380, 4
      %s382 = scalar_lea.vmem %s0, %s381
      %s383 = smul.u32 8, %s22
      %p384 = scmp.lt.s32.totalorder %s22, 1
      %s385 = scalar_select %p384, %s22, 1
      %s386 = smul.addr %s385, 2
      %s387 = smul.addr %s386, 8
      %s388 = scalar_lea.vmem %s11, %s387
      %v390 = vld [vmem:[%s382] sm:$0xff]
      %v391 = vld [vmem:[%s382 + $0x8] sm:$0xff]
      %v392 = vld [vmem:[%s382 + $0x10] sm:$0xff]
      %v393 = vld [vmem:[%s382 + $0x18] sm:$0xf]
      %394 = vst [vmem:[#allocation2] sm:$0xff] %v390
      %395 = vst [vmem:[#allocation2 + $0x8] sm:$0xff] %v391
      %396 = vst [vmem:[#allocation2 + $0x10] sm:$0xff] %v392
      %vm397 = vcmask 1010688
      %398 = vst.msk [vmem:[#allocation2 + $0x18] sm:$0xf] %vm397, %v393
      %v399 = vld [vmem:[%s382] sm:$0xff]
      %v400 = vld [vmem:[%s382 + $0x8] sm:$0xff]
      %v401 = vld [vmem:[%s382 + $0x10] sm:$0xff]
      %v402 = vld [vmem:[%s382 + $0x18] sm:$0xf]
      %407 = vrot.lane.b32.xlu0 %v399, 127
      %v408 = vpop.permute.xlu0 %407
      %409 = vrot.lane.b32.xlu0 %v400, 127
      %v410 = vpop.permute.xlu0 %409
      %411 = vrot.lane.b32.xlu0 %v401, 127
      %v412 = vpop.permute.xlu0 %411
      %413 = vrot.lane.b32.xlu0 %v402, 127
      %v414 = vpop.permute.xlu0 %413
      %v415 = vrot.slane %v408, 4
      %v416 = vrot.slane %v410, 4
      %v417 = vrot.slane %v412, 4
      %v418 = vrot.slane %v414, 4
      %vm419 = vcmask 1043456
      %v420 = vsel %vm419, %v415, %v416
      %vm421 = vcmask 1039360
      %v422 = vsel %vm421, %v408, %v420
      %v423 = vsel %vm419, %v416, %v417
      %v424 = vsel %vm421, %v410, %v423
      %v425 = vsel %vm419, %v417, %v418
      %v426 = vsel %vm421, %v412, %v425
      %431 = vst [vmem:[#allocation2 + $0x1c] sm:$0xff] %v422
      %432 = vst [vmem:[#allocation2 + $0x24] sm:$0xff] %v424
      %433 = vst [vmem:[#allocation2 + $0x2c] sm:$0xff] %v426
      %434 = vst.msk [vmem:[#allocation2 + $0x34] sm:$0xf] %vm397, %v414
      %v435 = vld [vmem:[%s382] sm:$0xff]
      %v436 = vld [vmem:[%s382 + $0x8] sm:$0xff]
      %v437 = vld [vmem:[%s382 + $0x10] sm:$0xff]
      %v438 = vld [vmem:[%s382 + $0x18] sm:$0xf]
      %443 = vrot.lane.b32.xlu0 %v435, 126
      %v444 = vpop.permute.xlu0 %443
      %445 = vrot.lane.b32.xlu0 %v436, 126
      %v446 = vpop.permute.xlu0 %445
      %447 = vrot.lane.b32.xlu0 %v437, 126
      %v448 = vpop.permute.xlu0 %447
      %449 = vrot.lane.b32.xlu0 %v438, 126
      %v450 = vpop.permute.xlu0 %449
      %v451 = vrot.slane %v444, 4
      %v452 = vrot.slane %v446, 4
      %v453 = vrot.slane %v448, 4
      %v454 = vrot.slane %v450, 4
      %v455 = vsel %vm419, %v451, %v452
      %vm456 = vcmask 1031168
      %v457 = vsel %vm456, %v444, %v455
      %v458 = vsel %vm419, %v452, %v453
      %v459 = vsel %vm456, %v446, %v458
      %v460 = vsel %vm419, %v453, %v454
      %v461 = vsel %vm456, %v448, %v460
      %466 = vst [vmem:[#allocation2 + $0x38] sm:$0xff] %v457
      %467 = vst [vmem:[#allocation2 + $0x40] sm:$0xff] %v459
      %468 = vst [vmem:[#allocation2 + $0x48] sm:$0xff] %v461
      %469 = vst.msk [vmem:[#allocation2 + $0x50] sm:$0xf] %vm397, %v450
      %v470 = vld [vmem:[%s382] sm:$0xff]
      %v471 = vld [vmem:[%s382 + $0x8] sm:$0xff]
      %v472 = vld [vmem:[%s382 + $0x10] sm:$0xff]
      %v473 = vld [vmem:[%s382 + $0x18] sm:$0xf]
      %478 = vrot.lane.b32.xlu0 %v470, 125
      %v479 = vpop.permute.xlu0 %478
      %480 = vrot.lane.b32.xlu0 %v471, 125
      %v481 = vpop.permute.xlu0 %480
      %482 = vrot.lane.b32.xlu0 %v472, 125
      %v483 = vpop.permute.xlu0 %482
      %484 = vrot.lane.b32.xlu0 %v473, 125
      %v485 = vpop.permute.xlu0 %484
      %v486 = vrot.slane %v479, 4
      %v487 = vrot.slane %v481, 4
      %v488 = vrot.slane %v483, 4
      %v489 = vrot.slane %v485, 4
      %v490 = vsel %vm419, %v486, %v487
      %vm491 = vcmask 1022976
      %v492 = vsel %vm491, %v479, %v490
      %v493 = vsel %vm419, %v487, %v488
      %v494 = vsel %vm491, %v481, %v493
      %v495 = vsel %vm419, %v488, %v489
      %v496 = vsel %vm491, %v483, %v495
      %501 = vst [vmem:[#allocation2 + $0x54] sm:$0xff] %v492
      %502 = vst [vmem:[#allocation2 + $0x5c] sm:$0xff] %v494
      %503 = vst [vmem:[#allocation2 + $0x64] sm:$0xff] %v496
      %504 = vst.msk [vmem:[#allocation2 + $0x6c] sm:$0xf] %vm397, %v485
      %v505 = vld [vmem:[%s382] sm:$0xff]
      %v506 = vld [vmem:[%s382 + $0x8] sm:$0xff]
      %v507 = vld [vmem:[%s382 + $0x10] sm:$0xff]
      %v508 = vld [vmem:[%s382 + $0x18] sm:$0xf]
      %513 = vrot.lane.b32.xlu0 %v505, 124
      %v514 = vpop.permute.xlu0 %513
      %515 = vrot.lane.b32.xlu0 %v506, 124
      %v516 = vpop.permute.xlu0 %515
      %517 = vrot.lane.b32.xlu0 %v507, 124
      %v518 = vpop.permute.xlu0 %517
      %519 = vrot.lane.b32.xlu0 %v508, 124
      %v520 = vpop.permute.xlu0 %519
      %v521 = vrot.slane %v514, 4
      %v522 = vrot.slane %v516, 4
      %v523 = vrot.slane %v518, 4
      %v524 = vrot.slane %v520, 4
      %v525 = vsel %vm419, %v521, %v522
      %vm526 = vcmask 1014784
      %v527 = vsel %vm526, %v514, %v525
      %v528 = vsel %vm419, %v522, %v523
      %v529 = vsel %vm526, %v516, %v528
      %v530 = vsel %vm419, %v523, %v524
      %v531 = vsel %vm526, %v518, %v530
      %536 = vst [vmem:[#allocation2 + $0x70] sm:$0xff] %v527
      %537 = vst [vmem:[#allocation2 + $0x78] sm:$0xff] %v529
      %538 = vst [vmem:[#allocation2 + $0x80] sm:$0xff] %v531
      %539 = vst.msk [vmem:[#allocation2 + $0x88] sm:$0xf] %vm397, %v520
      %v540 = vld [vmem:[%s382] sm:$0xff]
      %v541 = vld [vmem:[%s382 + $0x8] sm:$0xff]
      %v542 = vld [vmem:[%s382 + $0x10] sm:$0xff]
      %v543 = vld [vmem:[%s382 + $0x18] sm:$0xff]
      %548 = vrot.lane.b32.xlu0 %v540, 96
      %v549 = vpop.permute.xlu0 %548
      %550 = vrot.lane.b32.xlu0 %v541, 96
      %v551 = vpop.permute.xlu0 %550
      %552 = vrot.lane.b32.xlu0 %v542, 96
      %v553 = vpop.permute.xlu0 %552
      %554 = vrot.lane.b32.xlu0 %v543, 96
      %v555 = vpop.permute.xlu0 %554
      %v556 = vrot.slane %v549, 4
      %v557 = vrot.slane %v551, 4
      %v558 = vrot.slane %v553, 4
      %v559 = vrot.slane %v555, 4
      %v560 = vsel %vm419, %v556, %v557
      %vm561 = vcmask 785408
      %v562 = vsel %vm561, %v549, %v560
      %v563 = vsel %vm419, %v557, %v558
      %v564 = vsel %vm561, %v551, %v563
      %v565 = vsel %vm419, %v558, %v559
      %v566 = vsel %vm561, %v553, %v565
      %v567 = vsel %vm561, %v555, %v559
      %572 = vst [vmem:[#allocation2 + $0x8c] sm:$0xff] %v562
      %573 = vst [vmem:[#allocation2 + $0x94] sm:$0xff] %v564
      %574 = vst [vmem:[#allocation2 + $0x9c] sm:$0xff] %v566
      %575 = vst.msk [vmem:[#allocation2 + $0xa4] sm:$0xf] %vm397, %v567
      %v576 = vld [vmem:[%s382] sm:$0xff]
      %v577 = vld [vmem:[%s382 + $0x8] sm:$0xff]
      %v578 = vld [vmem:[%s382 + $0x10] sm:$0xff]
      %v579 = vld [vmem:[%s382 + $0x18] sm:$0xff]
      %584 = vrot.lane.b32.xlu0 %v576, 95
      %v585 = vpop.permute.xlu0 %584
      %586 = vrot.lane.b32.xlu0 %v577, 95
      %v587 = vpop.permute.xlu0 %586
      %588 = vrot.lane.b32.xlu0 %v578, 95
      %v589 = vpop.permute.xlu0 %588
      %590 = vrot.lane.b32.xlu0 %v579, 95
      %v591 = vpop.permute.xlu0 %590
      %v592 = vrot.slane %v585, 4
      %v593 = vrot.slane %v587, 4
      %v594 = vrot.slane %v589, 4
      %v595 = vrot.slane %v591, 4
      %v596 = vsel %vm419, %v592, %v593
      %vm597 = vcmask 777216
      %v598 = vsel %vm597, %v585, %v596
      %v599 = vsel %vm419, %v593, %v594
      %v600 = vsel %vm597, %v587, %v599
      %v601 = vsel %vm419, %v594, %v595
      %v602 = vsel %vm597, %v589, %v601
      %v603 = vsel %vm597, %v591, %v595
      %608 = vst [vmem:[#allocation2 + $0xa8] sm:$0xff] %v598
      %609 = vst [vmem:[#allocation2 + $0xb0] sm:$0xff] %v600
      %610 = vst [vmem:[#allocation2 + $0xb8] sm:$0xff] %v602
      %611 = vst.msk [vmem:[#allocation2 + $0xc0] sm:$0xf] %vm397, %v603
      %v612 = vld [vmem:[%s382] sm:$0xff]
      %v613 = vld [vmem:[%s382 + $0x8] sm:$0xff]
      %v614 = vld [vmem:[%s382 + $0x10] sm:$0xff]
      %v615 = vld [vmem:[%s382 + $0x18] sm:$0xff]
      %620 = vrot.lane.b32.xlu0 %v612, 94
      %v621 = vpop.permute.xlu0 %620
      %622 = vrot.lane.b32.xlu0 %v613, 94
      %v623 = vpop.permute.xlu0 %622
      %624 = vrot.lane.b32.xlu0 %v614, 94
      %v625 = vpop.permute.xlu0 %624
      %626 = vrot.lane.b32.xlu0 %v615, 94
      %v627 = vpop.permute.xlu0 %626
      %v628 = vrot.slane %v621, 4
      %v629 = vrot.slane %v623, 4
      %v630 = vrot.slane %v625, 4
      %v631 = vrot.slane %v627, 4
      %v632 = vsel %vm419, %v628, %v629
      %vm633 = vcmask 769024
      %v634 = vsel %vm633, %v621, %v632
      %v635 = vsel %vm419, %v629, %v630
      %v636 = vsel %vm633, %v623, %v635
      %v637 = vsel %vm419, %v630, %v631
      %v638 = vsel %vm633, %v625, %v637
      %v639 = vsel %vm633, %v627, %v631
      %644 = vst [vmem:[#allocation2 + $0xc4] sm:$0xff] %v634
      %645 = vst [vmem:[#allocation2 + $0xcc] sm:$0xff] %v636
      %646 = vst [vmem:[#allocation2 + $0xd4] sm:$0xff] %v638
      %647 = vst.msk [vmem:[#allocation2 + $0xdc] sm:$0xf] %vm397, %v639
      %v648 = vld [vmem:[%s382] sm:$0xff]
      %v649 = vld [vmem:[%s382 + $0x8] sm:$0xff]
      %v650 = vld [vmem:[%s382 + $0x10] sm:$0xff]
      %v651 = vld [vmem:[%s382 + $0x18] sm:$0xff]
      %656 = vrot.lane.b32.xlu0 %v648, 93
      %v657 = vpop.permute.xlu0 %656
      %658 = vrot.lane.b32.xlu0 %v649, 93
      %v659 = vpop.permute.xlu0 %658
      %660 = vrot.lane.b32.xlu0 %v650, 93
      %v661 = vpop.permute.xlu0 %660
      %662 = vrot.lane.b32.xlu0 %v651, 93
      %v663 = vpop.permute.xlu0 %662
      %v664 = vrot.slane %v657, 4
      %v665 = vrot.slane %v659, 4
      %v666 = vrot.slane %v661, 4
      %v667 = vrot.slane %v663, 4
      %v668 = vsel %vm419, %v664, %v665
      %vm669 = vcmask 760832
      %v670 = vsel %vm669, %v657, %v668
      %v671 = vsel %vm419, %v665, %v666
      %v672 = vsel %vm669, %v659, %v671
      %v673 = vsel %vm419, %v666, %v667
      %v674 = vsel %vm669, %v661, %v673
      %v675 = vsel %vm669, %v663, %v667
      %680 = vst [vmem:[#allocation2 + $0xe0] sm:$0xff] %v670
      %681 = vst [vmem:[#allocation2 + $0xe8] sm:$0xff] %v672
      %682 = vst [vmem:[#allocation2 + $0xf0] sm:$0xff] %v674
      %683 = vst.msk [vmem:[#allocation2 + $0xf8] sm:$0xf] %vm397, %v675
      %v684 = vld [vmem:[%s382] sm:$0xff]
      %v685 = vld [vmem:[%s382 + $0x8] sm:$0xff]
      %v686 = vld [vmem:[%s382 + $0x10] sm:$0xff]
      %v687 = vld [vmem:[%s382 + $0x18] sm:$0xff]
      %692 = vrot.lane.b32.xlu0 %v684, 92
      %v693 = vpop.permute.xlu0 %692
      %694 = vrot.lane.b32.xlu0 %v685, 92
      %v695 = vpop.permute.xlu0 %694
      %696 = vrot.lane.b32.xlu0 %v686, 92
      %v697 = vpop.permute.xlu0 %696
      %698 = vrot.lane.b32.xlu0 %v687, 92
      %v699 = vpop.permute.xlu0 %698
      %v700 = vrot.slane %v693, 4
      %v701 = vrot.slane %v695, 4
      %v702 = vrot.slane %v697, 4
      %v703 = vrot.slane %v699, 4
      %v704 = vsel %vm419, %v700, %v701
      %vm705 = vcmask 752640
      %v706 = vsel %vm705, %v693, %v704
      %v707 = vsel %vm419, %v701, %v702
      %v708 = vsel %vm705, %v695, %v707
      %v709 = vsel %vm419, %v702, %v703
      %v710 = vsel %vm705, %v697, %v709
      %v711 = vsel %vm705, %v699, %v703
      %716 = vst [vmem:[#allocation2 + $0xfc] sm:$0xff] %v706
      %717 = vst [vmem:[#allocation2 + $0x104] sm:$0xff] %v708
      %718 = vst [vmem:[#allocation2 + $0x10c] sm:$0xff] %v710
      %719 = vst.msk [vmem:[#allocation2 + $0x114] sm:$0xf] %vm397, %v711
      %v720 = vld [vmem:[%s382] sm:$0xff]
      %v721 = vld [vmem:[%s382 + $0x8] sm:$0xff]
      %v722 = vld [vmem:[%s382 + $0x10] sm:$0xff]
      %v723 = vld [vmem:[%s382 + $0x18] sm:$0xff]
      %728 = vrot.lane.b32.xlu0 %v720, 64
      %v729 = vpop.permute.xlu0 %728
      %730 = vrot.lane.b32.xlu0 %v721, 64
      %v731 = vpop.permute.xlu0 %730
      %732 = vrot.lane.b32.xlu0 %v722, 64
      %v733 = vpop.permute.xlu0 %732
      %734 = vrot.lane.b32.xlu0 %v723, 64
      %v735 = vpop.permute.xlu0 %734
      %v736 = vrot.slane %v729, 4
      %v737 = vrot.slane %v731, 4
      %v738 = vrot.slane %v733, 4
      %v739 = vrot.slane %v735, 4
      %v740 = vsel %vm419, %v736, %v737
      %vm741 = vcmask 523264
      %v742 = vsel %vm741, %v729, %v740
      %v743 = vsel %vm419, %v737, %v738
      %v744 = vsel %vm741, %v731, %v743
      %v745 = vsel %vm419, %v738, %v739
      %v746 = vsel %vm741, %v733, %v745
      %v747 = vsel %vm741, %v735, %v739
      %752 = vst [vmem:[#allocation2 + $0x118] sm:$0xff] %v742
      %753 = vst [vmem:[#allocation2 + $0x120] sm:$0xff] %v744
      %754 = vst [vmem:[#allocation2 + $0x128] sm:$0xff] %v746
      %755 = vst.msk [vmem:[#allocation2 + $0x130] sm:$0xf] %vm397, %v747
      %v756 = vld [vmem:[%s382] sm:$0xff]
      %v757 = vld [vmem:[%s382 + $0x8] sm:$0xff]
      %v758 = vld [vmem:[%s382 + $0x10] sm:$0xff]
      %v759 = vld [vmem:[%s382 + $0x18] sm:$0xff]
      %764 = vrot.lane.b32.xlu0 %v756, 63
      %v765 = vpop.permute.xlu0 %764
      %766 = vrot.lane.b32.xlu0 %v757, 63
      %v767 = vpop.permute.xlu0 %766
      %768 = vrot.lane.b32.xlu0 %v758, 63
      %v769 = vpop.permute.xlu0 %768
      %770 = vrot.lane.b32.xlu0 %v759, 63
      %v771 = vpop.permute.xlu0 %770
      %v772 = vrot.slane %v765, 4
      %v773 = vrot.slane %v767, 4
      %v774 = vrot.slane %v769, 4
      %v775 = vrot.slane %v771, 4
      %v776 = vsel %vm419, %v772, %v773
      %vm777 = vcmask 515072
      %v778 = vsel %vm777, %v765, %v776
      %v779 = vsel %vm419, %v773, %v774
      %v780 = vsel %vm777, %v767, %v779
      %v781 = vsel %vm419, %v774, %v775
      %v782 = vsel %vm777, %v769, %v781
      %v783 = vsel %vm777, %v771, %v775
      %788 = vst [vmem:[#allocation2 + $0x134] sm:$0xff] %v778
      %789 = vst [vmem:[#allocation2 + $0x13c] sm:$0xff] %v780
      %790 = vst [vmem:[#allocation2 + $0x144] sm:$0xff] %v782
      %791 = vst.msk [vmem:[#allocation2 + $0x14c] sm:$0xf] %vm397, %v783
      %v792 = vld [vmem:[%s382] sm:$0xff]
      %v793 = vld [vmem:[%s382 + $0x8] sm:$0xff]
      %v794 = vld [vmem:[%s382 + $0x10] sm:$0xff]
      %v795 = vld [vmem:[%s382 + $0x18] sm:$0xff]
      %800 = vrot.lane.b32.xlu0 %v792, 62
      %v801 = vpop.permute.xlu0 %800
      %802 = vrot.lane.b32.xlu0 %v793, 62
      %v803 = vpop.permute.xlu0 %802
      %804 = vrot.lane.b32.xlu0 %v794, 62
      %v805 = vpop.permute.xlu0 %804
      %806 = vrot.lane.b32.xlu0 %v795, 62
      %v807 = vpop.permute.xlu0 %806
      %v808 = vrot.slane %v801, 4
      %v809 = vrot.slane %v803, 4
      %v810 = vrot.slane %v805, 4
      %v811 = vrot.slane %v807, 4
      %v812 = vsel %vm419, %v808, %v809
      %vm813 = vcmask 506880
      %v814 = vsel %vm813, %v801, %v812
      %v815 = vsel %vm419, %v809, %v810
      %v816 = vsel %vm813, %v803, %v815
      %v817 = vsel %vm419, %v810, %v811
      %v818 = vsel %vm813, %v805, %v817
      %v819 = vsel %vm813, %v807, %v811
      %824 = vst [vmem:[#allocation2 + $0x150] sm:$0xff] %v814
      %825 = vst [vmem:[#allocation2 + $0x158] sm:$0xff] %v816
      %826 = vst [vmem:[#allocation2 + $0x160] sm:$0xff] %v818
      %827 = vst.msk [vmem:[#allocation2 + $0x168] sm:$0xf] %vm397, %v819
      %v828 = vld [vmem:[%s382] sm:$0xff]
      %v829 = vld [vmem:[%s382 + $0x8] sm:$0xff]
      %v830 = vld [vmem:[%s382 + $0x10] sm:$0xff]
      %v831 = vld [vmem:[%s382 + $0x18] sm:$0xff]
      %836 = vrot.lane.b32.xlu0 %v828, 61
      %v837 = vpop.permute.xlu0 %836
      %838 = vrot.lane.b32.xlu0 %v829, 61
      %v839 = vpop.permute.xlu0 %838
      %840 = vrot.lane.b32.xlu0 %v830, 61
      %v841 = vpop.permute.xlu0 %840
      %842 = vrot.lane.b32.xlu0 %v831, 61
      %v843 = vpop.permute.xlu0 %842
      %v844 = vrot.slane %v837, 4
      %v845 = vrot.slane %v839, 4
      %v846 = vrot.slane %v841, 4
      %v847 = vrot.slane %v843, 4
      %v848 = vsel %vm419, %v844, %v845
      %vm849 = vcmask 498688
      %v850 = vsel %vm849, %v837, %v848
      %v851 = vsel %vm419, %v845, %v846
      %v852 = vsel %vm849, %v839, %v851
      %v853 = vsel %vm419, %v846, %v847
      %v854 = vsel %vm849, %v841, %v853
      %v855 = vsel %vm849, %v843, %v847
      %860 = vst [vmem:[#allocation2 + $0x16c] sm:$0xff] %v850
      %861 = vst [vmem:[#allocation2 + $0x174] sm:$0xff] %v852
      %862 = vst [vmem:[#allocation2 + $0x17c] sm:$0xff] %v854
      %863 = vst.msk [vmem:[#allocation2 + $0x184] sm:$0xf] %vm397, %v855
      %v864 = vld [vmem:[%s382] sm:$0xff]
      %v865 = vld [vmem:[%s382 + $0x8] sm:$0xff]
      %v866 = vld [vmem:[%s382 + $0x10] sm:$0xff]
      %v867 = vld [vmem:[%s382 + $0x18] sm:$0xff]
      %872 = vrot.lane.b32.xlu0 %v864, 60
      %v873 = vpop.permute.xlu0 %872
      %874 = vrot.lane.b32.xlu0 %v865, 60
      %v875 = vpop.permute.xlu0 %874
      %876 = vrot.lane.b32.xlu0 %v866, 60
      %v877 = vpop.permute.xlu0 %876
      %878 = vrot.lane.b32.xlu0 %v867, 60
      %v879 = vpop.permute.xlu0 %878
      %v880 = vrot.slane %v873, 4
      %v881 = vrot.slane %v875, 4
      %v882 = vrot.slane %v877, 4
      %v883 = vrot.slane %v879, 4
      %v884 = vsel %vm419, %v880, %v881
      %vm885 = vcmask 490496
      %v886 = vsel %vm885, %v873, %v884
      %v887 = vsel %vm419, %v881, %v882
      %v888 = vsel %vm885, %v875, %v887
      %v889 = vsel %vm419, %v882, %v883
      %v890 = vsel %vm885, %v877, %v889
      %v891 = vsel %vm885, %v879, %v883
      %896 = vst [vmem:[#allocation2 + $0x188] sm:$0xff] %v886
      %897 = vst [vmem:[#allocation2 + $0x190] sm:$0xff] %v888
      %898 = vst [vmem:[#allocation2 + $0x198] sm:$0xff] %v890
      %899 = vst.msk [vmem:[#allocation2 + $0x1a0] sm:$0xf] %vm397, %v891
      %v900 = vld [vmem:[%s382] sm:$0xff]
      %v901 = vld [vmem:[%s382 + $0x8] sm:$0xff]
      %v902 = vld [vmem:[%s382 + $0x10] sm:$0xff]
      %v903 = vld [vmem:[%s382 + $0x18] sm:$0xff]
      %908 = vrot.lane.b32.xlu0 %v900, 32
      %v909 = vpop.permute.xlu0 %908
      %910 = vrot.lane.b32.xlu0 %v901, 32
      %v911 = vpop.permute.xlu0 %910
      %912 = vrot.lane.b32.xlu0 %v902, 32
      %v913 = vpop.permute.xlu0 %912
      %914 = vrot.lane.b32.xlu0 %v903, 32
      %v915 = vpop.permute.xlu0 %914
      %v916 = vrot.slane %v909, 4
      %v917 = vrot.slane %v911, 4
      %v918 = vrot.slane %v913, 4
      %v919 = vrot.slane %v915, 4
      %v920 = vsel %vm419, %v916, %v917
      %vm921 = vcmask 261120
      %v922 = vsel %vm921, %v909, %v920
      %v923 = vsel %vm419, %v917, %v918
      %v924 = vsel %vm921, %v911, %v923
      %v925 = vsel %vm419, %v918, %v919
      %v926 = vsel %vm921, %v913, %v925
      %v927 = vsel %vm921, %v915, %v919
      %932 = vst [vmem:[#allocation2 + $0x1a4] sm:$0xff] %v922
      %933 = vst [vmem:[#allocation2 + $0x1ac] sm:$0xff] %v924
      %934 = vst [vmem:[#allocation2 + $0x1b4] sm:$0xff] %v926
      %935 = vst.msk [vmem:[#allocation2 + $0x1bc] sm:$0xf] %vm397, %v927
      %v936 = vld [vmem:[%s382] sm:$0xff]
      %v937 = vld [vmem:[%s382 + $0x8] sm:$0xff]
      %v938 = vld [vmem:[%s382 + $0x10] sm:$0xff]
      %v939 = vld [vmem:[%s382 + $0x18] sm:$0xff]
      %944 = vrot.lane.b32.xlu0 %v936, 31
      %v945 = vpop.permute.xlu0 %944
      %946 = vrot.lane.b32.xlu0 %v937, 31
      %v947 = vpop.permute.xlu0 %946
      %948 = vrot.lane.b32.xlu0 %v938, 31
      %v949 = vpop.permute.xlu0 %948
      %950 = vrot.lane.b32.xlu0 %v939, 31
      %v951 = vpop.permute.xlu0 %950
      %v952 = vrot.slane %v945, 4
      %v953 = vrot.slane %v947, 4
      %v954 = vrot.slane %v949, 4
      %v955 = vrot.slane %v951, 4
      %v956 = vsel %vm419, %v952, %v953
      %vm957 = vcmask 252928
      %v958 = vsel %vm957, %v945, %v956
      %v959 = vsel %vm419, %v953, %v954
      %v960 = vsel %vm957, %v947, %v959
      %v961 = vsel %vm419, %v954, %v955
      %v962 = vsel %vm957, %v949, %v961
      %v963 = vsel %vm957, %v951, %v955
      %968 = vst [vmem:[#allocation2 + $0x1c0] sm:$0xff] %v958
      %969 = vst [vmem:[#allocation2 + $0x1c8] sm:$0xff] %v960
      %970 = vst [vmem:[#allocation2 + $0x1d0] sm:$0xff] %v962
      %971 = vst.msk [vmem:[#allocation2 + $0x1d8] sm:$0xf] %vm397, %v963
      %v972 = vld [vmem:[%s382] sm:$0xff]
      %v973 = vld [vmem:[%s382 + $0x8] sm:$0xff]
      %v974 = vld [vmem:[%s382 + $0x10] sm:$0xff]
      %v975 = vld [vmem:[%s382 + $0x18] sm:$0xff]
      %980 = vrot.lane.b32.xlu0 %v972, 30
      %v981 = vpop.permute.xlu0 %980
      %982 = vrot.lane.b32.xlu0 %v973, 30
      %v983 = vpop.permute.xlu0 %982
      %984 = vrot.lane.b32.xlu0 %v974, 30
      %v985 = vpop.permute.xlu0 %984
      %986 = vrot.lane.b32.xlu0 %v975, 30
      %v987 = vpop.permute.xlu0 %986
      %v988 = vrot.slane %v981, 4
      %v989 = vrot.slane %v983, 4
      %v990 = vrot.slane %v985, 4
      %v991 = vrot.slane %v987, 4
      %v992 = vsel %vm419, %v988, %v989
      %vm993 = vcmask 244736
      %v994 = vsel %vm993, %v981, %v992
      %v995 = vsel %vm419, %v989, %v990
      %v996 = vsel %vm993, %v983, %v995
      %v997 = vsel %vm419, %v990, %v991
      %v998 = vsel %vm993, %v985, %v997
      %v999 = vsel %vm993, %v987, %v991
      %1004 = vst [vmem:[#allocation2 + $0x1dc] sm:$0xff] %v994
      %1005 = vst [vmem:[#allocation2 + $0x1e4] sm:$0xff] %v996
      %1006 = vst [vmem:[#allocation2 + $0x1ec] sm:$0xff] %v998
      %1007 = vst.msk [vmem:[#allocation2 + $0x1f4] sm:$0xf] %vm397, %v999
      %v1008 = vld [vmem:[%s382] sm:$0xff]
      %v1009 = vld [vmem:[%s382 + $0x8] sm:$0xff]
      %v1010 = vld [vmem:[%s382 + $0x10] sm:$0xff]
      %v1011 = vld [vmem:[%s382 + $0x18] sm:$0xff]
      %1016 = vrot.lane.b32.xlu0 %v1008, 29
      %v1017 = vpop.permute.xlu0 %1016
      %1018 = vrot.lane.b32.xlu0 %v1009, 29
      %v1019 = vpop.permute.xlu0 %1018
      %1020 = vrot.lane.b32.xlu0 %v1010, 29
      %v1021 = vpop.permute.xlu0 %1020
      %1022 = vrot.lane.b32.xlu0 %v1011, 29
      %v1023 = vpop.permute.xlu0 %1022
      %v1024 = vrot.slane %v1017, 4
      %v1025 = vrot.slane %v1019, 4
      %v1026 = vrot.slane %v1021, 4
      %v1027 = vrot.slane %v1023, 4
      %v1028 = vsel %vm419, %v1024, %v1025
      %vm1029 = vcmask 236544
      %v1030 = vsel %vm1029, %v1017, %v1028
      %v1031 = vsel %vm419, %v1025, %v1026
      %v1032 = vsel %vm1029, %v1019, %v1031
      %v1033 = vsel %vm419, %v1026, %v1027
      %v1034 = vsel %vm1029, %v1021, %v1033
      %v1035 = vsel %vm1029, %v1023, %v1027
      %1040 = vst [vmem:[#allocation2 + $0x1f8] sm:$0xff] %v1030
      %1041 = vst [vmem:[#allocation2 + $0x200] sm:$0xff] %v1032
      %1042 = vst [vmem:[#allocation2 + $0x208] sm:$0xff] %v1034
      %1043 = vst.msk [vmem:[#allocation2 + $0x210] sm:$0xf] %vm397, %v1035
      %v1044 = vld [vmem:[%s382] sm:$0xff]
      %v1045 = vld [vmem:[%s382 + $0x8] sm:$0xff]
      %v1046 = vld [vmem:[%s382 + $0x10] sm:$0xff]
      %v1047 = vld [vmem:[%s382 + $0x18] sm:$0xff]
      %1052 = vrot.lane.b32.xlu0 %v1044, 28
      %v1053 = vpop.permute.xlu0 %1052
      %1054 = vrot.lane.b32.xlu0 %v1045, 28
      %v1055 = vpop.permute.xlu0 %1054
      %1056 = vrot.lane.b32.xlu0 %v1046, 28
      %v1057 = vpop.permute.xlu0 %1056
      %1058 = vrot.lane.b32.xlu0 %v1047, 28
      %v1059 = vpop.permute.xlu0 %1058
      %v1060 = vrot.slane %v1053, 4
      %v1061 = vrot.slane %v1055, 4
      %v1062 = vrot.slane %v1057, 4
      %v1063 = vrot.slane %v1059, 4
      %v1064 = vsel %vm419, %v1060, %v1061
      %vm1065 = vcmask 228352
      %v1066 = vsel %vm1065, %v1053, %v1064
      %v1067 = vsel %vm419, %v1061, %v1062
      %v1068 = vsel %vm1065, %v1055, %v1067
      %v1069 = vsel %vm419, %v1062, %v1063
      %v1070 = vsel %vm1065, %v1057, %v1069
      %v1071 = vsel %vm1065, %v1059, %v1063
      %1076 = vst [vmem:[#allocation2 + $0x214] sm:$0xff] %v1066
      %1077 = vst [vmem:[#allocation2 + $0x21c] sm:$0xff] %v1068
      %1078 = vst [vmem:[#allocation2 + $0x224] sm:$0xff] %v1070
      %1079 = vst.msk [vmem:[#allocation2 + $0x22c] sm:$0xf] %vm397, %v1071
      %v1080 = vld [vmem:[%s382 + $0x4] sm:$0xff]
      %v1081 = vld [vmem:[%s382 + $0xc] sm:$0xff]
      %v1082 = vld [vmem:[%s382 + $0x14] sm:$0xff]
      %v1083 = vld [vmem:[%s382 + $0x1c] sm:$0xf]
      %1084 = vst [vmem:[#allocation2 + $0x230] sm:$0xff] %v1080
      %1085 = vst [vmem:[#allocation2 + $0x238] sm:$0xff] %v1081
      %1086 = vst [vmem:[#allocation2 + $0x240] sm:$0xff] %v1082
      %1087 = vst.msk [vmem:[#allocation2 + $0x248] sm:$0xf] %vm397, %v1083
      %v1088 = vld [vmem:[%s382 + $0x4] sm:$0xff]
      %v1089 = vld [vmem:[%s382 + $0xc] sm:$0xff]
      %v1090 = vld [vmem:[%s382 + $0x14] sm:$0xff]
      %v1091 = vld [vmem:[%s382 + $0x1c] sm:$0xf]
      %1096 = vrot.lane.b32.xlu0 %v1088, 127
      %v1097 = vpop.permute.xlu0 %1096
      %1098 = vrot.lane.b32.xlu0 %v1089, 127
      %v1099 = vpop.permute.xlu0 %1098
      %1100 = vrot.lane.b32.xlu0 %v1090, 127
      %v1101 = vpop.permute.xlu0 %1100
      %1102 = vrot.lane.b32.xlu0 %v1091, 127
      %v1103 = vpop.permute.xlu0 %1102
      %v1104 = vrot.slane %v1097, 4
      %v1105 = vrot.slane %v1099, 4
      %v1106 = vrot.slane %v1101, 4
      %v1107 = vrot.slane %v1103, 4
      %v1108 = vsel %vm419, %v1104, %v1105
      %v1109 = vsel %vm421, %v1097, %v1108
      %v1110 = vsel %vm419, %v1105, %v1106
      %v1111 = vsel %vm421, %v1099, %v1110
      %v1112 = vsel %vm419, %v1106, %v1107
      %v1113 = vsel %vm421, %v1101, %v1112
      %1118 = vst [vmem:[#allocation2 + $0x24c] sm:$0xff] %v1109
      %1119 = vst [vmem:[#allocation2 + $0x254] sm:$0xff] %v1111
      %1120 = vst [vmem:[#allocation2 + $0x25c] sm:$0xff] %v1113
      %1121 = vst.msk [vmem:[#allocation2 + $0x264] sm:$0xf] %vm397, %v1103
      %v1122 = vld [vmem:[%s382 + $0x4] sm:$0xff]
      %v1123 = vld [vmem:[%s382 + $0xc] sm:$0xff]
      %v1124 = vld [vmem:[%s382 + $0x14] sm:$0xff]
      %v1125 = vld [vmem:[%s382 + $0x1c] sm:$0xf]
      %1130 = vrot.lane.b32.xlu0 %v1122, 126
      %v1131 = vpop.permute.xlu0 %1130
      %1132 = vrot.lane.b32.xlu0 %v1123, 126
      %v1133 = vpop.permute.xlu0 %1132
      %1134 = vrot.lane.b32.xlu0 %v1124, 126
      %v1135 = vpop.permute.xlu0 %1134
      %1136 = vrot.lane.b32.xlu0 %v1125, 126
      %v1137 = vpop.permute.xlu0 %1136
      %v1138 = vrot.slane %v1131, 4
      %v1139 = vrot.slane %v1133, 4
      %v1140 = vrot.slane %v1135, 4
      %v1141 = vrot.slane %v1137, 4
      %v1142 = vsel %vm419, %v1138, %v1139
      %v1143 = vsel %vm456, %v1131, %v1142
      %v1144 = vsel %vm419, %v1139, %v1140
      %v1145 = vsel %vm456, %v1133, %v1144
      %v1146 = vsel %vm419, %v1140, %v1141
      %v1147 = vsel %vm456, %v1135, %v1146
      %1152 = vst [vmem:[#allocation2 + $0x268] sm:$0xff] %v1143
      %1153 = vst [vmem:[#allocation2 + $0x270] sm:$0xff] %v1145
      %1154 = vst [vmem:[#allocation2 + $0x278] sm:$0xff] %v1147
      %1155 = vst.msk [vmem:[#allocation2 + $0x280] sm:$0xf] %vm397, %v1137
      %v1156 = vld [vmem:[%s382 + $0x4] sm:$0xff]
      %v1157 = vld [vmem:[%s382 + $0xc] sm:$0xff]
      %v1158 = vld [vmem:[%s382 + $0x14] sm:$0xff]
      %v1159 = vld [vmem:[%s382 + $0x1c] sm:$0xf]
      %1164 = vrot.lane.b32.xlu0 %v1156, 125
      %v1165 = vpop.permute.xlu0 %1164
      %1166 = vrot.lane.b32.xlu0 %v1157, 125
      %v1167 = vpop.permute.xlu0 %1166
      %1168 = vrot.lane.b32.xlu0 %v1158, 125
      %v1169 = vpop.permute.xlu0 %1168
      %1170 = vrot.lane.b32.xlu0 %v1159, 125
      %v1171 = vpop.permute.xlu0 %1170
      %v1172 = vrot.slane %v1165, 4
      %v1173 = vrot.slane %v1167, 4
      %v1174 = vrot.slane %v1169, 4
      %v1175 = vrot.slane %v1171, 4
      %v1176 = vsel %vm419, %v1172, %v1173
      %v1177 = vsel %vm491, %v1165, %v1176
      %v1178 = vsel %vm419, %v1173, %v1174
      %v1179 = vsel %vm491, %v1167, %v1178
      %v1180 = vsel %vm419, %v1174, %v1175
      %v1181 = vsel %vm491, %v1169, %v1180
      %1186 = vst [vmem:[#allocation2 + $0x284] sm:$0xff] %v1177
      %1187 = vst [vmem:[#allocation2 + $0x28c] sm:$0xff] %v1179
      %1188 = vst [vmem:[#allocation2 + $0x294] sm:$0xff] %v1181
      %1189 = vst.msk [vmem:[#allocation2 + $0x29c] sm:$0xf] %vm397, %v1171
      %v1190 = vld [vmem:[%s382 + $0x4] sm:$0xff]
      %v1191 = vld [vmem:[%s382 + $0xc] sm:$0xff]
      %v1192 = vld [vmem:[%s382 + $0x14] sm:$0xff]
      %v1193 = vld [vmem:[%s382 + $0x1c] sm:$0xf]
      %1198 = vrot.lane.b32.xlu0 %v1190, 124
      %v1199 = vpop.permute.xlu0 %1198
      %1200 = vrot.lane.b32.xlu0 %v1191, 124
      %v1201 = vpop.permute.xlu0 %1200
      %1202 = vrot.lane.b32.xlu0 %v1192, 124
      %v1203 = vpop.permute.xlu0 %1202
      %1204 = vrot.lane.b32.xlu0 %v1193, 124
      %v1205 = vpop.permute.xlu0 %1204
      %v1206 = vrot.slane %v1199, 4
      %v1207 = vrot.slane %v1201, 4
      %v1208 = vrot.slane %v1203, 4
      %v1209 = vrot.slane %v1205, 4
      %v1210 = vsel %vm419, %v1206, %v1207
      %v1211 = vsel %vm526, %v1199, %v1210
      %v1212 = vsel %vm419, %v1207, %v1208
      %v1213 = vsel %vm526, %v1201, %v1212
      %v1214 = vsel %vm419, %v1208, %v1209
      %v1215 = vsel %vm526, %v1203, %v1214
      %1220 = vst [vmem:[#allocation2 + $0x2a0] sm:$0xff] %v1211
      %1221 = vst [vmem:[#allocation2 + $0x2a8] sm:$0xff] %v1213
      %1222 = vst [vmem:[#allocation2 + $0x2b0] sm:$0xff] %v1215
      %1223 = vst.msk [vmem:[#allocation2 + $0x2b8] sm:$0xf] %vm397, %v1205
      %v1224 = vld [vmem:[%s1] sm:$0xff]
      %v1225 = vld [vmem:[#allocation2] sm:$0xff]
      %v1226 = vld [vmem:[#allocation2 + $0x8] sm:$0xff]
      %v1227 = vld [vmem:[#allocation2 + $0x10] sm:$0xff]
      %v1228 = vld [vmem:[#allocation2 + $0x18] sm:$0xf]
      %v1229 = vld [vmem:[#allocation2 + $0x1c] sm:$0xff]
      %v1230 = vld [vmem:[#allocation2 + $0x24] sm:$0xff]
      %v1231 = vld [vmem:[#allocation2 + $0x2c] sm:$0xff]
      %v1232 = vld [vmem:[#allocation2 + $0x34] sm:$0xf]
      %v1233 = vld [vmem:[#allocation2 + $0x38] sm:$0xff]
      %v1234 = vld [vmem:[#allocation2 + $0x40] sm:$0xff]
      %v1235 = vld [vmem:[#allocation2 + $0x48] sm:$0xff]
      %v1236 = vld [vmem:[#allocation2 + $0x50] sm:$0xf]
      %v1237 = vld [vmem:[#allocation2 + $0x54] sm:$0xff]
      %v1238 = vld [vmem:[#allocation2 + $0x5c] sm:$0xff]
      %v1239 = vld [vmem:[#allocation2 + $0x64] sm:$0xff]
      %v1240 = vld [vmem:[#allocation2 + $0x6c] sm:$0xf]
      %v1241 = vld [vmem:[#allocation2 + $0x70] sm:$0xff]
      %v1242 = vld [vmem:[#allocation2 + $0x78] sm:$0xff]
      %v1243 = vld [vmem:[#allocation2 + $0x80] sm:$0xff]
      %v1244 = vld [vmem:[#allocation2 + $0x88] sm:$0xf]
      %v1245 = vld [vmem:[#allocation2 + $0x8c] sm:$0xff]
      %v1246 = vld [vmem:[#allocation2 + $0x94] sm:$0xff]
      %v1247 = vld [vmem:[#allocation2 + $0x9c] sm:$0xff]
      %v1248 = vld [vmem:[#allocation2 + $0xa4] sm:$0xf]
      %v1249 = vld [vmem:[#allocation2 + $0xa8] sm:$0xff]
      %v1250 = vld [vmem:[#allocation2 + $0xb0] sm:$0xff]
      %v1251 = vld [vmem:[#allocation2 + $0xb8] sm:$0xff]
      %v1252 = vld [vmem:[#allocation2 + $0xc0] sm:$0xf]
      %v1253 = vld [vmem:[#allocation2 + $0xc4] sm:$0xff]
      %v1254 = vld [vmem:[#allocation2 + $0xcc] sm:$0xff]
      %v1255 = vld [vmem:[#allocation2 + $0xd4] sm:$0xff]
      %v1256 = vld [vmem:[#allocation2 + $0xdc] sm:$0xf]
      %v1257 = vld [vmem:[#allocation2 + $0xe0] sm:$0xff]
      %v1258 = vld [vmem:[#allocation2 + $0xe8] sm:$0xff]
      %v1259 = vld [vmem:[#allocation2 + $0xf0] sm:$0xff]
      %v1260 = vld [vmem:[#allocation2 + $0xf8] sm:$0xf]
      %v1261 = vld [vmem:[#allocation2 + $0xfc] sm:$0xff]
      %v1262 = vld [vmem:[#allocation2 + $0x104] sm:$0xff]
      %v1263 = vld [vmem:[#allocation2 + $0x10c] sm:$0xff]
      %v1264 = vld [vmem:[#allocation2 + $0x114] sm:$0xf]
      %v1265 = vld [vmem:[#allocation2 + $0x118] sm:$0xff]
      %v1266 = vld [vmem:[#allocation2 + $0x120] sm:$0xff]
      %v1267 = vld [vmem:[#allocation2 + $0x128] sm:$0xff]
      %v1268 = vld [vmem:[#allocation2 + $0x130] sm:$0xf]
      %v1269 = vld [vmem:[#allocation2 + $0x134] sm:$0xff]
      %v1270 = vld [vmem:[#allocation2 + $0x13c] sm:$0xff]
      %v1271 = vld [vmem:[#allocation2 + $0x144] sm:$0xff]
      %v1272 = vld [vmem:[#allocation2 + $0x14c] sm:$0xf]
      %v1273 = vld [vmem:[#allocation2 + $0x150] sm:$0xff]
      %v1274 = vld [vmem:[#allocation2 + $0x158] sm:$0xff]
      %v1275 = vld [vmem:[#allocation2 + $0x160] sm:$0xff]
      %v1276 = vld [vmem:[#allocation2 + $0x168] sm:$0xf]
      %v1277 = vld [vmem:[#allocation2 + $0x16c] sm:$0xff]
      %v1278 = vld [vmem:[#allocation2 + $0x174] sm:$0xff]
      %v1279 = vld [vmem:[#allocation2 + $0x17c] sm:$0xff]
      %v1280 = vld [vmem:[#allocation2 + $0x184] sm:$0xf]
      %v1281 = vld [vmem:[#allocation2 + $0x188] sm:$0xff]
      %v1282 = vld [vmem:[#allocation2 + $0x190] sm:$0xff]
      %v1283 = vld [vmem:[#allocation2 + $0x198] sm:$0xff]
      %v1284 = vld [vmem:[#allocation2 + $0x1a0] sm:$0xf]
      %v1285 = vld [vmem:[#allocation2 + $0x1a4] sm:$0xff]
      %v1286 = vld [vmem:[#allocation2 + $0x1ac] sm:$0xff]
      %v1287 = vld [vmem:[#allocation2 + $0x1b4] sm:$0xff]
      %v1288 = vld [vmem:[#allocation2 + $0x1bc] sm:$0xf]
      %v1289 = vld [vmem:[#allocation2 + $0x1c0] sm:$0xff]
      %v1290 = vld [vmem:[#allocation2 + $0x1c8] sm:$0xff]
      %v1291 = vld [vmem:[#allocation2 + $0x1d0] sm:$0xff]
      %v1292 = vld [vmem:[#allocation2 + $0x1d8] sm:$0xf]
      %v1293 = vld [vmem:[#allocation2 + $0x1dc] sm:$0xff]
      %v1294 = vld [vmem:[#allocation2 + $0x1e4] sm:$0xff]
      %v1295 = vld [vmem:[#allocation2 + $0x1ec] sm:$0xff]
      %v1296 = vld [vmem:[#allocation2 + $0x1f4] sm:$0xf]
      %v1297 = vld [vmem:[#allocation2 + $0x1f8] sm:$0xff]
      %v1298 = vld [vmem:[#allocation2 + $0x200] sm:$0xff]
      %v1299 = vld [vmem:[#allocation2 + $0x208] sm:$0xff]
      %v1300 = vld [vmem:[#allocation2 + $0x210] sm:$0xf]
      %v1301 = vld [vmem:[#allocation2 + $0x214] sm:$0xff]
      %v1302 = vld [vmem:[#allocation2 + $0x21c] sm:$0xff]
      %v1303 = vld [vmem:[#allocation2 + $0x224] sm:$0xff]
      %v1304 = vld [vmem:[#allocation2 + $0x22c] sm:$0xf]
      %v1305 = vld [vmem:[#allocation2 + $0x230] sm:$0xff]
      %v1306 = vld [vmem:[#allocation2 + $0x238] sm:$0xff]
      %v1307 = vld [vmem:[#allocation2 + $0x240] sm:$0xff]
      %v1308 = vld [vmem:[#allocation2 + $0x248] sm:$0xf]
      %v1309 = vld [vmem:[#allocation2 + $0x24c] sm:$0xff]
      %v1310 = vld [vmem:[#allocation2 + $0x254] sm:$0xff]
      %v1311 = vld [vmem:[#allocation2 + $0x25c] sm:$0xff]
      %v1312 = vld [vmem:[#allocation2 + $0x264] sm:$0xf]
      %v1313 = vld [vmem:[#allocation2 + $0x268] sm:$0xff]
      %v1314 = vld [vmem:[#allocation2 + $0x270] sm:$0xff]
      %v1315 = vld [vmem:[#allocation2 + $0x278] sm:$0xff]
      %v1316 = vld [vmem:[#allocation2 + $0x280] sm:$0xf]
      %v1317 = vld [vmem:[#allocation2 + $0x284] sm:$0xff]
      %v1318 = vld [vmem:[#allocation2 + $0x28c] sm:$0xff]
      %v1319 = vld [vmem:[#allocation2 + $0x294] sm:$0xff]
      %v1320 = vld [vmem:[#allocation2 + $0x29c] sm:$0xf]
      %v1321 = vld [vmem:[#allocation2 + $0x2a0] sm:$0xff]
      %v1322 = vld [vmem:[#allocation2 + $0x2a8] sm:$0xff]
      %v1323 = vld [vmem:[#allocation2 + $0x2b0] sm:$0xff]
      %v1324 = vld [vmem:[#allocation2 + $0x2b8] sm:$0xf]
      %v1325 = vld [vmem:[%s2] sm:$0xff]
      %1327 = vset.pattern.permute.xlu0 0
      %1328 = vperm.xlu0 %1327, %v1325
      %v1329 = vpop.permute.xlu0 %1328
      %v1332 = vunpack.c.l.b16 %v1224
      %v1333 = vunpack.c.h.b16 %v1224
      %v1334 = vpack.c.b16 %v1332, %v1332
      %v1335 = vpack.c.b16 %v1333, %v1333
      %v1437 = vunpack.c.l.b16 %v1225
      %v1438 = vunpack.c.h.b16 %v1225
      %v1439 = vunpack.c.l.b16 %v1226
      %v1440 = vunpack.c.h.b16 %v1226
      %v1441 = vunpack.c.l.b16 %v1227
      %v1442 = vunpack.c.h.b16 %v1227
      %v1443 = vunpack.c.l.b16 %v1228
      %v1444 = vunpack.c.l.b16 %v1229
      %v1445 = vunpack.c.h.b16 %v1229
      %v1446 = vunpack.c.l.b16 %v1230
      %v1447 = vunpack.c.h.b16 %v1230
      %v1448 = vunpack.c.l.b16 %v1231
      %v1449 = vunpack.c.h.b16 %v1231
      %v1450 = vunpack.c.l.b16 %v1232
      %v1451 = vunpack.c.l.b16 %v1233
      %v1452 = vunpack.c.h.b16 %v1233
      %v1453 = vunpack.c.l.b16 %v1234
      %v1454 = vunpack.c.h.b16 %v1234
      %v1455 = vunpack.c.l.b16 %v1235
      %v1456 = vunpack.c.h.b16 %v1235
      %v1457 = vunpack.c.l.b16 %v1236
      %v1458 = vunpack.c.l.b16 %v1237
      %v1459 = vunpack.c.h.b16 %v1237
      %v1460 = vunpack.c.l.b16 %v1238
      %v1461 = vunpack.c.h.b16 %v1238
      %v1462 = vunpack.c.l.b16 %v1239
      %v1463 = vunpack.c.h.b16 %v1239
      %v1464 = vunpack.c.l.b16 %v1240
      %v1465 = vunpack.c.l.b16 %v1241
      %v1466 = vunpack.c.h.b16 %v1241
      %v1467 = vunpack.c.l.b16 %v1242
      %v1468 = vunpack.c.h.b16 %v1242
      %v1469 = vunpack.c.l.b16 %v1243
      %v1470 = vunpack.c.h.b16 %v1243
      %v1471 = vunpack.c.l.b16 %v1244
      %v1472 = vunpack.c.l.b16 %v1245
      %v1473 = vunpack.c.h.b16 %v1245
      %v1474 = vunpack.c.l.b16 %v1246
      %v1475 = vunpack.c.h.b16 %v1246
      %v1476 = vunpack.c.l.b16 %v1247
      %v1477 = vunpack.c.h.b16 %v1247
      %v1478 = vunpack.c.l.b16 %v1248
      %v1479 = vunpack.c.l.b16 %v1249
      %v1480 = vunpack.c.h.b16 %v1249
      %v1481 = vunpack.c.l.b16 %v1250
      %v1482 = vunpack.c.h.b16 %v1250
      %v1483 = vunpack.c.l.b16 %v1251
      %v1484 = vunpack.c.h.b16 %v1251
      %v1485 = vunpack.c.l.b16 %v1252
      %v1486 = vunpack.c.l.b16 %v1253
      %v1487 = vunpack.c.h.b16 %v1253
      %v1488 = vunpack.c.l.b16 %v1254
      %v1489 = vunpack.c.h.b16 %v1254
      %v1490 = vunpack.c.l.b16 %v1255
      %v1491 = vunpack.c.h.b16 %v1255
      %v1492 = vunpack.c.l.b16 %v1256
      %v1493 = vunpack.c.l.b16 %v1257
      %v1494 = vunpack.c.h.b16 %v1257
      %v1495 = vunpack.c.l.b16 %v1258
      %v1496 = vunpack.c.h.b16 %v1258
      %v1497 = vunpack.c.l.b16 %v1259
      %v1498 = vunpack.c.h.b16 %v1259
      %v1499 = vunpack.c.l.b16 %v1260
      %v1500 = vunpack.c.l.b16 %v1261
      %v1501 = vunpack.c.h.b16 %v1261
      %v1502 = vunpack.c.l.b16 %v1262
      %v1503 = vunpack.c.h.b16 %v1262
      %v1504 = vunpack.c.l.b16 %v1263
      %v1505 = vunpack.c.h.b16 %v1263
      %v1506 = vunpack.c.l.b16 %v1264
      %v1507 = vunpack.c.l.b16 %v1265
      %v1508 = vunpack.c.h.b16 %v1265
      %v1509 = vunpack.c.l.b16 %v1266
      %v1510 = vunpack.c.h.b16 %v1266
      %v1511 = vunpack.c.l.b16 %v1267
      %v1512 = vunpack.c.h.b16 %v1267
      %v1513 = vunpack.c.l.b16 %v1268
      %v1514 = vunpack.c.l.b16 %v1269
      %v1515 = vunpack.c.h.b16 %v1269
      %v1516 = vunpack.c.l.b16 %v1270
      %v1517 = vunpack.c.h.b16 %v1270
      %v1518 = vunpack.c.l.b16 %v1271
      %v1519 = vunpack.c.h.b16 %v1271
      %v1520 = vunpack.c.l.b16 %v1272
      %v1521 = vunpack.c.l.b16 %v1273
      %v1522 = vunpack.c.h.b16 %v1273
      %v1523 = vunpack.c.l.b16 %v1274
      %v1524 = vunpack.c.h.b16 %v1274
      %v1525 = vunpack.c.l.b16 %v1275
      %v1526 = vunpack.c.h.b16 %v1275
      %v1527 = vunpack.c.l.b16 %v1276
      %v1528 = vunpack.c.l.b16 %v1277
      %v1529 = vunpack.c.h.b16 %v1277
      %v1530 = vunpack.c.l.b16 %v1278
      %v1531 = vunpack.c.h.b16 %v1278
      %v1532 = vunpack.c.l.b16 %v1279
      %v1533 = vunpack.c.h.b16 %v1279
      %v1534 = vunpack.c.l.b16 %v1280
      %v1535 = vunpack.c.l.b16 %v1281
      %v1536 = vunpack.c.h.b16 %v1281
      %v1537 = vunpack.c.l.b16 %v1282
      %v1538 = vunpack.c.h.b16 %v1282
      %v1539 = vunpack.c.l.b16 %v1283
      %v1540 = vunpack.c.h.b16 %v1283
      %v1541 = vunpack.c.l.b16 %v1284
      %v1542 = vunpack.c.l.b16 %v1285
      %v1543 = vunpack.c.h.b16 %v1285
      %v1544 = vunpack.c.l.b16 %v1286
      %v1545 = vunpack.c.h.b16 %v1286
      %v1546 = vunpack.c.l.b16 %v1287
      %v1547 = vunpack.c.h.b16 %v1287
      %v1548 = vunpack.c.l.b16 %v1288
      %v1549 = vunpack.c.l.b16 %v1289
      %v1550 = vunpack.c.h.b16 %v1289
      %v1551 = vunpack.c.l.b16 %v1290
      %v1552 = vunpack.c.h.b16 %v1290
      %v1553 = vunpack.c.l.b16 %v1291
      %v1554 = vunpack.c.h.b16 %v1291
      %v1555 = vunpack.c.l.b16 %v1292
      %v1556 = vunpack.c.l.b16 %v1293
      %v1557 = vunpack.c.h.b16 %v1293
      %v1558 = vunpack.c.l.b16 %v1294
      %v1559 = vunpack.c.h.b16 %v1294
      %v1560 = vunpack.c.l.b16 %v1295
      %v1561 = vunpack.c.h.b16 %v1295
      %v1562 = vunpack.c.l.b16 %v1296
      %v1563 = vunpack.c.l.b16 %v1297
      %v1564 = vunpack.c.h.b16 %v1297
      %v1565 = vunpack.c.l.b16 %v1298
      %v1566 = vunpack.c.h.b16 %v1298
      %v1567 = vunpack.c.l.b16 %v1299
      %v1568 = vunpack.c.h.b16 %v1299
      %v1569 = vunpack.c.l.b16 %v1300
      %v1570 = vunpack.c.l.b16 %v1301
      %v1571 = vunpack.c.h.b16 %v1301
      %v1572 = vunpack.c.l.b16 %v1302
      %v1573 = vunpack.c.h.b16 %v1302
      %v1574 = vunpack.c.l.b16 %v1303
      %v1575 = vunpack.c.h.b16 %v1303
      %v1576 = vunpack.c.l.b16 %v1304
      %v1577 = vunpack.c.l.b16 %v1305
      %v1578 = vunpack.c.h.b16 %v1305
      %v1579 = vunpack.c.l.b16 %v1306
      %v1580 = vunpack.c.h.b16 %v1306
      %v1581 = vunpack.c.l.b16 %v1307
      %v1582 = vunpack.c.h.b16 %v1307
      %v1583 = vunpack.c.l.b16 %v1308
      %v1584 = vunpack.c.l.b16 %v1309
      %v1585 = vunpack.c.h.b16 %v1309
      %v1586 = vunpack.c.l.b16 %v1310
      %v1587 = vunpack.c.h.b16 %v1310
      %v1588 = vunpack.c.l.b16 %v1311
      %v1589 = vunpack.c.h.b16 %v1311
      %v1590 = vunpack.c.l.b16 %v1312
      %v1591 = vunpack.c.l.b16 %v1313
      %v1592 = vunpack.c.h.b16 %v1313
      %v1593 = vunpack.c.l.b16 %v1314
      %v1594 = vunpack.c.h.b16 %v1314
      %v1595 = vunpack.c.l.b16 %v1315
      %v1596 = vunpack.c.h.b16 %v1315
      %v1597 = vunpack.c.l.b16 %v1316
      %v1598 = vunpack.c.l.b16 %v1317
      %v1599 = vunpack.c.h.b16 %v1317
      %v1600 = vunpack.c.l.b16 %v1318
      %v1601 = vunpack.c.h.b16 %v1318
      %v1602 = vunpack.c.l.b16 %v1319
      %v1603 = vunpack.c.h.b16 %v1319
      %v1604 = vunpack.c.l.b16 %v1320
      %v1605 = vunpack.c.l.b16 %v1321
      %v1606 = vunpack.c.h.b16 %v1321
      %v1607 = vunpack.c.l.b16 %v1322
      %v1608 = vunpack.c.h.b16 %v1322
      %v1609 = vunpack.c.l.b16 %v1323
      %v1610 = vunpack.c.h.b16 %v1323
      %v1611 = vunpack.c.l.b16 %v1324
      %v1612 = vpack.c.b16 %v1444, %v1437
      %v1613 = vpack.c.b16 %v1445, %v1438
      %v1614 = vpack.c.b16 %v1446, %v1439
      %v1615 = vpack.c.b16 %v1447, %v1440
      %v1616 = vpack.c.b16 %v1448, %v1441
      %v1617 = vpack.c.b16 %v1449, %v1442
      %v1618 = vpack.c.b16 %v1450, %v1443
      %v1619 = vpack.c.b16 %v1458, %v1451
      %v1620 = vpack.c.b16 %v1459, %v1452
      %v1621 = vpack.c.b16 %v1460, %v1453
      %v1622 = vpack.c.b16 %v1461, %v1454
      %v1623 = vpack.c.b16 %v1462, %v1455
      %v1624 = vpack.c.b16 %v1463, %v1456
      %v1625 = vpack.c.b16 %v1464, %v1457
      %v1626 = vpack.c.b16 %v1472, %v1465
      %v1627 = vpack.c.b16 %v1473, %v1466
      %v1628 = vpack.c.b16 %v1474, %v1467
      %v1629 = vpack.c.b16 %v1475, %v1468
      %v1630 = vpack.c.b16 %v1476, %v1469
      %v1631 = vpack.c.b16 %v1477, %v1470
      %v1632 = vpack.c.b16 %v1478, %v1471
      %v1633 = vpack.c.b16 %v1486, %v1479
      %v1634 = vpack.c.b16 %v1487, %v1480
      %v1635 = vpack.c.b16 %v1488, %v1481
      %v1636 = vpack.c.b16 %v1489, %v1482
      %v1637 = vpack.c.b16 %v1490, %v1483
      %v1638 = vpack.c.b16 %v1491, %v1484
      %v1639 = vpack.c.b16 %v1492, %v1485
      %v1640 = vpack.c.b16 %v1500, %v1493
      %v1641 = vpack.c.b16 %v1501, %v1494
      %v1642 = vpack.c.b16 %v1502, %v1495
      %v1643 = vpack.c.b16 %v1503, %v1496
      %v1644 = vpack.c.b16 %v1504, %v1497
      %v1645 = vpack.c.b16 %v1505, %v1498
      %v1646 = vpack.c.b16 %v1506, %v1499
      %v1647 = vpack.c.b16 %v1514, %v1507
      %v1648 = vpack.c.b16 %v1515, %v1508
      %v1649 = vpack.c.b16 %v1516, %v1509
      %v1650 = vpack.c.b16 %v1517, %v1510
      %v1651 = vpack.c.b16 %v1518, %v1511
      %v1652 = vpack.c.b16 %v1519, %v1512
      %v1653 = vpack.c.b16 %v1520, %v1513
      %v1654 = vpack.c.b16 %v1528, %v1521
      %v1655 = vpack.c.b16 %v1529, %v1522
      %v1656 = vpack.c.b16 %v1530, %v1523
      %v1657 = vpack.c.b16 %v1531, %v1524
      %v1658 = vpack.c.b16 %v1532, %v1525
      %v1659 = vpack.c.b16 %v1533, %v1526
      %v1660 = vpack.c.b16 %v1534, %v1527
      %v1661 = vpack.c.b16 %v1542, %v1535
      %v1662 = vpack.c.b16 %v1543, %v1536
      %v1663 = vpack.c.b16 %v1544, %v1537
      %v1664 = vpack.c.b16 %v1545, %v1538
      %v1665 = vpack.c.b16 %v1546, %v1539
      %v1666 = vpack.c.b16 %v1547, %v1540
      %v1667 = vpack.c.b16 %v1548, %v1541
      %v1668 = vpack.c.b16 %v1556, %v1549
      %v1669 = vpack.c.b16 %v1557, %v1550
      %v1670 = vpack.c.b16 %v1558, %v1551
      %v1671 = vpack.c.b16 %v1559, %v1552
      %v1672 = vpack.c.b16 %v1560, %v1553
      %v1673 = vpack.c.b16 %v1561, %v1554
      %v1674 = vpack.c.b16 %v1562, %v1555
      %v1675 = vpack.c.b16 %v1570, %v1563
      %v1676 = vpack.c.b16 %v1571, %v1564
      %v1677 = vpack.c.b16 %v1572, %v1565
      %v1678 = vpack.c.b16 %v1573, %v1566
      %v1679 = vpack.c.b16 %v1574, %v1567
      %v1680 = vpack.c.b16 %v1575, %v1568
      %v1681 = vpack.c.b16 %v1576, %v1569
      %v1682 = vpack.c.b16 %v1584, %v1577
      %v1683 = vpack.c.b16 %v1585, %v1578
      %v1684 = vpack.c.b16 %v1586, %v1579
      %v1685 = vpack.c.b16 %v1587, %v1580
      %v1686 = vpack.c.b16 %v1588, %v1581
      %v1687 = vpack.c.b16 %v1589, %v1582
      %v1688 = vpack.c.b16 %v1590, %v1583
      %v1689 = vpack.c.b16 %v1598, %v1591
      %v1690 = vpack.c.b16 %v1599, %v1592
      %v1691 = vpack.c.b16 %v1600, %v1593
      %v1692 = vpack.c.b16 %v1601, %v1594
      %v1693 = vpack.c.b16 %v1602, %v1595
      %v1694 = vpack.c.b16 %v1603, %v1596
      %v1695 = vpack.c.b16 %v1604, %v1597
      %v1696 = vpack.c.b16 %v1605, %v1605
      %v1697 = vpack.c.b16 %v1606, %v1606
      %v1698 = vpack.c.b16 %v1607, %v1607
      %v1699 = vpack.c.b16 %v1608, %v1608
      %v1700 = vpack.c.b16 %v1609, %v1609
      %v1701 = vpack.c.b16 %v1610, %v1610
      %v1702 = vpack.c.b16 %v1611, %v1611
      %vm1787 = vcmask 588800
      %v1789 = vsel %vm1787, %v1335, 0
      %vm1791 = vcmask 1043456
      %v1793 = vsel %vm1791, %v1696, 0
      %v1796 = vsel %vm1791, %v1697, 0
      %v1799 = vsel %vm1791, %v1698, 0
      %v1802 = vsel %vm1791, %v1699, 0
      %v1805 = vsel %vm1791, %v1700, 0
      %v1808 = vsel %vm1791, %v1701, 0
      %v1811 = vsel %vm1791, %v1702, 0
      %1813 = vmatprep.subr.bf16.mxu0 %v1613
      %1814 = vmatpush1.bf16.msra.mxu0 %v1612
      %1815 = vmatprep.subr.bf16.mxu0 %v1620
      %1816 = vmatpush1.bf16.msra.mxu0 %v1619
      %1817 = vmatprep.subr.bf16.mxu0 %v1627
      %1818 = vmatpush1.bf16.msra.mxu0 %v1626
      %1819 = vmatprep.subr.bf16.mxu0 %v1634
      %1820 = vmatpush1.bf16.msra.mxu0 %v1633
      %1821 = vmatprep.subr.bf16.mxu0 %v1641
      %1822 = vmatpush1.bf16.msra.mxu0 %v1640
      %1823 = vmatprep.subr.bf16.mxu0 %v1648
      %1824 = vmatpush1.bf16.msra.mxu0 %v1647
      %1825 = vmatprep.subr.bf16.mxu0 %v1655
      %1826 = vmatpush1.bf16.msra.mxu0 %v1654
      %1827 = vmatprep.subr.bf16.mxu0 %v1662
      %1828 = vmatpush1.bf16.msra.mxu0 %v1661
      %1829 = vmatprep.subr.bf16.mxu0 %v1669
      %1830 = vmatpush1.bf16.msra.mxu0 %v1668
      %1831 = vmatprep.subr.bf16.mxu0 %v1676
      %1832 = vmatpush1.bf16.msra.mxu0 %v1675
      %1833 = vmatprep.subr.bf16.mxu0 %v1683
      %1834 = vmatpush1.bf16.msra.mxu0 %v1682
      %1835 = vmatprep.subr.bf16.mxu0 %v1690
      %1836 = vmatpush1.bf16.msra.mxu0 %v1689
      %1837 = vmatprep.subr.bf16.mxu0 %v1796
      %1838 = vmatpush1.bf16.msra.mxu0 %v1793
      %1839 = vmatprep.subr.bf16.mxu0 0
      %1840 = vmatpush1.bf16.msra.mxu0 0
      %1841 = vmatprep.subr.bf16.mxu0 0
      %1842 = vmatpush1.bf16.msra.mxu0 0
      %1843 = vmatprep.subr.bf16.mxu0 0
      %1844 = vmatpush1.bf16.msra.mxu0 0
      %1845 = vmatprep.mubr.bf16.mxu0 %v1789
      %1846 = vmatmul.mubr.bf16.gmra.mrb[0].mxu0 %v1334
      %v1847 = vpop.f32.mrb[0].mxu0
      %v1848 = vadd.f32 %v1329, %v1847
      %v1849 = vpop.f32.mrb[0].mxu0
      %v1850 = vadd.f32 %v1329, %v1849
      %v1851 = vpop.f32.mrb[0].mxu0
      %v1852 = vpop.f32.mrb[0].mxu0
      %1853 = vdwg.mxu0
      %1854 = vmatprep.subr.bf16.mxu0 %v1615
      %1855 = vmatpush1.bf16.msra.mxu0 %v1614
      %1856 = vmatprep.subr.bf16.mxu0 %v1622
      %1857 = vmatpush1.bf16.msra.mxu0 %v1621
      %1858 = vmatprep.subr.bf16.mxu0 %v1629
      %1859 = vmatpush1.bf16.msra.mxu0 %v1628
      %1860 = vmatprep.subr.bf16.mxu0 %v1636
      %1861 = vmatpush1.bf16.msra.mxu0 %v1635
      %1862 = vmatprep.subr.bf16.mxu0 %v1643
      %1863 = vmatpush1.bf16.msra.mxu0 %v1642
      %1864 = vmatprep.subr.bf16.mxu0 %v1650
      %1865 = vmatpush1.bf16.msra.mxu0 %v1649
      %1866 = vmatprep.subr.bf16.mxu0 %v1657
      %1867 = vmatpush1.bf16.msra.mxu0 %v1656
      %1868 = vmatprep.subr.bf16.mxu0 %v1664
      %1869 = vmatpush1.bf16.msra.mxu0 %v1663
      %1870 = vmatprep.subr.bf16.mxu0 %v1671
      %1871 = vmatpush1.bf16.msra.mxu0 %v1670
      %1872 = vmatprep.subr.bf16.mxu0 %v1678
      %1873 = vmatpush1.bf16.msra.mxu0 %v1677
      %1874 = vmatprep.subr.bf16.mxu0 %v1685
      %1875 = vmatpush1.bf16.msra.mxu0 %v1684
      %1876 = vmatprep.subr.bf16.mxu0 %v1692
      %1877 = vmatpush1.bf16.msra.mxu0 %v1691
      %1878 = vmatprep.subr.bf16.mxu0 %v1802
      %1879 = vmatpush1.bf16.msra.mxu0 %v1799
      %1880 = vmatprep.subr.bf16.mxu0 0
      %1881 = vmatpush1.bf16.msra.mxu0 0
      %1882 = vmatprep.subr.bf16.mxu0 0
      %1883 = vmatpush1.bf16.msra.mxu0 0
      %1884 = vmatprep.subr.bf16.mxu0 0
      %1885 = vmatpush1.bf16.msra.mxu0 0
      %1886 = vmatprep.mubr.bf16.mxu0 %v1789
      %1887 = vmatmul.mubr.bf16.gmra.mrb[0].mxu0 %v1334
      %v1888 = vpop.f32.mrb[0].mxu0
      %v1889 = vadd.f32 %v1329, %v1888
      %v1890 = vpop.f32.mrb[0].mxu0
      %v1891 = vadd.f32 %v1329, %v1890
      %v1892 = vpop.f32.mrb[0].mxu0
      %v1893 = vpop.f32.mrb[0].mxu0
      %1894 = vdwg.mxu0
      %1895 = vmatprep.subr.bf16.mxu0 %v1617
      %1896 = vmatpush1.bf16.msra.mxu0 %v1616
      %1897 = vmatprep.subr.bf16.mxu0 %v1624
      %1898 = vmatpush1.bf16.msra.mxu0 %v1623
      %1899 = vmatprep.subr.bf16.mxu0 %v1631
      %1900 = vmatpush1.bf16.msra.mxu0 %v1630
      %1901 = vmatprep.subr.bf16.mxu0 %v1638
      %1902 = vmatpush1.bf16.msra.mxu0 %v1637
      %1903 = vmatprep.subr.bf16.mxu0 %v1645
      %1904 = vmatpush1.bf16.msra.mxu0 %v1644
      %1905 = vmatprep.subr.bf16.mxu0 %v1652
      %1906 = vmatpush1.bf16.msra.mxu0 %v1651
      %1907 = vmatprep.subr.bf16.mxu0 %v1659
      %1908 = vmatpush1.bf16.msra.mxu0 %v1658
      %1909 = vmatprep.subr.bf16.mxu0 %v1666
      %1910 = vmatpush1.bf16.msra.mxu0 %v1665
      %1911 = vmatprep.subr.bf16.mxu0 %v1673
      %1912 = vmatpush1.bf16.msra.mxu0 %v1672
      %1913 = vmatprep.subr.bf16.mxu0 %v1680
      %1914 = vmatpush1.bf16.msra.mxu0 %v1679
      %1915 = vmatprep.subr.bf16.mxu0 %v1687
      %1916 = vmatpush1.bf16.msra.mxu0 %v1686
      %1917 = vmatprep.subr.bf16.mxu0 %v1694
      %1918 = vmatpush1.bf16.msra.mxu0 %v1693
      %1919 = vmatprep.subr.bf16.mxu0 %v1808
      %1920 = vmatpush1.bf16.msra.mxu0 %v1805
      %1921 = vmatprep.subr.bf16.mxu0 0
      %1922 = vmatpush1.bf16.msra.mxu0 0
      %1923 = vmatprep.subr.bf16.mxu0 0
      %1924 = vmatpush1.bf16.msra.mxu0 0
      %1925 = vmatprep.subr.bf16.mxu0 0
      %1926 = vmatpush1.bf16.msra.mxu0 0
      %1927 = vmatprep.mubr.bf16.mxu0 %v1789
      %1928 = vmatmul.mubr.bf16.gmra.mrb[0].mxu0 %v1334
      %v1929 = vpop.f32.mrb[0].mxu0
      %v1930 = vadd.f32 %v1329, %v1929
      %v1931 = vpop.f32.mrb[0].mxu0
      %v1932 = vadd.f32 %v1329, %v1931
      %v1933 = vpop.f32.mrb[0].mxu0
      %v1934 = vpop.f32.mrb[0].mxu0
      %1935 = vdwg.mxu0
      %1936 = vmatprep.subr.bf16.mxu0 0
      %1937 = vmatpush1.bf16.msra.mxu0 %v1618
      %1938 = vmatprep.subr.bf16.mxu0 0
      %1939 = vmatpush1.bf16.msra.mxu0 %v1625
      %1940 = vmatprep.subr.bf16.mxu0 0
      %1941 = vmatpush1.bf16.msra.mxu0 %v1632
      %1942 = vmatprep.subr.bf16.mxu0 0
      %1943 = vmatpush1.bf16.msra.mxu0 %v1639
      %1944 = vmatprep.subr.bf16.mxu0 0
      %1945 = vmatpush1.bf16.msra.mxu0 %v1646
      %1946 = vmatprep.subr.bf16.mxu0 0
      %1947 = vmatpush1.bf16.msra.mxu0 %v1653
      %1948 = vmatprep.subr.bf16.mxu0 0
      %1949 = vmatpush1.bf16.msra.mxu0 %v1660
      %1950 = vmatprep.subr.bf16.mxu0 0
      %1951 = vmatpush1.bf16.msra.mxu0 %v1667
      %1952 = vmatprep.subr.bf16.mxu0 0
      %1953 = vmatpush1.bf16.msra.mxu0 %v1674
      %1954 = vmatprep.subr.bf16.mxu0 0
      %1955 = vmatpush1.bf16.msra.mxu0 %v1681
      %1956 = vmatprep.subr.bf16.mxu0 0
      %1957 = vmatpush1.bf16.msra.mxu0 %v1688
      %1958 = vmatprep.subr.bf16.mxu0 0
      %1959 = vmatpush1.bf16.msra.mxu0 %v1695
      %1960 = vmatprep.subr.bf16.mxu0 0
      %1961 = vmatpush1.bf16.msra.mxu0 %v1811
      %1962 = vmatprep.subr.bf16.mxu0 0
      %1963 = vmatpush1.bf16.msra.mxu0 0
      %1964 = vmatprep.subr.bf16.mxu0 0
      %1965 = vmatpush1.bf16.msra.mxu0 0
      %1966 = vmatprep.subr.bf16.mxu0 0
      %1967 = vmatpush1.bf16.msra.mxu0 0
      %1968 = vmatprep.mubr.bf16.mxu0 %v1789
      %1969 = vmatmul.mubr.bf16.gmra.mrb[0].mxu0 %v1334
      %v1970 = vpop.f32.mrb[0].mxu0
      %v1971 = vadd.f32 %v1329, %v1970
      %v1972 = vpop.f32.mrb[0].mxu0
      %v1973 = vpop.f32.mrb[0].mxu0
      %v1974 = vpop.f32.mrb[0].mxu0
      %1975 = vdwg.mxu0
      %v1976 = vmax.f32 %v1848, 0.0
      %v1977 = vmax.f32 %v1850, 0.0
      %v1978 = vmax.f32 %v1889, 0.0
      %v1979 = vmax.f32 %v1891, 0.0
      %v1980 = vmax.f32 %v1930, 0.0
      %v1981 = vmax.f32 %v1932, 0.0
      %v1982 = vmax.f32 %v1971, 0.0
      %v1983 = vpack.c.bf16 %v1976, %v1976
      %v1984 = vpack.c.bf16 %v1977, %v1977
      %v1985 = vpack.c.bf16 %v1978, %v1978
      %v1986 = vpack.c.bf16 %v1979, %v1979
      %v1987 = vpack.c.bf16 %v1980, %v1980
      %v1988 = vpack.c.bf16 %v1981, %v1981
      %v1989 = vpack.c.bf16 %v1982, %v1982
      %v1997 = vunpack.c.l.b16 %v1983
      %v1998 = vunpack.c.l.b16 %v1984
      %v1999 = vunpack.c.l.b16 %v1985
      %v2000 = vunpack.c.l.b16 %v1986
      %v2001 = vunpack.c.l.b16 %v1987
      %v2002 = vunpack.c.l.b16 %v1988
      %v2003 = vunpack.c.l.b16 %v1989
      %v2004 = vpack.c.b16 %v1998, %v1997
      %v2005 = vpack.c.b16 %v2000, %v1999
      %v2006 = vpack.c.b16 %v2002, %v2001
      %v2007 = vpack.c.b16 %v2003, %v2003
      %2012 = vst [vmem:[#allocation3] sm:$0xff] %v2004
      %2013 = vst [vmem:[#allocation3 + $0x8] sm:$0xff] %v2005
      %2014 = vst [vmem:[#allocation3 + $0x10] sm:$0xff] %v2006
      %2015 = vst.msk [vmem:[#allocation3 + $0x18] sm:$0xf] %vm397, %v2007
      %v2016 = vld [vmem:[#allocation3] sm:$0xff]
      %v2017 = vld [vmem:[#allocation3 + $0x8] sm:$0xff]
      %v2018 = vld [vmem:[#allocation3 + $0x10] sm:$0xff]
      %v2019 = vld [vmem:[#allocation3 + $0x18] sm:$0xf]
      %2024 = vrot.lane.b32.xlu0 %v2016, 127
      %v2025 = vpop.permute.xlu0 %2024
      %2026 = vrot.lane.b32.xlu0 %v2017, 127
      %v2027 = vpop.permute.xlu0 %2026
      %2028 = vrot.lane.b32.xlu0 %v2018, 127
      %v2029 = vpop.permute.xlu0 %2028
      %2030 = vrot.lane.b32.xlu0 %v2019, 127
      %v2031 = vpop.permute.xlu0 %2030
      %v2032 = vrot.slane %v2025, 4
      %v2033 = vrot.slane %v2027, 4
      %v2034 = vrot.slane %v2029, 4
      %v2035 = vrot.slane %v2031, 4
      %v2036 = vsel %vm419, %v2032, %v2033
      %v2037 = vsel %vm421, %v2025, %v2036
      %v2038 = vsel %vm419, %v2033, %v2034
      %v2039 = vsel %vm421, %v2027, %v2038
      %v2040 = vsel %vm419, %v2034, %v2035
      %v2041 = vsel %vm421, %v2029, %v2040
      %v2046 = vmax.bf16 %v2016, %v2037
      %v2047 = vmax.bf16 %v2017, %v2039
      %v2048 = vmax.bf16 %v2018, %v2041
      %v2049 = vmax.bf16 %v2019, %v2031
      %2054 = vrot.lane.b32.xlu0 %v2046, 96
      %v2055 = vpop.permute.xlu0 %2054
      %2056 = vrot.lane.b32.xlu0 %v2047, 96
      %v2057 = vpop.permute.xlu0 %2056
      %2058 = vrot.lane.b32.xlu0 %v2048, 96
      %v2059 = vpop.permute.xlu0 %2058
      %2060 = vrot.lane.b32.xlu0 %v2049, 96
      %v2061 = vpop.permute.xlu0 %2060
      %v2062 = vrot.slane %v2055, 4
      %v2063 = vrot.slane %v2057, 4
      %v2064 = vrot.slane %v2059, 4
      %v2065 = vrot.slane %v2061, 4
      %v2066 = vsel %vm419, %v2062, %v2063
      %v2067 = vsel %vm561, %v2055, %v2066
      %v2068 = vsel %vm419, %v2063, %v2064
      %v2069 = vsel %vm561, %v2057, %v2068
      %v2070 = vsel %vm419, %v2064, %v2065
      %v2071 = vsel %vm561, %v2059, %v2070
      %v2076 = vmax.bf16 %v2046, %v2067
      %v2077 = vmax.bf16 %v2047, %v2069
      %v2078 = vmax.bf16 %v2048, %v2071
      %v2079 = vmax.bf16 %v2049, %v2061
      %2080 = vst [vmem:[#allocation4] sm:$0xff] %v2076
      %2081 = vst [vmem:[#allocation4 + $0x8] sm:$0xff] %v2077
      %2082 = vst [vmem:[#allocation4 + $0x10] sm:$0xff] %v2078
      %vm2083 = vcmask 740352
      %2084 = vst.msk [vmem:[#allocation4 + $0x18] sm:$0xf] %vm2083, %v2079
      %v2085 = vld [vmem:[#allocation4] sm:$0xff]
      %v2086 = vld [vmem:[#allocation4 + $0x8] sm:$0xff]
      %v2087 = vld [vmem:[#allocation4 + $0x10] sm:$0xf]
      %2088 = vst [vmem:[#allocation5] sm:$0xff] %v2085
      %2089 = vst [vmem:[#allocation5 + $0x8] sm:$0xff] %v2086
      %vm2090 = vcmask 674816
      %2091 = vst.msk [vmem:[#allocation5 + $0x10] sm:$0xf] %vm2090, %v2087
      %v2092 = vld [vmem:[#allocation4] sm:$0xff]
      %v2093 = vld [vmem:[#allocation4 + $0x8] sm:$0xff]
      %v2094 = vld [vmem:[#allocation4 + $0x10] sm:$0xf]
      %2098 = vrot.lane.b32.xlu0 %v2092, 126
      %v2099 = vpop.permute.xlu0 %2098
      %2100 = vrot.lane.b32.xlu0 %v2093, 126
      %v2101 = vpop.permute.xlu0 %2100
      %2102 = vrot.lane.b32.xlu0 %v2094, 126
      %v2103 = vpop.permute.xlu0 %2102
      %v2104 = vrot.slane %v2099, 4
      %v2105 = vrot.slane %v2101, 4
      %v2106 = vrot.slane %v2103, 4
      %v2107 = vsel %vm419, %v2104, %v2105
      %v2108 = vsel %vm456, %v2099, %v2107
      %v2109 = vsel %vm419, %v2105, %v2106
      %v2110 = vsel %vm456, %v2101, %v2109
      %2114 = vst [vmem:[#allocation5 + $0x14] sm:$0xff] %v2108
      %2115 = vst [vmem:[#allocation5 + $0x1c] sm:$0xff] %v2110
      %2116 = vst.msk [vmem:[#allocation5 + $0x24] sm:$0xf] %vm2090, %v2103
      %v2117 = vld [vmem:[#allocation4] sm:$0xff]
      %v2118 = vld [vmem:[#allocation4 + $0x8] sm:$0xff]
      %v2119 = vld [vmem:[#allocation4 + $0x10] sm:$0xf]
      %2123 = vrot.lane.b32.xlu0 %v2117, 124
      %v2124 = vpop.permute.xlu0 %2123
      %2125 = vrot.lane.b32.xlu0 %v2118, 124
      %v2126 = vpop.permute.xlu0 %2125
      %2127 = vrot.lane.b32.xlu0 %v2119, 124
      %v2128 = vpop.permute.xlu0 %2127
      %v2129 = vrot.slane %v2124, 4
      %v2130 = vrot.slane %v2126, 4
      %v2131 = vrot.slane %v2128, 4
      %v2132 = vsel %vm419, %v2129, %v2130
      %v2133 = vsel %vm526, %v2124, %v2132
      %v2134 = vsel %vm419, %v2130, %v2131
      %v2135 = vsel %vm526, %v2126, %v2134
      %2139 = vst [vmem:[#allocation5 + $0x28] sm:$0xff] %v2133
      %2140 = vst [vmem:[#allocation5 + $0x30] sm:$0xff] %v2135
      %2141 = vst.msk [vmem:[#allocation5 + $0x38] sm:$0xf] %vm2090, %v2128
      %v2142 = vld [vmem:[#allocation4] sm:$0xff]
      %v2143 = vld [vmem:[#allocation4 + $0x8] sm:$0xff]
      %v2144 = vld [vmem:[#allocation4 + $0x10] sm:$0xf]
      %2148 = vrot.lane.b32.xlu0 %v2142, 122
      %v2149 = vpop.permute.xlu0 %2148
      %2150 = vrot.lane.b32.xlu0 %v2143, 122
      %v2151 = vpop.permute.xlu0 %2150
      %2152 = vrot.lane.b32.xlu0 %v2144, 122
      %v2153 = vpop.permute.xlu0 %2152
      %v2154 = vrot.slane %v2149, 4
      %v2155 = vrot.slane %v2151, 4
      %v2156 = vrot.slane %v2153, 4
      %v2157 = vsel %vm419, %v2154, %v2155
      %vm2158 = vcmask 998400
      %v2159 = vsel %vm2158, %v2149, %v2157
      %v2160 = vsel %vm419, %v2155, %v2156
      %v2161 = vsel %vm2158, %v2151, %v2160
      %2165 = vst [vmem:[#allocation5 + $0x3c] sm:$0xff] %v2159
      %2166 = vst [vmem:[#allocation5 + $0x44] sm:$0xff] %v2161
      %2167 = vst.msk [vmem:[#allocation5 + $0x4c] sm:$0xf] %vm2090, %v2153
      %v2168 = vld [vmem:[#allocation4] sm:$0xff]
      %v2169 = vld [vmem:[#allocation4 + $0x8] sm:$0xff]
      %v2170 = vld [vmem:[#allocation4 + $0x10] sm:$0xf]
      %2174 = vrot.lane.b32.xlu0 %v2168, 120
      %v2175 = vpop.permute.xlu0 %2174
      %2176 = vrot.lane.b32.xlu0 %v2169, 120
      %v2177 = vpop.permute.xlu0 %2176
      %2178 = vrot.lane.b32.xlu0 %v2170, 120
      %v2179 = vpop.permute.xlu0 %2178
      %v2180 = vrot.slane %v2175, 4
      %v2181 = vrot.slane %v2177, 4
      %v2182 = vrot.slane %v2179, 4
      %v2183 = vsel %vm419, %v2180, %v2181
      %vm2184 = vcmask 982016
      %v2185 = vsel %vm2184, %v2175, %v2183
      %v2186 = vsel %vm419, %v2181, %v2182
      %v2187 = vsel %vm2184, %v2177, %v2186
      %2191 = vst [vmem:[#allocation5 + $0x50] sm:$0xff] %v2185
      %2192 = vst [vmem:[#allocation5 + $0x58] sm:$0xff] %v2187
      %2193 = vst.msk [vmem:[#allocation5 + $0x60] sm:$0xf] %vm2090, %v2179
      %v2194 = vld [vmem:[#allocation4] sm:$0xff]
      %v2195 = vld [vmem:[#allocation4 + $0x8] sm:$0xff]
      %v2196 = vld [vmem:[#allocation4 + $0x10] sm:$0xff]
      %2200 = vrot.lane.b32.xlu0 %v2194, 64
      %v2201 = vpop.permute.xlu0 %2200
      %2202 = vrot.lane.b32.xlu0 %v2195, 64
      %v2203 = vpop.permute.xlu0 %2202
      %2204 = vrot.lane.b32.xlu0 %v2196, 64
      %v2205 = vpop.permute.xlu0 %2204
      %v2206 = vrot.slane %v2201, 4
      %v2207 = vrot.slane %v2203, 4
      %v2208 = vrot.slane %v2205, 4
      %v2209 = vsel %vm419, %v2206, %v2207
      %v2210 = vsel %vm741, %v2201, %v2209
      %v2211 = vsel %vm419, %v2207, %v2208
      %v2212 = vsel %vm741, %v2203, %v2211
      %v2213 = vsel %vm741, %v2205, %v2208
      %2217 = vst [vmem:[#allocation5 + $0x64] sm:$0xff] %v2210
      %2218 = vst [vmem:[#allocation5 + $0x6c] sm:$0xff] %v2212
      %2219 = vst.msk [vmem:[#allocation5 + $0x74] sm:$0xf] %vm2090, %v2213
      %v2220 = vld [vmem:[#allocation4] sm:$0xff]
      %v2221 = vld [vmem:[#allocation4 + $0x8] sm:$0xff]
      %v2222 = vld [vmem:[#allocation4 + $0x10] sm:$0xff]
      %2226 = vrot.lane.b32.xlu0 %v2220, 62
      %v2227 = vpop.permute.xlu0 %2226
      %2228 = vrot.lane.b32.xlu0 %v2221, 62
      %v2229 = vpop.permute.xlu0 %2228
      %2230 = vrot.lane.b32.xlu0 %v2222, 62
      %v2231 = vpop.permute.xlu0 %2230
      %v2232 = vrot.slane %v2227, 4
      %v2233 = vrot.slane %v2229, 4
      %v2234 = vrot.slane %v2231, 4
      %v2235 = vsel %vm419, %v2232, %v2233
      %v2236 = vsel %vm813, %v2227, %v2235
      %v2237 = vsel %vm419, %v2233, %v2234
      %v2238 = vsel %vm813, %v2229, %v2237
      %v2239 = vsel %vm813, %v2231, %v2234
      %2243 = vst [vmem:[#allocation5 + $0x78] sm:$0xff] %v2236
      %2244 = vst [vmem:[#allocation5 + $0x80] sm:$0xff] %v2238
      %2245 = vst.msk [vmem:[#allocation5 + $0x88] sm:$0xf] %vm2090, %v2239
      %v2246 = vld [vmem:[#allocation4] sm:$0xff]
      %v2247 = vld [vmem:[#allocation4 + $0x8] sm:$0xff]
      %v2248 = vld [vmem:[#allocation4 + $0x10] sm:$0xff]
      %2252 = vrot.lane.b32.xlu0 %v2246, 60
      %v2253 = vpop.permute.xlu0 %2252
      %2254 = vrot.lane.b32.xlu0 %v2247, 60
      %v2255 = vpop.permute.xlu0 %2254
      %2256 = vrot.lane.b32.xlu0 %v2248, 60
      %v2257 = vpop.permute.xlu0 %2256
      %v2258 = vrot.slane %v2253, 4
      %v2259 = vrot.slane %v2255, 4
      %v2260 = vrot.slane %v2257, 4
      %v2261 = vsel %vm419, %v2258, %v2259
      %v2262 = vsel %vm885, %v2253, %v2261
      %v2263 = vsel %vm419, %v2259, %v2260
      %v2264 = vsel %vm885, %v2255, %v2263
      %v2265 = vsel %vm885, %v2257, %v2260
      %2269 = vst [vmem:[#allocation5 + $0x8c] sm:$0xff] %v2262
      %2270 = vst [vmem:[#allocation5 + $0x94] sm:$0xff] %v2264
      %2271 = vst.msk [vmem:[#allocation5 + $0x9c] sm:$0xf] %vm2090, %v2265
      %v2272 = vld [vmem:[#allocation4] sm:$0xff]
      %v2273 = vld [vmem:[#allocation4 + $0x8] sm:$0xff]
      %v2274 = vld [vmem:[#allocation4 + $0x10] sm:$0xff]
      %2278 = vrot.lane.b32.xlu0 %v2272, 58
      %v2279 = vpop.permute.xlu0 %2278
      %2280 = vrot.lane.b32.xlu0 %v2273, 58
      %v2281 = vpop.permute.xlu0 %2280
      %2282 = vrot.lane.b32.xlu0 %v2274, 58
      %v2283 = vpop.permute.xlu0 %2282
      %v2284 = vrot.slane %v2279, 4
      %v2285 = vrot.slane %v2281, 4
      %v2286 = vrot.slane %v2283, 4
      %v2287 = vsel %vm419, %v2284, %v2285
      %vm2288 = vcmask 474112
      %v2289 = vsel %vm2288, %v2279, %v2287
      %v2290 = vsel %vm419, %v2285, %v2286
      %v2291 = vsel %vm2288, %v2281, %v2290
      %v2292 = vsel %vm2288, %v2283, %v2286
      %2296 = vst [vmem:[#allocation5 + $0xa0] sm:$0xff] %v2289
      %2297 = vst [vmem:[#allocation5 + $0xa8] sm:$0xff] %v2291
      %2298 = vst.msk [vmem:[#allocation5 + $0xb0] sm:$0xf] %vm2090, %v2292
      %v2299 = vld [vmem:[#allocation4] sm:$0xff]
      %v2300 = vld [vmem:[#allocation4 + $0x8] sm:$0xff]
      %v2301 = vld [vmem:[#allocation4 + $0x10] sm:$0xff]
      %2305 = vrot.lane.b32.xlu0 %v2299, 56
      %v2306 = vpop.permute.xlu0 %2305
      %2307 = vrot.lane.b32.xlu0 %v2300, 56
      %v2308 = vpop.permute.xlu0 %2307
      %2309 = vrot.lane.b32.xlu0 %v2301, 56
      %v2310 = vpop.permute.xlu0 %2309
      %v2311 = vrot.slane %v2306, 4
      %v2312 = vrot.slane %v2308, 4
      %v2313 = vrot.slane %v2310, 4
      %v2314 = vsel %vm419, %v2311, %v2312
      %vm2315 = vcmask 457728
      %v2316 = vsel %vm2315, %v2306, %v2314
      %v2317 = vsel %vm419, %v2312, %v2313
      %v2318 = vsel %vm2315, %v2308, %v2317
      %v2319 = vsel %vm2315, %v2310, %v2313
      %2323 = vst [vmem:[#allocation5 + $0xb4] sm:$0xff] %v2316
      %2324 = vst [vmem:[#allocation5 + $0xbc] sm:$0xff] %v2318
      %2325 = vst.msk [vmem:[#allocation5 + $0xc4] sm:$0xf] %vm2090, %v2319
      %v2326 = vld [vmem:[#allocation4 + $0x4] sm:$0xff]
      %v2327 = vld [vmem:[#allocation4 + $0xc] sm:$0xff]
      %v2328 = vld [vmem:[#allocation4 + $0x14] sm:$0xf]
      %2329 = vst [vmem:[#allocation5 + $0xc8] sm:$0xff] %v2326
      %2330 = vst [vmem:[#allocation5 + $0xd0] sm:$0xff] %v2327
      %2331 = vst.msk [vmem:[#allocation5 + $0xd8] sm:$0xf] %vm2090, %v2328
      %v2332 = vld [vmem:[#allocation4 + $0x4] sm:$0xff]
      %v2333 = vld [vmem:[#allocation4 + $0xc] sm:$0xff]
      %v2334 = vld [vmem:[#allocation4 + $0x14] sm:$0xf]
      %2338 = vrot.lane.b32.xlu0 %v2332, 126
      %v2339 = vpop.permute.xlu0 %2338
      %2340 = vrot.lane.b32.xlu0 %v2333, 126
      %v2341 = vpop.permute.xlu0 %2340
      %2342 = vrot.lane.b32.xlu0 %v2334, 126
      %v2343 = vpop.permute.xlu0 %2342
      %v2344 = vrot.slane %v2339, 4
      %v2345 = vrot.slane %v2341, 4
      %v2346 = vrot.slane %v2343, 4
      %v2347 = vsel %vm419, %v2344, %v2345
      %v2348 = vsel %vm456, %v2339, %v2347
      %v2349 = vsel %vm419, %v2345, %v2346
      %v2350 = vsel %vm456, %v2341, %v2349
      %2354 = vst [vmem:[#allocation5 + $0xdc] sm:$0xff] %v2348
      %2355 = vst [vmem:[#allocation5 + $0xe4] sm:$0xff] %v2350
      %2356 = vst.msk [vmem:[#allocation5 + $0xec] sm:$0xf] %vm2090, %v2343
      %v2357 = vld [vmem:[#allocation4 + $0x4] sm:$0xff]
      %v2358 = vld [vmem:[#allocation4 + $0xc] sm:$0xff]
      %v2359 = vld [vmem:[#allocation4 + $0x14] sm:$0xf]
      %2363 = vrot.lane.b32.xlu0 %v2357, 124
      %v2364 = vpop.permute.xlu0 %2363
      %2365 = vrot.lane.b32.xlu0 %v2358, 124
      %v2366 = vpop.permute.xlu0 %2365
      %2367 = vrot.lane.b32.xlu0 %v2359, 124
      %v2368 = vpop.permute.xlu0 %2367
      %v2369 = vrot.slane %v2364, 4
      %v2370 = vrot.slane %v2366, 4
      %v2371 = vrot.slane %v2368, 4
      %v2372 = vsel %vm419, %v2369, %v2370
      %v2373 = vsel %vm526, %v2364, %v2372
      %v2374 = vsel %vm419, %v2370, %v2371
      %v2375 = vsel %vm526, %v2366, %v2374
      %2379 = vst [vmem:[#allocation5 + $0xf0] sm:$0xff] %v2373
      %2380 = vst [vmem:[#allocation5 + $0xf8] sm:$0xff] %v2375
      %2381 = vst.msk [vmem:[#allocation5 + $0x100] sm:$0xf] %vm2090, %v2368
      %v2382 = vld [vmem:[#allocation4 + $0x4] sm:$0xff]
      %v2383 = vld [vmem:[#allocation4 + $0xc] sm:$0xff]
      %v2384 = vld [vmem:[#allocation4 + $0x14] sm:$0xf]
      %2388 = vrot.lane.b32.xlu0 %v2382, 122
      %v2389 = vpop.permute.xlu0 %2388
      %2390 = vrot.lane.b32.xlu0 %v2383, 122
      %v2391 = vpop.permute.xlu0 %2390
      %2392 = vrot.lane.b32.xlu0 %v2384, 122
      %v2393 = vpop.permute.xlu0 %2392
      %v2394 = vrot.slane %v2389, 4
      %v2395 = vrot.slane %v2391, 4
      %v2396 = vrot.slane %v2393, 4
      %v2397 = vsel %vm419, %v2394, %v2395
      %v2398 = vsel %vm2158, %v2389, %v2397
      %v2399 = vsel %vm419, %v2395, %v2396
      %v2400 = vsel %vm2158, %v2391, %v2399
      %2404 = vst [vmem:[#allocation5 + $0x104] sm:$0xff] %v2398
      %2405 = vst [vmem:[#allocation5 + $0x10c] sm:$0xff] %v2400
      %2406 = vst.msk [vmem:[#allocation5 + $0x114] sm:$0xf] %vm2090, %v2393
      %v2407 = vld [vmem:[#allocation4 + $0x4] sm:$0xff]
      %v2408 = vld [vmem:[#allocation4 + $0xc] sm:$0xff]
      %v2409 = vld [vmem:[#allocation4 + $0x14] sm:$0xf]
      %2413 = vrot.lane.b32.xlu0 %v2407, 120
      %v2414 = vpop.permute.xlu0 %2413
      %2415 = vrot.lane.b32.xlu0 %v2408, 120
      %v2416 = vpop.permute.xlu0 %2415
      %2417 = vrot.lane.b32.xlu0 %v2409, 120
      %v2418 = vpop.permute.xlu0 %2417
      %v2419 = vrot.slane %v2414, 4
      %v2420 = vrot.slane %v2416, 4
      %v2421 = vrot.slane %v2418, 4
      %v2422 = vsel %vm419, %v2419, %v2420
      %v2423 = vsel %vm2184, %v2414, %v2422
      %v2424 = vsel %vm419, %v2420, %v2421
      %v2425 = vsel %vm2184, %v2416, %v2424
      %2429 = vst [vmem:[#allocation5 + $0x118] sm:$0xff] %v2423
      %2430 = vst [vmem:[#allocation5 + $0x120] sm:$0xff] %v2425
      %2431 = vst.msk [vmem:[#allocation5 + $0x128] sm:$0xf] %vm2090, %v2418
      %v2432 = vld [vmem:[#allocation4 + $0x4] sm:$0xff]
      %v2433 = vld [vmem:[#allocation4 + $0xc] sm:$0xff]
      %v2434 = vld [vmem:[#allocation4 + $0x14] sm:$0xff]
      %2438 = vrot.lane.b32.xlu0 %v2432, 64
      %v2439 = vpop.permute.xlu0 %2438
      %2440 = vrot.lane.b32.xlu0 %v2433, 64
      %v2441 = vpop.permute.xlu0 %2440
      %2442 = vrot.lane.b32.xlu0 %v2434, 64
      %v2443 = vpop.permute.xlu0 %2442
      %v2444 = vrot.slane %v2439, 4
      %v2445 = vrot.slane %v2441, 4
      %v2446 = vrot.slane %v2443, 4
      %v2447 = vsel %vm419, %v2444, %v2445
      %v2448 = vsel %vm741, %v2439, %v2447
      %v2449 = vsel %vm419, %v2445, %v2446
      %v2450 = vsel %vm741, %v2441, %v2449
      %v2451 = vsel %vm741, %v2443, %v2446
      %2455 = vst [vmem:[#allocation5 + $0x12c] sm:$0xff] %v2448
      %2456 = vst [vmem:[#allocation5 + $0x134] sm:$0xff] %v2450
      %2457 = vst.msk [vmem:[#allocation5 + $0x13c] sm:$0xf] %vm2090, %v2451
      %v2458 = vld [vmem:[#allocation4 + $0x4] sm:$0xff]
      %v2459 = vld [vmem:[#allocation4 + $0xc] sm:$0xff]
      %v2460 = vld [vmem:[#allocation4 + $0x14] sm:$0xff]
      %2464 = vrot.lane.b32.xlu0 %v2458, 62
      %v2465 = vpop.permute.xlu0 %2464
      %2466 = vrot.lane.b32.xlu0 %v2459, 62
      %v2467 = vpop.permute.xlu0 %2466
      %2468 = vrot.lane.b32.xlu0 %v2460, 62
      %v2469 = vpop.permute.xlu0 %2468
      %v2470 = vrot.slane %v2465, 4
      %v2471 = vrot.slane %v2467, 4
      %v2472 = vrot.slane %v2469, 4
      %v2473 = vsel %vm419, %v2470, %v2471
      %v2474 = vsel %vm813, %v2465, %v2473
      %v2475 = vsel %vm419, %v2471, %v2472
      %v2476 = vsel %vm813, %v2467, %v2475
      %v2477 = vsel %vm813, %v2469, %v2472
      %2481 = vst [vmem:[#allocation5 + $0x140] sm:$0xff] %v2474
      %2482 = vst [vmem:[#allocation5 + $0x148] sm:$0xff] %v2476
      %2483 = vst.msk [vmem:[#allocation5 + $0x150] sm:$0xf] %vm2090, %v2477
      %v2484 = vld [vmem:[#allocation4 + $0x4] sm:$0xff]
      %v2485 = vld [vmem:[#allocation4 + $0xc] sm:$0xff]
      %v2486 = vld [vmem:[#allocation4 + $0x14] sm:$0xff]
      %2490 = vrot.lane.b32.xlu0 %v2484, 60
      %v2491 = vpop.permute.xlu0 %2490
      %2492 = vrot.lane.b32.xlu0 %v2485, 60
      %v2493 = vpop.permute.xlu0 %2492
      %2494 = vrot.lane.b32.xlu0 %v2486, 60
      %v2495 = vpop.permute.xlu0 %2494
      %v2496 = vrot.slane %v2491, 4
      %v2497 = vrot.slane %v2493, 4
      %v2498 = vrot.slane %v2495, 4
      %v2499 = vsel %vm419, %v2496, %v2497
      %v2500 = vsel %vm885, %v2491, %v2499
      %v2501 = vsel %vm419, %v2497, %v2498
      %v2502 = vsel %vm885, %v2493, %v2501
      %v2503 = vsel %vm885, %v2495, %v2498
      %2507 = vst [vmem:[#allocation5 + $0x154] sm:$0xff] %v2500
      %2508 = vst [vmem:[#allocation5 + $0x15c] sm:$0xff] %v2502
      %2509 = vst.msk [vmem:[#allocation5 + $0x164] sm:$0xf] %vm2090, %v2503
      %v2510 = vld [vmem:[#allocation4 + $0x4] sm:$0xff]
      %v2511 = vld [vmem:[#allocation4 + $0xc] sm:$0xff]
      %v2512 = vld [vmem:[#allocation4 + $0x14] sm:$0xff]
      %2516 = vrot.lane.b32.xlu0 %v2510, 58
      %v2517 = vpop.permute.xlu0 %2516
      %2518 = vrot.lane.b32.xlu0 %v2511, 58
      %v2519 = vpop.permute.xlu0 %2518
      %2520 = vrot.lane.b32.xlu0 %v2512, 58
      %v2521 = vpop.permute.xlu0 %2520
      %v2522 = vrot.slane %v2517, 4
      %v2523 = vrot.slane %v2519, 4
      %v2524 = vrot.slane %v2521, 4
      %v2525 = vsel %vm419, %v2522, %v2523
      %v2526 = vsel %vm2288, %v2517, %v2525
      %v2527 = vsel %vm419, %v2523, %v2524
      %v2528 = vsel %vm2288, %v2519, %v2527
      %v2529 = vsel %vm2288, %v2521, %v2524
      %2533 = vst [vmem:[#allocation5 + $0x168] sm:$0xff] %v2526
      %2534 = vst [vmem:[#allocation5 + $0x170] sm:$0xff] %v2528
      %2535 = vst.msk [vmem:[#allocation5 + $0x178] sm:$0xf] %vm2090, %v2529
      %v2536 = vld [vmem:[#allocation4 + $0x4] sm:$0xff]
      %v2537 = vld [vmem:[#allocation4 + $0xc] sm:$0xff]
      %v2538 = vld [vmem:[#allocation4 + $0x14] sm:$0xff]
      %2542 = vrot.lane.b32.xlu0 %v2536, 56
      %v2543 = vpop.permute.xlu0 %2542
      %2544 = vrot.lane.b32.xlu0 %v2537, 56
      %v2545 = vpop.permute.xlu0 %2544
      %2546 = vrot.lane.b32.xlu0 %v2538, 56
      %v2547 = vpop.permute.xlu0 %2546
      %v2548 = vrot.slane %v2543, 4
      %v2549 = vrot.slane %v2545, 4
      %v2550 = vrot.slane %v2547, 4
      %v2551 = vsel %vm419, %v2548, %v2549
      %v2552 = vsel %vm2315, %v2543, %v2551
      %v2553 = vsel %vm419, %v2549, %v2550
      %v2554 = vsel %vm2315, %v2545, %v2553
      %v2555 = vsel %vm2315, %v2547, %v2550
      %2559 = vst [vmem:[#allocation5 + $0x17c] sm:$0xff] %v2552
      %2560 = vst [vmem:[#allocation5 + $0x184] sm:$0xff] %v2554
      %2561 = vst.msk [vmem:[#allocation5 + $0x18c] sm:$0xf] %vm2090, %v2555
      %v2562 = vld [vmem:[#allocation4 + $0x8] sm:$0xff]
      %v2563 = vld [vmem:[#allocation4 + $0x10] sm:$0xff]
      %v2564 = vld [vmem:[#allocation4 + $0x18] sm:$0xf]
      %2565 = vst [vmem:[#allocation5 + $0x190] sm:$0xff] %v2562
      %2566 = vst [vmem:[#allocation5 + $0x198] sm:$0xff] %v2563
      %2567 = vst.msk [vmem:[#allocation5 + $0x1a0] sm:$0xf] %vm2090, %v2564
      %v2568 = vld [vmem:[#allocation4 + $0x8] sm:$0xff]
      %v2569 = vld [vmem:[#allocation4 + $0x10] sm:$0xff]
      %v2570 = vld [vmem:[#allocation4 + $0x18] sm:$0xf]
      %2574 = vrot.lane.b32.xlu0 %v2568, 126
      %v2575 = vpop.permute.xlu0 %2574
      %2576 = vrot.lane.b32.xlu0 %v2569, 126
      %v2577 = vpop.permute.xlu0 %2576
      %2578 = vrot.lane.b32.xlu0 %v2570, 126
      %v2579 = vpop.permute.xlu0 %2578
      %v2580 = vrot.slane %v2575, 4
      %v2581 = vrot.slane %v2577, 4
      %v2582 = vrot.slane %v2579, 4
      %v2583 = vsel %vm419, %v2580, %v2581
      %v2584 = vsel %vm456, %v2575, %v2583
      %v2585 = vsel %vm419, %v2581, %v2582
      %v2586 = vsel %vm456, %v2577, %v2585
      %2590 = vst [vmem:[#allocation5 + $0x1a4] sm:$0xff] %v2584
      %2591 = vst [vmem:[#allocation5 + $0x1ac] sm:$0xff] %v2586
      %2592 = vst.msk [vmem:[#allocation5 + $0x1b4] sm:$0xf] %vm2090, %v2579
      %v2593 = vld [vmem:[#allocation4 + $0x8] sm:$0xff]
      %v2594 = vld [vmem:[#allocation4 + $0x10] sm:$0xff]
      %v2595 = vld [vmem:[#allocation4 + $0x18] sm:$0xf]
      %2599 = vrot.lane.b32.xlu0 %v2593, 124
      %v2600 = vpop.permute.xlu0 %2599
      %2601 = vrot.lane.b32.xlu0 %v2594, 124
      %v2602 = vpop.permute.xlu0 %2601
      %2603 = vrot.lane.b32.xlu0 %v2595, 124
      %v2604 = vpop.permute.xlu0 %2603
      %v2605 = vrot.slane %v2600, 4
      %v2606 = vrot.slane %v2602, 4
      %v2607 = vrot.slane %v2604, 4
      %v2608 = vsel %vm419, %v2605, %v2606
      %v2609 = vsel %vm526, %v2600, %v2608
      %v2610 = vsel %vm419, %v2606, %v2607
      %v2611 = vsel %vm526, %v2602, %v2610
      %2615 = vst [vmem:[#allocation5 + $0x1b8] sm:$0xff] %v2609
      %2616 = vst [vmem:[#allocation5 + $0x1c0] sm:$0xff] %v2611
      %2617 = vst.msk [vmem:[#allocation5 + $0x1c8] sm:$0xf] %vm2090, %v2604
      %v2618 = vld [vmem:[#allocation4 + $0x8] sm:$0xff]
      %v2619 = vld [vmem:[#allocation4 + $0x10] sm:$0xff]
      %v2620 = vld [vmem:[#allocation4 + $0x18] sm:$0xf]
      %2624 = vrot.lane.b32.xlu0 %v2618, 122
      %v2625 = vpop.permute.xlu0 %2624
      %2626 = vrot.lane.b32.xlu0 %v2619, 122
      %v2627 = vpop.permute.xlu0 %2626
      %2628 = vrot.lane.b32.xlu0 %v2620, 122
      %v2629 = vpop.permute.xlu0 %2628
      %v2630 = vrot.slane %v2625, 4
      %v2631 = vrot.slane %v2627, 4
      %v2632 = vrot.slane %v2629, 4
      %v2633 = vsel %vm419, %v2630, %v2631
      %v2634 = vsel %vm2158, %v2625, %v2633
      %v2635 = vsel %vm419, %v2631, %v2632
      %v2636 = vsel %vm2158, %v2627, %v2635
      %2640 = vst [vmem:[#allocation5 + $0x1cc] sm:$0xff] %v2634
      %2641 = vst [vmem:[#allocation5 + $0x1d4] sm:$0xff] %v2636
      %2642 = vst.msk [vmem:[#allocation5 + $0x1dc] sm:$0xf] %vm2090, %v2629
      %v2643 = vld [vmem:[#allocation4 + $0x8] sm:$0xff]
      %v2644 = vld [vmem:[#allocation4 + $0x10] sm:$0xff]
      %v2645 = vld [vmem:[#allocation4 + $0x18] sm:$0xf]
      %2649 = vrot.lane.b32.xlu0 %v2643, 120
      %v2650 = vpop.permute.xlu0 %2649
      %2651 = vrot.lane.b32.xlu0 %v2644, 120
      %v2652 = vpop.permute.xlu0 %2651
      %2653 = vrot.lane.b32.xlu0 %v2645, 120
      %v2654 = vpop.permute.xlu0 %2653
      %v2655 = vrot.slane %v2650, 4
      %v2656 = vrot.slane %v2652, 4
      %v2657 = vrot.slane %v2654, 4
      %v2658 = vsel %vm419, %v2655, %v2656
      %v2659 = vsel %vm2184, %v2650, %v2658
      %v2660 = vsel %vm419, %v2656, %v2657
      %v2661 = vsel %vm2184, %v2652, %v2660
      %2665 = vst [vmem:[#allocation5 + $0x1e0] sm:$0xff] %v2659
      %2666 = vst [vmem:[#allocation5 + $0x1e8] sm:$0xff] %v2661
      %2667 = vst.msk [vmem:[#allocation5 + $0x1f0] sm:$0xf] %vm2090, %v2654
      %v2668 = vld [vmem:[%s3] sm:$0xff]
      %v2669 = vld [vmem:[%s3 + $0x8] sm:$0xff]
      %v2670 = vld [vmem:[#allocation5] sm:$0xff]
      %v2671 = vld [vmem:[#allocation5 + $0x8] sm:$0xff]
      %v2672 = vld [vmem:[#allocation5 + $0x10] sm:$0xf]
      %v2673 = vld [vmem:[#allocation5 + $0x14] sm:$0xff]
      %v2674 = vld [vmem:[#allocation5 + $0x1c] sm:$0xff]
      %v2675 = vld [vmem:[#allocation5 + $0x24] sm:$0xf]
      %v2676 = vld [vmem:[#allocation5 + $0x28] sm:$0xff]
      %v2677 = vld [vmem:[#allocation5 + $0x30] sm:$0xff]
      %v2678 = vld [vmem:[#allocation5 + $0x38] sm:$0xf]
      %v2679 = vld [vmem:[#allocation5 + $0x3c] sm:$0xff]
      %v2680 = vld [vmem:[#allocation5 + $0x44] sm:$0xff]
      %v2681 = vld [vmem:[#allocation5 + $0x4c] sm:$0xf]
      %v2682 = vld [vmem:[#allocation5 + $0x50] sm:$0xff]
      %v2683 = vld [vmem:[#allocation5 + $0x58] sm:$0xff]
      %v2684 = vld [vmem:[#allocation5 + $0x60] sm:$0xf]
      %v2685 = vld [vmem:[#allocation5 + $0x64] sm:$0xff]
      %v2686 = vld [vmem:[#allocation5 + $0x6c] sm:$0xff]
      %v2687 = vld [vmem:[#allocation5 + $0x74] sm:$0xf]
      %v2688 = vld [vmem:[#allocation5 + $0x78] sm:$0xff]
      %v2689 = vld [vmem:[#allocation5 + $0x80] sm:$0xff]
      %v2690 = vld [vmem:[#allocation5 + $0x88] sm:$0xf]
      %v2691 = vld [vmem:[#allocation5 + $0x8c] sm:$0xff]
      %v2692 = vld [vmem:[#allocation5 + $0x94] sm:$0xff]
      %v2693 = vld [vmem:[#allocation5 + $0x9c] sm:$0xf]
      %v2694 = vld [vmem:[#allocation5 + $0xa0] sm:$0xff]
      %v2695 = vld [vmem:[#allocation5 + $0xa8] sm:$0xff]
      %v2696 = vld [vmem:[#allocation5 + $0xb0] sm:$0xf]
      %v2697 = vld [vmem:[#allocation5 + $0xb4] sm:$0xff]
      %v2698 = vld [vmem:[#allocation5 + $0xbc] sm:$0xff]
      %v2699 = vld [vmem:[#allocation5 + $0xc4] sm:$0xf]
      %v2700 = vld [vmem:[#allocation5 + $0xc8] sm:$0xff]
      %v2701 = vld [vmem:[#allocation5 + $0xd0] sm:$0xff]
      %v2702 = vld [vmem:[#allocation5 + $0xd8] sm:$0xf]
      %v2703 = vld [vmem:[#allocation5 + $0xdc] sm:$0xff]
      %v2704 = vld [vmem:[#allocation5 + $0xe4] sm:$0xff]
      %v2705 = vld [vmem:[#allocation5 + $0xec] sm:$0xf]
      %v2706 = vld [vmem:[#allocation5 + $0xf0] sm:$0xff]
      %v2707 = vld [vmem:[#allocation5 + $0xf8] sm:$0xff]
      %v2708 = vld [vmem:[#allocation5 + $0x100] sm:$0xf]
      %v2709 = vld [vmem:[#allocation5 + $0x104] sm:$0xff]
      %v2710 = vld [vmem:[#allocation5 + $0x10c] sm:$0xff]
      %v2711 = vld [vmem:[#allocation5 + $0x114] sm:$0xf]
      %v2712 = vld [vmem:[#allocation5 + $0x118] sm:$0xff]
      %v2713 = vld [vmem:[#allocation5 + $0x120] sm:$0xff]
      %v2714 = vld [vmem:[#allocation5 + $0x128] sm:$0xf]
      %v2715 = vld [vmem:[#allocation5 + $0x12c] sm:$0xff]
      %v2716 = vld [vmem:[#allocation5 + $0x134] sm:$0xff]
      %v2717 = vld [vmem:[#allocation5 + $0x13c] sm:$0xf]
      %v2718 = vld [vmem:[#allocation5 + $0x140] sm:$0xff]
      %v2719 = vld [vmem:[#allocation5 + $0x148] sm:$0xff]
      %v2720 = vld [vmem:[#allocation5 + $0x150] sm:$0xf]
      %v2721 = vld [vmem:[#allocation5 + $0x154] sm:$0xff]
      %v2722 = vld [vmem:[#allocation5 + $0x15c] sm:$0xff]
      %v2723 = vld [vmem:[#allocation5 + $0x164] sm:$0xf]
      %v2724 = vld [vmem:[#allocation5 + $0x168] sm:$0xff]
      %v2725 = vld [vmem:[#allocation5 + $0x170] sm:$0xff]
      %v2726 = vld [vmem:[#allocation5 + $0x178] sm:$0xf]
      %v2727 = vld [vmem:[#allocation5 + $0x17c] sm:$0xff]
      %v2728 = vld [vmem:[#allocation5 + $0x184] sm:$0xff]
      %v2729 = vld [vmem:[#allocation5 + $0x18c] sm:$0xf]
      %v2730 = vld [vmem:[#allocation5 + $0x190] sm:$0xff]
      %v2731 = vld [vmem:[#allocation5 + $0x198] sm:$0xff]
      %v2732 = vld [vmem:[#allocation5 + $0x1a0] sm:$0xf]
      %v2733 = vld [vmem:[#allocation5 + $0x1a4] sm:$0xff]
      %v2734 = vld [vmem:[#allocation5 + $0x1ac] sm:$0xff]
      %v2735 = vld [vmem:[#allocation5 + $0x1b4] sm:$0xf]
      %v2736 = vld [vmem:[#allocation5 + $0x1b8] sm:$0xff]
      %v2737 = vld [vmem:[#allocation5 + $0x1c0] sm:$0xff]
      %v2738 = vld [vmem:[#allocation5 + $0x1c8] sm:$0xf]
      %v2739 = vld [vmem:[#allocation5 + $0x1cc] sm:$0xff]
      %v2740 = vld [vmem:[#allocation5 + $0x1d4] sm:$0xff]
      %v2741 = vld [vmem:[#allocation5 + $0x1dc] sm:$0xf]
      %v2742 = vld [vmem:[#allocation5 + $0x1e0] sm:$0xff]
      %v2743 = vld [vmem:[#allocation5 + $0x1e8] sm:$0xff]
      %v2744 = vld [vmem:[#allocation5 + $0x1f0] sm:$0xf]
      %v2745 = vld [vmem:[%s4] sm:$0xff]
      %v2746 = vld [vmem:[%s4 + $0x8] sm:$0xff]
      %2748 = vset.pattern.permute.xlu0 0
      %2749 = vperm.xlu0 %2748, %v2745
      %v2750 = vpop.permute.xlu0 %2749
      %2753 = vset.pattern.permute.xlu0 0
      %2754 = vperm.xlu0 %2753, %v2746
      %v2755 = vpop.permute.xlu0 %2754
      %v2759 = vunpack.c.l.b16 %v2668
      %v2760 = vunpack.c.h.b16 %v2668
      %v2761 = vunpack.c.l.b16 %v2669
      %v2762 = vunpack.c.h.b16 %v2669
      %v2763 = vpack.c.b16 %v2761, %v2759
      %v2764 = vpack.c.b16 %v2762, %v2760
      %v2841 = vunpack.c.l.b16 %v2670
      %v2842 = vunpack.c.h.b16 %v2670
      %v2843 = vunpack.c.l.b16 %v2671
      %v2844 = vunpack.c.h.b16 %v2671
      %v2845 = vunpack.c.l.b16 %v2672
      %v2846 = vunpack.c.l.b16 %v2673
      %v2847 = vunpack.c.h.b16 %v2673
      %v2848 = vunpack.c.l.b16 %v2674
      %v2849 = vunpack.c.h.b16 %v2674
      %v2850 = vunpack.c.l.b16 %v2675
      %v2851 = vunpack.c.l.b16 %v2676
      %v2852 = vunpack.c.h.b16 %v2676
      %v2853 = vunpack.c.l.b16 %v2677
      %v2854 = vunpack.c.h.b16 %v2677
      %v2855 = vunpack.c.l.b16 %v2678
      %v2856 = vunpack.c.l.b16 %v2679
      %v2857 = vunpack.c.h.b16 %v2679
      %v2858 = vunpack.c.l.b16 %v2680
      %v2859 = vunpack.c.h.b16 %v2680
      %v2860 = vunpack.c.l.b16 %v2681
      %v2861 = vunpack.c.l.b16 %v2682
      %v2862 = vunpack.c.h.b16 %v2682
      %v2863 = vunpack.c.l.b16 %v2683
      %v2864 = vunpack.c.h.b16 %v2683
      %v2865 = vunpack.c.l.b16 %v2684
      %v2866 = vunpack.c.l.b16 %v2685
      %v2867 = vunpack.c.h.b16 %v2685
      %v2868 = vunpack.c.l.b16 %v2686
      %v2869 = vunpack.c.h.b16 %v2686
      %v2870 = vunpack.c.l.b16 %v2687
      %v2871 = vunpack.c.l.b16 %v2688
      %v2872 = vunpack.c.h.b16 %v2688
      %v2873 = vunpack.c.l.b16 %v2689
      %v2874 = vunpack.c.h.b16 %v2689
      %v2875 = vunpack.c.l.b16 %v2690
      %v2876 = vunpack.c.l.b16 %v2691
      %v2877 = vunpack.c.h.b16 %v2691
      %v2878 = vunpack.c.l.b16 %v2692
      %v2879 = vunpack.c.h.b16 %v2692
      %v2880 = vunpack.c.l.b16 %v2693
      %v2881 = vunpack.c.l.b16 %v2694
      %v2882 = vunpack.c.h.b16 %v2694
      %v2883 = vunpack.c.l.b16 %v2695
      %v2884 = vunpack.c.h.b16 %v2695
      %v2885 = vunpack.c.l.b16 %v2696
      %v2886 = vunpack.c.l.b16 %v2697
      %v2887 = vunpack.c.h.b16 %v2697
      %v2888 = vunpack.c.l.b16 %v2698
      %v2889 = vunpack.c.h.b16 %v2698
      %v2890 = vunpack.c.l.b16 %v2699
      %v2891 = vunpack.c.l.b16 %v2700
      %v2892 = vunpack.c.h.b16 %v2700
      %v2893 = vunpack.c.l.b16 %v2701
      %v2894 = vunpack.c.h.b16 %v2701
      %v2895 = vunpack.c.l.b16 %v2702
      %v2896 = vunpack.c.l.b16 %v2703
      %v2897 = vunpack.c.h.b16 %v2703
      %v2898 = vunpack.c.l.b16 %v2704
      %v2899 = vunpack.c.h.b16 %v2704
      %v2900 = vunpack.c.l.b16 %v2705
      %v2901 = vunpack.c.l.b16 %v2706
      %v2902 = vunpack.c.h.b16 %v2706
      %v2903 = vunpack.c.l.b16 %v2707
      %v2904 = vunpack.c.h.b16 %v2707
      %v2905 = vunpack.c.l.b16 %v2708
      %v2906 = vunpack.c.l.b16 %v2709
      %v2907 = vunpack.c.h.b16 %v2709
      %v2908 = vunpack.c.l.b16 %v2710
      %v2909 = vunpack.c.h.b16 %v2710
      %v2910 = vunpack.c.l.b16 %v2711
      %v2911 = vunpack.c.l.b16 %v2712
      %v2912 = vunpack.c.h.b16 %v2712
      %v2913 = vunpack.c.l.b16 %v2713
      %v2914 = vunpack.c.h.b16 %v2713
      %v2915 = vunpack.c.l.b16 %v2714
      %v2916 = vunpack.c.l.b16 %v2715
      %v2917 = vunpack.c.h.b16 %v2715
      %v2918 = vunpack.c.l.b16 %v2716
      %v2919 = vunpack.c.h.b16 %v2716
      %v2920 = vunpack.c.l.b16 %v2717
      %v2921 = vunpack.c.l.b16 %v2718
      %v2922 = vunpack.c.h.b16 %v2718
      %v2923 = vunpack.c.l.b16 %v2719
      %v2924 = vunpack.c.h.b16 %v2719
      %v2925 = vunpack.c.l.b16 %v2720
      %v2926 = vunpack.c.l.b16 %v2721
      %v2927 = vunpack.c.h.b16 %v2721
      %v2928 = vunpack.c.l.b16 %v2722
      %v2929 = vunpack.c.h.b16 %v2722
      %v2930 = vunpack.c.l.b16 %v2723
      %v2931 = vunpack.c.l.b16 %v2724
      %v2932 = vunpack.c.h.b16 %v2724
      %v2933 = vunpack.c.l.b16 %v2725
      %v2934 = vunpack.c.h.b16 %v2725
      %v2935 = vunpack.c.l.b16 %v2726
      %v2936 = vunpack.c.l.b16 %v2727
      %v2937 = vunpack.c.h.b16 %v2727
      %v2938 = vunpack.c.l.b16 %v2728
      %v2939 = vunpack.c.h.b16 %v2728
      %v2940 = vunpack.c.l.b16 %v2729
      %v2941 = vunpack.c.l.b16 %v2730
      %v2942 = vunpack.c.h.b16 %v2730
      %v2943 = vunpack.c.l.b16 %v2731
      %v2944 = vunpack.c.h.b16 %v2731
      %v2945 = vunpack.c.l.b16 %v2732
      %v2946 = vunpack.c.l.b16 %v2733
      %v2947 = vunpack.c.h.b16 %v2733
      %v2948 = vunpack.c.l.b16 %v2734
      %v2949 = vunpack.c.h.b16 %v2734
      %v2950 = vunpack.c.l.b16 %v2735
      %v2951 = vunpack.c.l.b16 %v2736
      %v2952 = vunpack.c.h.b16 %v2736
      %v2953 = vunpack.c.l.b16 %v2737
      %v2954 = vunpack.c.h.b16 %v2737
      %v2955 = vunpack.c.l.b16 %v2738
      %v2956 = vunpack.c.l.b16 %v2739
      %v2957 = vunpack.c.h.b16 %v2739
      %v2958 = vunpack.c.l.b16 %v2740
      %v2959 = vunpack.c.h.b16 %v2740
      %v2960 = vunpack.c.l.b16 %v2741
      %v2961 = vunpack.c.l.b16 %v2742
      %v2962 = vunpack.c.h.b16 %v2742
      %v2963 = vunpack.c.l.b16 %v2743
      %v2964 = vunpack.c.h.b16 %v2743
      %v2965 = vunpack.c.l.b16 %v2744
      %v2966 = vpack.c.b16 %v2846, %v2841
      %v2967 = vpack.c.b16 %v2847, %v2842
      %v2968 = vpack.c.b16 %v2848, %v2843
      %v2969 = vpack.c.b16 %v2849, %v2844
      %v2970 = vpack.c.b16 %v2850, %v2845
      %v2971 = vpack.c.b16 %v2856, %v2851
      %v2972 = vpack.c.b16 %v2857, %v2852
      %v2973 = vpack.c.b16 %v2858, %v2853
      %v2974 = vpack.c.b16 %v2859, %v2854
      %v2975 = vpack.c.b16 %v2860, %v2855
      %v2976 = vpack.c.b16 %v2866, %v2861
      %v2977 = vpack.c.b16 %v2867, %v2862
      %v2978 = vpack.c.b16 %v2868, %v2863
      %v2979 = vpack.c.b16 %v2869, %v2864
      %v2980 = vpack.c.b16 %v2870, %v2865
      %v2981 = vpack.c.b16 %v2876, %v2871
      %v2982 = vpack.c.b16 %v2877, %v2872
      %v2983 = vpack.c.b16 %v2878, %v2873
      %v2984 = vpack.c.b16 %v2879, %v2874
      %v2985 = vpack.c.b16 %v2880, %v2875
      %v2986 = vpack.c.b16 %v2886, %v2881
      %v2987 = vpack.c.b16 %v2887, %v2882
      %v2988 = vpack.c.b16 %v2888, %v2883
      %v2989 = vpack.c.b16 %v2889, %v2884
      %v2990 = vpack.c.b16 %v2890, %v2885
      %v2991 = vpack.c.b16 %v2896, %v2891
      %v2992 = vpack.c.b16 %v2897, %v2892
      %v2993 = vpack.c.b16 %v2898, %v2893
      %v2994 = vpack.c.b16 %v2899, %v2894
      %v2995 = vpack.c.b16 %v2900, %v2895
      %v2996 = vpack.c.b16 %v2906, %v2901
      %v2997 = vpack.c.b16 %v2907, %v2902
      %v2998 = vpack.c.b16 %v2908, %v2903
      %v2999 = vpack.c.b16 %v2909, %v2904
      %v3000 = vpack.c.b16 %v2910, %v2905
      %v3001 = vpack.c.b16 %v2916, %v2911
      %v3002 = vpack.c.b16 %v2917, %v2912
      %v3003 = vpack.c.b16 %v2918, %v2913
      %v3004 = vpack.c.b16 %v2919, %v2914
      %v3005 = vpack.c.b16 %v2920, %v2915
      %v3006 = vpack.c.b16 %v2926, %v2921
      %v3007 = vpack.c.b16 %v2927, %v2922
      %v3008 = vpack.c.b16 %v2928, %v2923
      %v3009 = vpack.c.b16 %v2929, %v2924
      %v3010 = vpack.c.b16 %v2930, %v2925
      %v3011 = vpack.c.b16 %v2936, %v2931
      %v3012 = vpack.c.b16 %v2937, %v2932
      %v3013 = vpack.c.b16 %v2938, %v2933
      %v3014 = vpack.c.b16 %v2939, %v2934
      %v3015 = vpack.c.b16 %v2940, %v2935
      %v3016 = vpack.c.b16 %v2946, %v2941
      %v3017 = vpack.c.b16 %v2947, %v2942
      %v3018 = vpack.c.b16 %v2948, %v2943
      %v3019 = vpack.c.b16 %v2949, %v2944
      %v3020 = vpack.c.b16 %v2950, %v2945
      %v3021 = vpack.c.b16 %v2956, %v2951
      %v3022 = vpack.c.b16 %v2957, %v2952
      %v3023 = vpack.c.b16 %v2958, %v2953
      %v3024 = vpack.c.b16 %v2959, %v2954
      %v3025 = vpack.c.b16 %v2960, %v2955
      %v3026 = vpack.c.b16 %v2961, %v2961
      %v3027 = vpack.c.b16 %v2962, %v2962
      %v3028 = vpack.c.b16 %v2963, %v2963
      %v3029 = vpack.c.b16 %v2964, %v2964
      %v3030 = vpack.c.b16 %v2965, %v2965
      %v3092 = vsel %vm1787, %v2764, 0
      %v3095 = vsel %vm1791, %v3026, 0
      %v3098 = vsel %vm1791, %v3027, 0
      %v3101 = vsel %vm1791, %v3028, 0
      %v3104 = vsel %vm1791, %v3029, 0
      %v3107 = vsel %vm1791, %v3030, 0
      %3109 = vmatprep.subr.bf16.mxu0 %v2967
      %3110 = vmatpush1.bf16.msra.mxu0 %v2966
      %3111 = vmatprep.subr.bf16.mxu0 %v2972
      %3112 = vmatpush1.bf16.msra.mxu0 %v2971
      %3113 = vmatprep.subr.bf16.mxu0 %v2977
      %3114 = vmatpush1.bf16.msra.mxu0 %v2976
      %3115 = vmatprep.subr.bf16.mxu0 %v2982
      %3116 = vmatpush1.bf16.msra.mxu0 %v2981
      %3117 = vmatprep.subr.bf16.mxu0 %v2987
      %3118 = vmatpush1.bf16.msra.mxu0 %v2986
      %3119 = vmatprep.subr.bf16.mxu0 %v2992
      %3120 = vmatpush1.bf16.msra.mxu0 %v2991
      %3121 = vmatprep.subr.bf16.mxu0 %v2997
      %3122 = vmatpush1.bf16.msra.mxu0 %v2996
      %3123 = vmatprep.subr.bf16.mxu0 %v3002
      %3124 = vmatpush1.bf16.msra.mxu0 %v3001
      %3125 = vmatprep.subr.bf16.mxu0 %v3007
      %3126 = vmatpush1.bf16.msra.mxu0 %v3006
      %3127 = vmatprep.subr.bf16.mxu0 %v3012
      %3128 = vmatpush1.bf16.msra.mxu0 %v3011
      %3129 = vmatprep.subr.bf16.mxu0 %v3017
      %3130 = vmatpush1.bf16.msra.mxu0 %v3016
      %3131 = vmatprep.subr.bf16.mxu0 %v3022
      %3132 = vmatpush1.bf16.msra.mxu0 %v3021
      %3133 = vmatprep.subr.bf16.mxu0 %v3098
      %3134 = vmatpush1.bf16.msra.mxu0 %v3095
      %3135 = vmatprep.subr.bf16.mxu0 0
      %3136 = vmatpush1.bf16.msra.mxu0 0
      %3137 = vmatprep.subr.bf16.mxu0 0
      %3138 = vmatpush1.bf16.msra.mxu0 0
      %3139 = vmatprep.subr.bf16.mxu0 0
      %3140 = vmatpush1.bf16.msra.mxu0 0
      %3141 = vmatprep.mubr.bf16.mxu0 %v3092
      %3142 = vmatmul.mubr.bf16.gmra.mrb[0].mxu0 %v2763
      %v3143 = vpop.f32.mrb[0].mxu0
      %v3144 = vadd.f32 %v2750, %v3143
      %v3145 = vpop.f32.mrb[0].mxu0
      %v3146 = vadd.f32 %v2750, %v3145
      %v3147 = vpop.f32.mrb[0].mxu0
      %v3148 = vadd.f32 %v2755, %v3147
      %v3149 = vpop.f32.mrb[0].mxu0
      %v3150 = vadd.f32 %v2755, %v3149
      %3151 = vdwg.mxu0
      %3152 = vmatprep.subr.bf16.mxu0 %v2969
      %3153 = vmatpush1.bf16.msra.mxu0 %v2968
      %3154 = vmatprep.subr.bf16.mxu0 %v2974
      %3155 = vmatpush1.bf16.msra.mxu0 %v2973
      %3156 = vmatprep.subr.bf16.mxu0 %v2979
      %3157 = vmatpush1.bf16.msra.mxu0 %v2978
      %3158 = vmatprep.subr.bf16.mxu0 %v2984
      %3159 = vmatpush1.bf16.msra.mxu0 %v2983
      %3160 = vmatprep.subr.bf16.mxu0 %v2989
      %3161 = vmatpush1.bf16.msra.mxu0 %v2988
      %3162 = vmatprep.subr.bf16.mxu0 %v2994
      %3163 = vmatpush1.bf16.msra.mxu0 %v2993
      %3164 = vmatprep.subr.bf16.mxu0 %v2999
      %3165 = vmatpush1.bf16.msra.mxu0 %v2998
      %3166 = vmatprep.subr.bf16.mxu0 %v3004
      %3167 = vmatpush1.bf16.msra.mxu0 %v3003
      %3168 = vmatprep.subr.bf16.mxu0 %v3009
      %3169 = vmatpush1.bf16.msra.mxu0 %v3008
      %3170 = vmatprep.subr.bf16.mxu0 %v3014
      %3171 = vmatpush1.bf16.msra.mxu0 %v3013
      %3172 = vmatprep.subr.bf16.mxu0 %v3019
      %3173 = vmatpush1.bf16.msra.mxu0 %v3018
      %3174 = vmatprep.subr.bf16.mxu0 %v3024
      %3175 = vmatpush1.bf16.msra.mxu0 %v3023
      %3176 = vmatprep.subr.bf16.mxu0 %v3104
      %3177 = vmatpush1.bf16.msra.mxu0 %v3101
      %3178 = vmatprep.subr.bf16.mxu0 0
      %3179 = vmatpush1.bf16.msra.mxu0 0
      %3180 = vmatprep.subr.bf16.mxu0 0
      %3181 = vmatpush1.bf16.msra.mxu0 0
      %3182 = vmatprep.subr.bf16.mxu0 0
      %3183 = vmatpush1.bf16.msra.mxu0 0
      %3184 = vmatprep.mubr.bf16.mxu0 %v3092
      %3185 = vmatmul.mubr.bf16.gmra.mrb[0].mxu0 %v2763
      %v3186 = vpop.f32.mrb[0].mxu0
      %v3187 = vadd.f32 %v2750, %v3186
      %v3188 = vpop.f32.mrb[0].mxu0
      %v3189 = vadd.f32 %v2750, %v3188
      %v3190 = vpop.f32.mrb[0].mxu0
      %v3191 = vadd.f32 %v2755, %v3190
      %v3192 = vpop.f32.mrb[0].mxu0
      %v3193 = vadd.f32 %v2755, %v3192
      %3194 = vdwg.mxu0
      %3195 = vmatprep.subr.bf16.mxu0 0
      %3196 = vmatpush1.bf16.msra.mxu0 %v2970
      %3197 = vmatprep.subr.bf16.mxu0 0
      %3198 = vmatpush1.bf16.msra.mxu0 %v2975
      %3199 = vmatprep.subr.bf16.mxu0 0
      %3200 = vmatpush1.bf16.msra.mxu0 %v2980
      %3201 = vmatprep.subr.bf16.mxu0 0
      %3202 = vmatpush1.bf16.msra.mxu0 %v2985
      %3203 = vmatprep.subr.bf16.mxu0 0
      %3204 = vmatpush1.bf16.msra.mxu0 %v2990
      %3205 = vmatprep.subr.bf16.mxu0 0
      %3206 = vmatpush1.bf16.msra.mxu0 %v2995
      %3207 = vmatprep.subr.bf16.mxu0 0
      %3208 = vmatpush1.bf16.msra.mxu0 %v3000
      %3209 = vmatprep.subr.bf16.mxu0 0
      %3210 = vmatpush1.bf16.msra.mxu0 %v3005
      %3211 = vmatprep.subr.bf16.mxu0 0
      %3212 = vmatpush1.bf16.msra.mxu0 %v3010
      %3213 = vmatprep.subr.bf16.mxu0 0
      %3214 = vmatpush1.bf16.msra.mxu0 %v3015
      %3215 = vmatprep.subr.bf16.mxu0 0
      %3216 = vmatpush1.bf16.msra.mxu0 %v3020
      %3217 = vmatprep.subr.bf16.mxu0 0
      %3218 = vmatpush1.bf16.msra.mxu0 %v3025
      %3219 = vmatprep.subr.bf16.mxu0 0
      %3220 = vmatpush1.bf16.msra.mxu0 %v3107
      %3221 = vmatprep.subr.bf16.mxu0 0
      %3222 = vmatpush1.bf16.msra.mxu0 0
      %3223 = vmatprep.subr.bf16.mxu0 0
      %3224 = vmatpush1.bf16.msra.mxu0 0
      %3225 = vmatprep.subr.bf16.mxu0 0
      %3226 = vmatpush1.bf16.msra.mxu0 0
      %3227 = vmatprep.mubr.bf16.mxu0 %v3092
      %3228 = vmatmul.mubr.bf16.gmra.mrb[0].mxu0 %v2763
      %v3229 = vpop.f32.mrb[0].mxu0
      %v3230 = vadd.f32 %v2750, %v3229
      %v3231 = vpop.f32.mrb[0].mxu0
      %v3232 = vpop.f32.mrb[0].mxu0
      %v3233 = vadd.f32 %v2755, %v3232
      %v3234 = vpop.f32.mrb[0].mxu0
      %3235 = vdwg.mxu0
      %v3236 = vmax.f32 %v3144, 0.0
      %v3237 = vmax.f32 %v3146, 0.0
      %v3238 = vmax.f32 %v3187, 0.0
      %v3239 = vmax.f32 %v3189, 0.0
      %v3240 = vmax.f32 %v3230, 0.0
      %v3241 = vmax.f32 %v3148, 0.0
      %v3242 = vmax.f32 %v3150, 0.0
      %v3243 = vmax.f32 %v3191, 0.0
      %v3244 = vmax.f32 %v3193, 0.0
      %v3245 = vmax.f32 %v3233, 0.0
      %v3246 = vpack.c.bf16 %v3241, %v3236
      %v3247 = vpack.c.bf16 %v3242, %v3237
      %v3248 = vpack.c.bf16 %v3243, %v3238
      %v3249 = vpack.c.bf16 %v3244, %v3239
      %v3250 = vpack.c.bf16 %v3245, %v3240
      %3251 = vst [vmem:[#allocation6] sm:$0xff] %v3246
      %3252 = vst [vmem:[#allocation6 + $0x8] sm:$0xff] %v3247
      %3253 = vst [vmem:[#allocation6 + $0x10] sm:$0xff] %v3248
      %3254 = vst [vmem:[#allocation6 + $0x18] sm:$0xff] %v3249
      %vm3255 = vcmask 678912
      %3256 = vst.msk [vmem:[#allocation6 + $0x20] sm:$0xff] %vm3255, %v3250
      %v3257 = vld [vmem:[#allocation6] sm:$0xff]
      %v3258 = vld [vmem:[#allocation6 + $0x8] sm:$0xff]
      %v3259 = vld [vmem:[#allocation6 + $0x10] sm:$0xff]
      %v3260 = vld [vmem:[#allocation6 + $0x18] sm:$0xff]
      %v3261 = vld [vmem:[#allocation6 + $0x20] sm:$0xff]
      %3267 = vrot.lane.b32.xlu0 %v3257, 126
      %v3268 = vpop.permute.xlu0 %3267
      %3269 = vrot.lane.b32.xlu0 %v3258, 126
      %v3270 = vpop.permute.xlu0 %3269
      %3271 = vrot.lane.b32.xlu0 %v3259, 126
      %v3272 = vpop.permute.xlu0 %3271
      %3273 = vrot.lane.b32.xlu0 %v3260, 126
      %v3274 = vpop.permute.xlu0 %3273
      %3275 = vrot.lane.b32.xlu0 %v3261, 126
      %v3276 = vpop.permute.xlu0 %3275
      %v3277 = vsel %vm456, %v3268, %v3270
      %v3278 = vsel %vm456, %v3270, %v3272
      %v3279 = vsel %vm456, %v3272, %v3274
      %v3280 = vsel %vm456, %v3274, %v3276
      %v3286 = vmax.bf16 %v3257, %v3277
      %v3287 = vmax.bf16 %v3258, %v3278
      %v3288 = vmax.bf16 %v3259, %v3279
      %v3289 = vmax.bf16 %v3260, %v3280
      %v3290 = vmax.bf16 %v3261, %v3276
      %3296 = vrot.lane.b32.xlu0 %v3286, 64
      %v3297 = vpop.permute.xlu0 %3296
      %3298 = vrot.lane.b32.xlu0 %v3287, 64
      %v3299 = vpop.permute.xlu0 %3298
      %3300 = vrot.lane.b32.xlu0 %v3288, 64
      %v3301 = vpop.permute.xlu0 %3300
      %3302 = vrot.lane.b32.xlu0 %v3289, 64
      %v3303 = vpop.permute.xlu0 %3302
      %3304 = vrot.lane.b32.xlu0 %v3290, 64
      %v3305 = vpop.permute.xlu0 %3304
      %v3306 = vsel %vm741, %v3297, %v3299
      %v3307 = vsel %vm741, %v3299, %v3301
      %v3308 = vsel %vm741, %v3301, %v3303
      %v3309 = vsel %vm741, %v3303, %v3305
      %v3315 = vmax.bf16 %v3286, %v3306
      %v3316 = vmax.bf16 %v3287, %v3307
      %v3317 = vmax.bf16 %v3288, %v3308
      %v3318 = vmax.bf16 %v3289, %v3309
      %v3319 = vmax.bf16 %v3290, %v3305
      %3320 = vst [vmem:[#allocation7] sm:$0xff] %v3315
      %3321 = vst [vmem:[#allocation7 + $0x8] sm:$0xff] %v3316
      %3322 = vst [vmem:[#allocation7 + $0x10] sm:$0xff] %v3317
      %3323 = vst [vmem:[#allocation7 + $0x18] sm:$0xff] %v3318
      %vm3324 = vcmask 138240
      %3325 = vst.msk [vmem:[#allocation7 + $0x20] sm:$0xff] %vm3324, %v3319
      %v3326 = vld [vmem:[#allocation7] sm:$0xff]
      %vm3327 = vcmask 7168
      %3328 = vst.msk [vmem:[#allocation8] sm:$0xff] %vm3327, %v3326
      %v3329 = vld [vmem:[#allocation7] sm:$0xff]
      %3331 = vrot.lane.b32.xlu0 %v3329, 124
      %v3332 = vpop.permute.xlu0 %3331
      %3334 = vst.msk [vmem:[#allocation8 + $0x8] sm:$0xff] %vm3327, %v3332
      %v3335 = vld [vmem:[#allocation7] sm:$0xff]
      %3337 = vrot.lane.b32.xlu0 %v3335, 120
      %v3338 = vpop.permute.xlu0 %3337
      %3340 = vst.msk [vmem:[#allocation8 + $0x10] sm:$0xff] %vm3327, %v3338
      %v3341 = vld [vmem:[#allocation7] sm:$0xff]
      %3343 = vrot.lane.b32.xlu0 %v3341, 116
      %v3344 = vpop.permute.xlu0 %3343
      %3346 = vst.msk [vmem:[#allocation8 + $0x18] sm:$0xff] %vm3327, %v3344
      %v3347 = vld [vmem:[#allocation7] sm:$0xff]
      %3349 = vrot.lane.b32.xlu0 %v3347, 112
      %v3350 = vpop.permute.xlu0 %3349
      %3352 = vst.msk [vmem:[#allocation8 + $0x20] sm:$0xff] %vm3327, %v3350
      %v3353 = vld [vmem:[#allocation7 + $0x8] sm:$0xff]
      %3354 = vst.msk [vmem:[#allocation8 + $0x28] sm:$0xff] %vm3327, %v3353
      %v3355 = vld [vmem:[#allocation7 + $0x8] sm:$0xff]
      %3357 = vrot.lane.b32.xlu0 %v3355, 124
      %v3358 = vpop.permute.xlu0 %3357
      %3360 = vst.msk [vmem:[#allocation8 + $0x30] sm:$0xff] %vm3327, %v3358
      %v3361 = vld [vmem:[#allocation7 + $0x8] sm:$0xff]
      %3363 = vrot.lane.b32.xlu0 %v3361, 120
      %v3364 = vpop.permute.xlu0 %3363
      %3366 = vst.msk [vmem:[#allocation8 + $0x38] sm:$0xff] %vm3327, %v3364
      %v3367 = vld [vmem:[#allocation7 + $0x8] sm:$0xff]
      %3369 = vrot.lane.b32.xlu0 %v3367, 116
      %v3370 = vpop.permute.xlu0 %3369
      %3372 = vst.msk [vmem:[#allocation8 + $0x40] sm:$0xff] %vm3327, %v3370
      %v3373 = vld [vmem:[#allocation7 + $0x8] sm:$0xff]
      %3375 = vrot.lane.b32.xlu0 %v3373, 112
      %v3376 = vpop.permute.xlu0 %3375
      %3378 = vst.msk [vmem:[#allocation8 + $0x48] sm:$0xff] %vm3327, %v3376
      %v3379 = vld [vmem:[#allocation7 + $0x10] sm:$0xff]
      %3380 = vst.msk [vmem:[#allocation8 + $0x50] sm:$0xff] %vm3327, %v3379
      %v3381 = vld [vmem:[#allocation7 + $0x10] sm:$0xff]
      %3383 = vrot.lane.b32.xlu0 %v3381, 124
      %v3384 = vpop.permute.xlu0 %3383
      %3386 = vst.msk [vmem:[#allocation8 + $0x58] sm:$0xff] %vm3327, %v3384
      %v3387 = vld [vmem:[#allocation7 + $0x10] sm:$0xff]
      %3389 = vrot.lane.b32.xlu0 %v3387, 120
      %v3390 = vpop.permute.xlu0 %3389
      %3392 = vst.msk [vmem:[#allocation8 + $0x60] sm:$0xff] %vm3327, %v3390
      %v3393 = vld [vmem:[#allocation7 + $0x10] sm:$0xff]
      %3395 = vrot.lane.b32.xlu0 %v3393, 116
      %v3396 = vpop.permute.xlu0 %3395
      %3398 = vst.msk [vmem:[#allocation8 + $0x68] sm:$0xff] %vm3327, %v3396
      %v3399 = vld [vmem:[#allocation7 + $0x10] sm:$0xff]
      %3401 = vrot.lane.b32.xlu0 %v3399, 112
      %v3402 = vpop.permute.xlu0 %3401
      %3404 = vst.msk [vmem:[#allocation8 + $0x70] sm:$0xff] %vm3327, %v3402
      %v3405 = vld [vmem:[#allocation7 + $0x18] sm:$0xff]
      %3406 = vst.msk [vmem:[#allocation8 + $0x78] sm:$0xff] %vm3327, %v3405
      %v3407 = vld [vmem:[#allocation7 + $0x18] sm:$0xff]
      %3409 = vrot.lane.b32.xlu0 %v3407, 124
      %v3410 = vpop.permute.xlu0 %3409
      %3412 = vst.msk [vmem:[#allocation8 + $0x80] sm:$0xff] %vm3327, %v3410
      %v3413 = vld [vmem:[#allocation7 + $0x18] sm:$0xff]
      %3415 = vrot.lane.b32.xlu0 %v3413, 120
      %v3416 = vpop.permute.xlu0 %3415
      %3418 = vst.msk [vmem:[#allocation8 + $0x88] sm:$0xff] %vm3327, %v3416
      %v3419 = vld [vmem:[#allocation7 + $0x18] sm:$0xff]
      %3421 = vrot.lane.b32.xlu0 %v3419, 116
      %v3422 = vpop.permute.xlu0 %3421
      %3424 = vst.msk [vmem:[#allocation8 + $0x90] sm:$0xff] %vm3327, %v3422
      %v3425 = vld [vmem:[#allocation7 + $0x18] sm:$0xff]
      %3427 = vrot.lane.b32.xlu0 %v3425, 112
      %v3428 = vpop.permute.xlu0 %3427
      %3430 = vst.msk [vmem:[#allocation8 + $0x98] sm:$0xff] %vm3327, %v3428
      %v3431 = vld [vmem:[#allocation7 + $0x20] sm:$0xff]
      %3432 = vst.msk [vmem:[#allocation8 + $0xa0] sm:$0xff] %vm3327, %v3431
      %v3433 = vld [vmem:[#allocation7 + $0x20] sm:$0xff]
      %3435 = vrot.lane.b32.xlu0 %v3433, 124
      %v3436 = vpop.permute.xlu0 %3435
      %3438 = vst.msk [vmem:[#allocation8 + $0xa8] sm:$0xff] %vm3327, %v3436
      %v3439 = vld [vmem:[#allocation7 + $0x20] sm:$0xff]
      %3441 = vrot.lane.b32.xlu0 %v3439, 120
      %v3442 = vpop.permute.xlu0 %3441
      %3444 = vst.msk [vmem:[#allocation8 + $0xb0] sm:$0xff] %vm3327, %v3442
      %v3445 = vld [vmem:[#allocation7 + $0x20] sm:$0xff]
      %3447 = vrot.lane.b32.xlu0 %v3445, 116
      %v3448 = vpop.permute.xlu0 %3447
      %3450 = vst.msk [vmem:[#allocation8 + $0xb8] sm:$0xff] %vm3327, %v3448
      %v3451 = vld [vmem:[#allocation7 + $0x20] sm:$0xff]
      %3453 = vrot.lane.b32.xlu0 %v3451, 112
      %v3454 = vpop.permute.xlu0 %3453
      %3456 = vst.msk [vmem:[#allocation8 + $0xc0] sm:$0xff] %vm3327, %v3454
      %v3457 = vld [vmem:[%s5] sm:$0xff]
      %v3458 = vld [vmem:[%s5 + $0x8] sm:$0xff]
      %v3459 = vld [vmem:[%s5 + $0x10] sm:$0xff]
      %v3460 = vld [vmem:[%s5 + $0x18] sm:$0xff]
      %v3461 = vld [vmem:[%s5 + $0x20] sm:$0xff]
      %v3462 = vld [vmem:[%s5 + $0x28] sm:$0xff]
      %v3463 = vld [vmem:[%s5 + $0x30] sm:$0xff]
      %v3464 = vld [vmem:[%s5 + $0x38] sm:$0xff]
      %v3465 = vld [vmem:[%s5 + $0x40] sm:$0xff]
      %v3466 = vld [vmem:[%s5 + $0x48] sm:$0xff]
      %v3467 = vld [vmem:[%s5 + $0x50] sm:$0xff]
      %v3468 = vld [vmem:[%s5 + $0x58] sm:$0xff]
      %v3469 = vld [vmem:[%s5 + $0x60] sm:$0xff]
      %v3470 = vld [vmem:[%s5 + $0x68] sm:$0xff]
      %v3471 = vld [vmem:[%s5 + $0x70] sm:$0xff]
      %v3472 = vld [vmem:[%s5 + $0x78] sm:$0xff]
      %v3473 = vld [vmem:[%s5 + $0x80] sm:$0xff]
      %v3474 = vld [vmem:[%s5 + $0x88] sm:$0xff]
      %v3475 = vld [vmem:[%s5 + $0x90] sm:$0xff]
      %v3476 = vld [vmem:[%s5 + $0x98] sm:$0xff]
      %v3477 = vld [vmem:[%s5 + $0xa0] sm:$0xff]
      %v3478 = vld [vmem:[%s5 + $0xa8] sm:$0xff]
      %v3479 = vld [vmem:[%s5 + $0xb0] sm:$0xff]
      %v3480 = vld [vmem:[%s5 + $0xb8] sm:$0xff]
      %v3481 = vld [vmem:[%s5 + $0xc0] sm:$0xff]
      %v3482 = vld [vmem:[%s5 + $0xc8] sm:$0xff]
      %v3483 = vld [vmem:[%s5 + $0xd0] sm:$0xff]
      %v3484 = vld [vmem:[%s5 + $0xd8] sm:$0xff]
      %v3485 = vld [vmem:[%s5 + $0xe0] sm:$0xff]
      %v3486 = vld [vmem:[%s5 + $0xe8] sm:$0xff]
      %v3487 = vld [vmem:[#allocation8] sm:$0xff]
      %v3488 = vld [vmem:[#allocation8 + $0x8] sm:$0xff]
      %v3489 = vld [vmem:[#allocation8 + $0x10] sm:$0xff]
      %v3490 = vld [vmem:[#allocation8 + $0x18] sm:$0xff]
      %v3491 = vld [vmem:[#allocation8 + $0x20] sm:$0xff]
      %v3492 = vld [vmem:[#allocation8 + $0x28] sm:$0xff]
      %v3493 = vld [vmem:[#allocation8 + $0x30] sm:$0xff]
      %v3494 = vld [vmem:[#allocation8 + $0x38] sm:$0xff]
      %v3495 = vld [vmem:[#allocation8 + $0x40] sm:$0xff]
      %v3496 = vld [vmem:[#allocation8 + $0x48] sm:$0xff]
      %v3497 = vld [vmem:[#allocation8 + $0x50] sm:$0xff]
      %v3498 = vld [vmem:[#allocation8 + $0x58] sm:$0xff]
      %v3499 = vld [vmem:[#allocation8 + $0x60] sm:$0xff]
      %v3500 = vld [vmem:[#allocation8 + $0x68] sm:$0xff]
      %v3501 = vld [vmem:[#allocation8 + $0x70] sm:$0xff]
      %v3502 = vld [vmem:[#allocation8 + $0x78] sm:$0xff]
      %v3503 = vld [vmem:[#allocation8 + $0x80] sm:$0xff]
      %v3504 = vld [vmem:[#allocation8 + $0x88] sm:$0xff]
      %v3505 = vld [vmem:[#allocation8 + $0x90] sm:$0xff]
      %v3506 = vld [vmem:[#allocation8 + $0x98] sm:$0xff]
      %v3507 = vld [vmem:[#allocation8 + $0xa0] sm:$0xff]
      %v3508 = vld [vmem:[#allocation8 + $0xa8] sm:$0xff]
      %v3509 = vld [vmem:[#allocation8 + $0xb0] sm:$0xff]
      %v3510 = vld [vmem:[#allocation8 + $0xb8] sm:$0xff]
      %v3511 = vld [vmem:[#allocation8 + $0xc0] sm:$0xff]
      %v3512 = vld [vmem:[%s6] sm:$0xff]
      %v3513 = vld [vmem:[%s6 + $0x8] sm:$0xff]
      %v3514 = vld [vmem:[%s6 + $0x10] sm:$0xff]
      %v3515 = vld [vmem:[%s6 + $0x18] sm:$0xff]
      %v3516 = vld [vmem:[%s6 + $0x20] sm:$0xff]
      %v3517 = vld [vmem:[%s6 + $0x28] sm:$0xff]
      %v3518 = vld [vmem:[%s6 + $0x30] sm:$0xff]
      %v3519 = vld [vmem:[%s6 + $0x38] sm:$0xff]
      %v3520 = vld [vmem:[%s6 + $0x40] sm:$0xff]
      %v3521 = vld [vmem:[%s6 + $0x48] sm:$0xff]
      %v3522 = vld [vmem:[%s6 + $0x50] sm:$0xff]
      %v3523 = vld [vmem:[%s6 + $0x58] sm:$0xff]
      %v3524 = vld [vmem:[%s6 + $0x60] sm:$0xff]
      %v3525 = vld [vmem:[%s6 + $0x68] sm:$0xff]
      %v3526 = vld [vmem:[%s6 + $0x70] sm:$0xff]
      %v3557 = vunpack.c.l.b16 %v3457
      %v3558 = vunpack.c.h.b16 %v3457
      %v3559 = vunpack.c.l.b16 %v3458
      %v3560 = vunpack.c.h.b16 %v3458
      %v3561 = vunpack.c.l.b16 %v3459
      %v3562 = vunpack.c.h.b16 %v3459
      %v3563 = vunpack.c.l.b16 %v3460
      %v3564 = vunpack.c.h.b16 %v3460
      %v3565 = vunpack.c.l.b16 %v3461
      %v3566 = vunpack.c.h.b16 %v3461
      %v3567 = vunpack.c.l.b16 %v3462
      %v3568 = vunpack.c.h.b16 %v3462
      %v3569 = vunpack.c.l.b16 %v3463
      %v3570 = vunpack.c.h.b16 %v3463
      %v3571 = vunpack.c.l.b16 %v3464
      %v3572 = vunpack.c.h.b16 %v3464
      %v3573 = vunpack.c.l.b16 %v3465
      %v3574 = vunpack.c.h.b16 %v3465
      %v3575 = vunpack.c.l.b16 %v3466
      %v3576 = vunpack.c.h.b16 %v3466
      %v3577 = vunpack.c.l.b16 %v3467
      %v3578 = vunpack.c.h.b16 %v3467
      %v3579 = vunpack.c.l.b16 %v3468
      %v3580 = vunpack.c.h.b16 %v3468
      %v3581 = vunpack.c.l.b16 %v3469
      %v3582 = vunpack.c.h.b16 %v3469
      %v3583 = vunpack.c.l.b16 %v3470
      %v3584 = vunpack.c.h.b16 %v3470
      %v3585 = vunpack.c.l.b16 %v3471
      %v3586 = vunpack.c.h.b16 %v3471
      %v3587 = vunpack.c.l.b16 %v3472
      %v3588 = vunpack.c.h.b16 %v3472
      %v3589 = vunpack.c.l.b16 %v3473
      %v3590 = vunpack.c.h.b16 %v3473
      %v3591 = vunpack.c.l.b16 %v3474
      %v3592 = vunpack.c.h.b16 %v3474
      %v3593 = vunpack.c.l.b16 %v3475
      %v3594 = vunpack.c.h.b16 %v3475
      %v3595 = vunpack.c.l.b16 %v3476
      %v3596 = vunpack.c.h.b16 %v3476
      %v3597 = vunpack.c.l.b16 %v3477
      %v3598 = vunpack.c.h.b16 %v3477
      %v3599 = vunpack.c.l.b16 %v3478
      %v3600 = vunpack.c.h.b16 %v3478
      %v3601 = vunpack.c.l.b16 %v3479
      %v3602 = vunpack.c.h.b16 %v3479
      %v3603 = vunpack.c.l.b16 %v3480
      %v3604 = vunpack.c.h.b16 %v3480
      %v3605 = vunpack.c.l.b16 %v3481
      %v3606 = vunpack.c.h.b16 %v3481
      %v3607 = vunpack.c.l.b16 %v3482
      %v3608 = vunpack.c.h.b16 %v3482
      %v3609 = vunpack.c.l.b16 %v3483
      %v3610 = vunpack.c.h.b16 %v3483
      %v3611 = vunpack.c.l.b16 %v3484
      %v3612 = vunpack.c.h.b16 %v3484
      %v3613 = vunpack.c.l.b16 %v3485
      %v3614 = vunpack.c.h.b16 %v3485
      %v3615 = vunpack.c.l.b16 %v3486
      %v3616 = vunpack.c.h.b16 %v3486
      %v3617 = vpack.c.b16 %v3561, %v3557
      %v3618 = vpack.c.b16 %v3562, %v3558
      %v3619 = vpack.c.b16 %v3563, %v3559
      %v3620 = vpack.c.b16 %v3564, %v3560
      %v3621 = vpack.c.b16 %v3569, %v3565
      %v3622 = vpack.c.b16 %v3570, %v3566
      %v3623 = vpack.c.b16 %v3571, %v3567
      %v3624 = vpack.c.b16 %v3572, %v3568
      %v3625 = vpack.c.b16 %v3577, %v3573
      %v3626 = vpack.c.b16 %v3578, %v3574
      %v3627 = vpack.c.b16 %v3579, %v3575
      %v3628 = vpack.c.b16 %v3580, %v3576
      %v3629 = vpack.c.b16 %v3585, %v3581
      %v3630 = vpack.c.b16 %v3586, %v3582
      %v3631 = vpack.c.b16 %v3587, %v3583
      %v3632 = vpack.c.b16 %v3588, %v3584
      %v3633 = vpack.c.b16 %v3593, %v3589
      %v3634 = vpack.c.b16 %v3594, %v3590
      %v3635 = vpack.c.b16 %v3595, %v3591
      %v3636 = vpack.c.b16 %v3596, %v3592
      %v3637 = vpack.c.b16 %v3601, %v3597
      %v3638 = vpack.c.b16 %v3602, %v3598
      %v3639 = vpack.c.b16 %v3603, %v3599
      %v3640 = vpack.c.b16 %v3604, %v3600
      %v3641 = vpack.c.b16 %v3609, %v3605
      %v3642 = vpack.c.b16 %v3610, %v3606
      %v3643 = vpack.c.b16 %v3611, %v3607
      %v3644 = vpack.c.b16 %v3612, %v3608
      %v3645 = vpack.c.b16 %v3613, %v3613
      %v3646 = vpack.c.b16 %v3614, %v3614
      %v3647 = vpack.c.b16 %v3615, %v3615
      %v3648 = vpack.c.b16 %v3616, %v3616
      %vm3673 = vcmask 130048
      %v3675 = vsel %vm3673, %v3620, 0
      %v3678 = vsel %vm3673, %v3624, 0
      %v3681 = vsel %vm3673, %v3628, 0
      %v3684 = vsel %vm3673, %v3632, 0
      %v3687 = vsel %vm3673, %v3636, 0
      %v3690 = vsel %vm3673, %v3640, 0
      %v3693 = vsel %vm3673, %v3644, 0
      %v3696 = vsel %vm3673, %v3648, 0
      %3698 = vmatprep.subr.bf16.mxu0 0
      %3699 = vmatpush1.bf16.msra.mxu0 %v3487
      %3700 = vmatprep.subr.bf16.mxu0 0
      %3701 = vmatpush1.bf16.msra.mxu0 %v3488
      %3702 = vmatprep.subr.bf16.mxu0 0
      %3703 = vmatpush1.bf16.msra.mxu0 %v3489
      %3704 = vmatprep.subr.bf16.mxu0 0
      %3705 = vmatpush1.bf16.msra.mxu0 %v3490
      %3706 = vmatprep.subr.bf16.mxu0 0
      %3707 = vmatpush1.bf16.msra.mxu0 %v3491
      %3708 = vmatprep.subr.bf16.mxu0 0
      %3709 = vmatpush1.bf16.msra.mxu0 %v3492
      %3710 = vmatprep.subr.bf16.mxu0 0
      %3711 = vmatpush1.bf16.msra.mxu0 %v3493
      %3712 = vmatprep.subr.bf16.mxu0 0
      %3713 = vmatpush1.bf16.msra.mxu0 %v3494
      %3714 = vmatprep.subr.bf16.mxu0 0
      %3715 = vmatpush1.bf16.msra.mxu0 %v3495
      %3716 = vmatprep.subr.bf16.mxu0 0
      %3717 = vmatpush1.bf16.msra.mxu0 %v3496
      %3718 = vmatprep.subr.bf16.mxu0 0
      %3719 = vmatpush1.bf16.msra.mxu0 %v3497
      %3720 = vmatprep.subr.bf16.mxu0 0
      %3721 = vmatpush1.bf16.msra.mxu0 %v3498
      %3722 = vmatprep.subr.bf16.mxu0 0
      %3723 = vmatpush1.bf16.msra.mxu0 %v3499
      %3724 = vmatprep.subr.bf16.mxu0 0
      %3725 = vmatpush1.bf16.msra.mxu0 %v3500
      %3726 = vmatprep.subr.bf16.mxu0 0
      %3727 = vmatpush1.bf16.msra.mxu0 %v3501
      %3728 = vmatprep.subr.bf16.mxu0 0
      %3729 = vmatpush1.bf16.msra.mxu0 %v3502
      %3730 = vmatprep.mubr.bf16.mxu0 %v3618
      %3731 = vmatmul.mubr.bf16.gmra.mrb[0].mxu0 %v3617
      %v3732 = vpop.f32.mrb[0].mxu0
      %v3733 = vadd.f32 %v3512, %v3732
      %v3734 = vpop.f32.mrb[0].mxu0
      %v3735 = vpop.f32.mrb[0].mxu0
      %v3736 = vadd.f32 %v3513, %v3735
      %v3737 = vpop.f32.mrb[0].mxu0
      %3738 = vmatprep.mubr.bf16.mxu0 %v3622
      %3739 = vmatmul.mubr.bf16.gmra.mrb[0].mxu0 %v3621
      %v3740 = vpop.f32.mrb[0].mxu0
      %v3741 = vadd.f32 %v3514, %v3740
      %v3742 = vpop.f32.mrb[0].mxu0
      %v3743 = vpop.f32.mrb[0].mxu0
      %v3744 = vadd.f32 %v3515, %v3743
      %v3745 = vpop.f32.mrb[0].mxu0
      %3746 = vmatprep.mubr.bf16.mxu0 %v3626
      %3747 = vmatmul.mubr.bf16.gmra.mrb[0].mxu0 %v3625
      %v3748 = vpop.f32.mrb[0].mxu0
      %v3749 = vadd.f32 %v3516, %v3748
      %v3750 = vpop.f32.mrb[0].mxu0
      %v3751 = vpop.f32.mrb[0].mxu0
      %v3752 = vadd.f32 %v3517, %v3751
      %v3753 = vpop.f32.mrb[0].mxu0
      %3754 = vmatprep.mubr.bf16.mxu0 %v3630
      %3755 = vmatmul.mubr.bf16.gmra.mrb[0].mxu0 %v3629
      %v3756 = vpop.f32.mrb[0].mxu0
      %v3757 = vadd.f32 %v3518, %v3756
      %v3758 = vpop.f32.mrb[0].mxu0
      %v3759 = vpop.f32.mrb[0].mxu0
      %v3760 = vadd.f32 %v3519, %v3759
      %v3761 = vpop.f32.mrb[0].mxu0
      %3762 = vmatprep.mubr.bf16.mxu0 %v3634
      %3763 = vmatmul.mubr.bf16.gmra.mrb[0].mxu0 %v3633
      %v3764 = vpop.f32.mrb[0].mxu0
      %v3765 = vadd.f32 %v3520, %v3764
      %v3766 = vpop.f32.mrb[0].mxu0
      %v3767 = vpop.f32.mrb[0].mxu0
      %v3768 = vadd.f32 %v3521, %v3767
      %v3769 = vpop.f32.mrb[0].mxu0
      %3770 = vmatprep.mubr.bf16.mxu0 %v3638
      %3771 = vmatmul.mubr.bf16.gmra.mrb[0].mxu0 %v3637
      %v3772 = vpop.f32.mrb[0].mxu0
      %v3773 = vadd.f32 %v3522, %v3772
      %v3774 = vpop.f32.mrb[0].mxu0
      %v3775 = vpop.f32.mrb[0].mxu0
      %v3776 = vadd.f32 %v3523, %v3775
      %v3777 = vpop.f32.mrb[0].mxu0
      %3778 = vmatprep.mubr.bf16.mxu0 %v3642
      %3779 = vmatmul.mubr.bf16.gmra.mrb[0].mxu0 %v3641
      %v3780 = vpop.f32.mrb[0].mxu0
      %v3781 = vadd.f32 %v3524, %v3780
      %v3782 = vpop.f32.mrb[0].mxu0
      %v3783 = vpop.f32.mrb[0].mxu0
      %v3784 = vadd.f32 %v3525, %v3783
      %v3785 = vpop.f32.mrb[0].mxu0
      %3786 = vmatprep.mubr.bf16.mxu0 %v3646
      %3787 = vmatmul.mubr.bf16.gmra.mrb[0].mxu0 %v3645
      %v3788 = vpop.f32.mrb[0].mxu0
      %v3789 = vadd.f32 %v3526, %v3788
      %v3790 = vpop.f32.mrb[0].mxu0
      %v3791 = vpop.f32.mrb[0].mxu0
      %v3792 = vpop.f32.mrb[0].mxu0
      %3793 = vdwg.mxu0
      %3794 = vmatprep.subr.bf16.mxu0 0
      %3795 = vmatpush1.bf16.msra.mxu0 %v3503
      %3796 = vmatprep.subr.bf16.mxu0 0
      %3797 = vmatpush1.bf16.msra.mxu0 %v3504
      %3798 = vmatprep.subr.bf16.mxu0 0
      %3799 = vmatpush1.bf16.msra.mxu0 %v3505
      %3800 = vmatprep.subr.bf16.mxu0 0
      %3801 = vmatpush1.bf16.msra.mxu0 %v3506
      %3802 = vmatprep.subr.bf16.mxu0 0
      %3803 = vmatpush1.bf16.msra.mxu0 %v3507
      %3804 = vmatprep.subr.bf16.mxu0 0
      %3805 = vmatpush1.bf16.msra.mxu0 %v3508
      %3806 = vmatprep.subr.bf16.mxu0 0
      %3807 = vmatpush1.bf16.msra.mxu0 %v3509
      %3808 = vmatprep.subr.bf16.mxu0 0
      %3809 = vmatpush1.bf16.msra.mxu0 %v3510
      %3810 = vmatprep.subr.bf16.mxu0 0
      %3811 = vmatpush1.bf16.msra.mxu0 %v3511
      %3812 = vmatprep.subr.bf16.mxu0 0
      %3813 = vmatpush1.bf16.msra.mxu0 0
      %3814 = vmatprep.subr.bf16.mxu0 0
      %3815 = vmatpush1.bf16.msra.mxu0 0
      %3816 = vmatprep.subr.bf16.mxu0 0
      %3817 = vmatpush1.bf16.msra.mxu0 0
      %3818 = vmatprep.subr.bf16.mxu0 0
      %3819 = vmatpush1.bf16.msra.mxu0 0
      %3820 = vmatprep.subr.bf16.mxu0 0
      %3821 = vmatpush1.bf16.msra.mxu0 0
      %3822 = vmatprep.subr.bf16.mxu0 0
      %3823 = vmatpush1.bf16.msra.mxu0 0
      %3824 = vmatprep.subr.bf16.mxu0 0
      %3825 = vmatpush1.bf16.msra.mxu0 0
      %3826 = vmatprep.mubr.bf16.mxu0 %v3675
      %3827 = vmatmul.mubr.bf16.gmra.mrb[0].mxu0 %v3619
      %v3828 = vpop.f32.mrb[0].mxu0
      %v3829 = vadd.f32 %v3733, %v3828
      %v3830 = vpop.f32.mrb[0].mxu0
      %v3831 = vpop.f32.mrb[0].mxu0
      %v3832 = vadd.f32 %v3736, %v3831
      %v3833 = vpop.f32.mrb[0].mxu0
      %3834 = vmatprep.mubr.bf16.mxu0 %v3678
      %3835 = vmatmul.mubr.bf16.gmra.mrb[0].mxu0 %v3623
      %v3836 = vpop.f32.mrb[0].mxu0
      %v3837 = vadd.f32 %v3741, %v3836
      %v3838 = vpop.f32.mrb[0].mxu0
      %v3839 = vpop.f32.mrb[0].mxu0
      %v3840 = vadd.f32 %v3744, %v3839
      %v3841 = vpop.f32.mrb[0].mxu0
      %3842 = vmatprep.mubr.bf16.mxu0 %v3681
      %3843 = vmatmul.mubr.bf16.gmra.mrb[0].mxu0 %v3627
      %v3844 = vpop.f32.mrb[0].mxu0
      %v3845 = vadd.f32 %v3749, %v3844
      %v3846 = vpop.f32.mrb[0].mxu0
      %v3847 = vpop.f32.mrb[0].mxu0
      %v3848 = vadd.f32 %v3752, %v3847
      %v3849 = vpop.f32.mrb[0].mxu0
      %3850 = vmatprep.mubr.bf16.mxu0 %v3684
      %3851 = vmatmul.mubr.bf16.gmra.mrb[0].mxu0 %v3631
      %v3852 = vpop.f32.mrb[0].mxu0
      %v3853 = vadd.f32 %v3757, %v3852
      %v3854 = vpop.f32.mrb[0].mxu0
      %v3855 = vpop.f32.mrb[0].mxu0
      %v3856 = vadd.f32 %v3760, %v3855
      %v3857 = vpop.f32.mrb[0].mxu0
      %3858 = vmatprep.mubr.bf16.mxu0 %v3687
      %3859 = vmatmul.mubr.bf16.gmra.mrb[0].mxu0 %v3635
      %v3860 = vpop.f32.mrb[0].mxu0
      %v3861 = vadd.f32 %v3765, %v3860
      %v3862 = vpop.f32.mrb[0].mxu0
      %v3863 = vpop.f32.mrb[0].mxu0
      %v3864 = vadd.f32 %v3768, %v3863
      %v3865 = vpop.f32.mrb[0].mxu0
      %3866 = vmatprep.mubr.bf16.mxu0 %v3690
      %3867 = vmatmul.mubr.bf16.gmra.mrb[0].mxu0 %v3639
      %v3868 = vpop.f32.mrb[0].mxu0
      %v3869 = vadd.f32 %v3773, %v3868
      %v3870 = vpop.f32.mrb[0].mxu0
      %v3871 = vpop.f32.mrb[0].mxu0
      %v3872 = vadd.f32 %v3776, %v3871
      %v3873 = vpop.f32.mrb[0].mxu0
      %3874 = vmatprep.mubr.bf16.mxu0 %v3693
      %3875 = vmatmul.mubr.bf16.gmra.mrb[0].mxu0 %v3643
      %v3876 = vpop.f32.mrb[0].mxu0
      %v3877 = vadd.f32 %v3781, %v3876
      %v3878 = vpop.f32.mrb[0].mxu0
      %v3879 = vpop.f32.mrb[0].mxu0
      %v3880 = vadd.f32 %v3784, %v3879
      %v3881 = vpop.f32.mrb[0].mxu0
      %3882 = vmatprep.mubr.bf16.mxu0 %v3696
      %3883 = vmatmul.mubr.bf16.gmra.mrb[0].mxu0 %v3647
      %v3884 = vpop.f32.mrb[0].mxu0
      %v3885 = vadd.f32 %v3789, %v3884
      %v3886 = vpop.f32.mrb[0].mxu0
      %v3887 = vpop.f32.mrb[0].mxu0
      %v3888 = vpop.f32.mrb[0].mxu0
      %3889 = vdwg.mxu0
      %v3890 = vmax.f32 %v3829, 0.0
      %v3891 = vmax.f32 %v3832, 0.0
      %v3892 = vmax.f32 %v3837, 0.0
      %v3893 = vmax.f32 %v3840, 0.0
      %v3894 = vmax.f32 %v3845, 0.0
      %v3895 = vmax.f32 %v3848, 0.0
      %v3896 = vmax.f32 %v3853, 0.0
      %v3897 = vmax.f32 %v3856, 0.0
      %v3898 = vmax.f32 %v3861, 0.0
      %v3899 = vmax.f32 %v3864, 0.0
      %v3900 = vmax.f32 %v3869, 0.0
      %v3901 = vmax.f32 %v3872, 0.0
      %v3902 = vmax.f32 %v3877, 0.0
      %v3903 = vmax.f32 %v3880, 0.0
      %v3904 = vmax.f32 %v3885, 0.0
      %v3905 = vpack.c.bf16 %v3891, %v3890
      %v3906 = vpack.c.bf16 %v3893, %v3892
      %v3907 = vpack.c.bf16 %v3895, %v3894
      %v3908 = vpack.c.bf16 %v3897, %v3896
      %v3909 = vpack.c.bf16 %v3899, %v3898
      %v3910 = vpack.c.bf16 %v3901, %v3900
      %v3911 = vpack.c.bf16 %v3903, %v3902
      %v3912 = vpack.c.bf16 %v3904, %v3904
      %v3913 = vld [vmem:[%s7] sm:$0xf]
      %v3914 = vld [vmem:[%s7 + $0x4] sm:$0xf]
      %v3915 = vld [vmem:[%s7 + $0x8] sm:$0xf]
      %v3916 = vld [vmem:[%s7 + $0xc] sm:$0xf]
      %v3917 = vld [vmem:[%s7 + $0x10] sm:$0xf]
      %v3918 = vld [vmem:[%s7 + $0x14] sm:$0xf]
      %v3919 = vld [vmem:[%s7 + $0x18] sm:$0xf]
      %v3920 = vld [vmem:[%s7 + $0x1c] sm:$0xf]
      %v3921 = vld [vmem:[%s7 + $0x20] sm:$0xf]
      %v3922 = vld [vmem:[%s7 + $0x24] sm:$0xf]
      %v3923 = vld [vmem:[%s7 + $0x28] sm:$0x3]
      %v3924 = vld [vmem:[%s8] sm:$0xff]
      %v3925 = vld [vmem:[%s8 + $0x8] sm:$0xff]
      %v3926 = vld [vmem:[%s8 + $0x10] sm:$0xff]
      %v3927 = vld [vmem:[%s8 + $0x18] sm:$0xff]
      %v3928 = vld [vmem:[%s8 + $0x20] sm:$0xff]
      %v3929 = vld [vmem:[%s8 + $0x28] sm:$0xff]
      %v3930 = vld [vmem:[%s8 + $0x30] sm:$0xff]
      %v3931 = vld [vmem:[%s8 + $0x38] sm:$0xff]
      %v3932 = vld [vmem:[%s8 + $0x40] sm:$0xff]
      %v3933 = vld [vmem:[%s8 + $0x48] sm:$0xff]
      %v3934 = vld [vmem:[%s8 + $0x50] sm:$0xf]
      %v3946 = vunpack.c.l.b16 %v3913
      %v3947 = vunpack.c.l.b16 %v3914
      %v3948 = vunpack.c.l.b16 %v3915
      %v3949 = vunpack.c.l.b16 %v3916
      %v3950 = vunpack.c.l.b16 %v3917
      %v3951 = vunpack.c.l.b16 %v3918
      %v3952 = vunpack.c.l.b16 %v3919
      %v3953 = vunpack.c.l.b16 %v3920
      %v3954 = vunpack.c.l.b16 %v3921
      %v3955 = vunpack.c.l.b16 %v3922
      %v3956 = vunpack.c.l.b16 %v3923
      %v3957 = vpack.c.b16 %v3947, %v3946
      %v3958 = vpack.c.b16 %v3949, %v3948
      %v3959 = vpack.c.b16 %v3951, %v3950
      %v3960 = vpack.c.b16 %v3953, %v3952
      %v3961 = vpack.c.b16 %v3955, %v3954
      %v3962 = vpack.c.b16 %v3956, %v3956
      %vm3963 = vcmask 982016
      %v3965 = vsel %vm3963, %v3957, 0
      %v3968 = vsel %vm3963, %v3958, 0
      %v3971 = vsel %vm3963, %v3959, 0
      %v3974 = vsel %vm3963, %v3960, 0
      %v3977 = vsel %vm3963, %v3961, 0
      %v3980 = vsel %vm3963, %v3962, 0
      %v3983 = vsel %vm1791, %v3912, 0
      %3985 = vmatprep.subr.bf16.mxu0 0
      %3986 = vmatpush1.bf16.msra.mxu0 %v3905
      %3987 = vmatprep.subr.bf16.mxu0 0
      %3988 = vmatpush1.bf16.msra.mxu0 %v3906
      %3989 = vmatprep.subr.bf16.mxu0 0
      %3990 = vmatpush1.bf16.msra.mxu0 %v3907
      %3991 = vmatprep.subr.bf16.mxu0 0
      %3992 = vmatpush1.bf16.msra.mxu0 %v3908
      %3993 = vmatprep.subr.bf16.mxu0 0
      %3994 = vmatpush1.bf16.msra.mxu0 %v3909
      %3995 = vmatprep.subr.bf16.mxu0 0
      %3996 = vmatpush1.bf16.msra.mxu0 %v3910
      %3997 = vmatprep.subr.bf16.mxu0 0
      %3998 = vmatpush1.bf16.msra.mxu0 %v3911
      %3999 = vmatprep.subr.bf16.mxu0 0
      %4000 = vmatpush1.bf16.msra.mxu0 %v3983
      %4001 = vmatprep.subr.bf16.mxu0 0
      %4002 = vmatpush1.bf16.msra.mxu0 0
      %4003 = vmatprep.subr.bf16.mxu0 0
      %4004 = vmatpush1.bf16.msra.mxu0 0
      %4005 = vmatprep.subr.bf16.mxu0 0
      %4006 = vmatpush1.bf16.msra.mxu0 0
      %4007 = vmatprep.subr.bf16.mxu0 0
      %4008 = vmatpush1.bf16.msra.mxu0 0
      %4009 = vmatprep.subr.bf16.mxu0 0
      %4010 = vmatpush1.bf16.msra.mxu0 0
      %4011 = vmatprep.subr.bf16.mxu0 0
      %4012 = vmatpush1.bf16.msra.mxu0 0
      %4013 = vmatprep.subr.bf16.mxu0 0
      %4014 = vmatpush1.bf16.msra.mxu0 0
      %4015 = vmatprep.subr.bf16.mxu0 0
      %4016 = vmatpush1.bf16.msra.mxu0 0
      %4017 = vmatprep.mubr.bf16.mxu0 0
      %4018 = vmatmul.mubr.bf16.gmra.mrb[0].mxu0 %v3965
      %v4019 = vpop.f32.mrb[0].mxu0
      %v4020 = vadd.f32 %v3924, %v4019
      %v4021 = vpop.f32.mrb[0].mxu0
      %v4022 = vpop.f32.mrb[0].mxu0
      %v4023 = vadd.f32 %v3925, %v4022
      %v4024 = vpop.f32.mrb[0].mxu0
      %4025 = vmatprep.mubr.bf16.mxu0 0
      %4026 = vmatmul.mubr.bf16.gmra.mrb[0].mxu0 %v3968
      %v4027 = vpop.f32.mrb[0].mxu0
      %v4028 = vadd.f32 %v3926, %v4027
      %v4029 = vpop.f32.mrb[0].mxu0
      %v4030 = vpop.f32.mrb[0].mxu0
      %v4031 = vadd.f32 %v3927, %v4030
      %v4032 = vpop.f32.mrb[0].mxu0
      %4033 = vmatprep.mubr.bf16.mxu0 0
      %4034 = vmatmul.mubr.bf16.gmra.mrb[0].mxu0 %v3971
      %v4035 = vpop.f32.mrb[0].mxu0
      %v4036 = vadd.f32 %v3928, %v4035
      %v4037 = vpop.f32.mrb[0].mxu0
      %v4038 = vpop.f32.mrb[0].mxu0
      %v4039 = vadd.f32 %v3929, %v4038
      %v4040 = vpop.f32.mrb[0].mxu0
      %4041 = vmatprep.mubr.bf16.mxu0 0
      %4042 = vmatmul.mubr.bf16.gmra.mrb[0].mxu0 %v3974
      %v4043 = vpop.f32.mrb[0].mxu0
      %v4044 = vadd.f32 %v3930, %v4043
      %v4045 = vpop.f32.mrb[0].mxu0
      %v4046 = vpop.f32.mrb[0].mxu0
      %v4047 = vadd.f32 %v3931, %v4046
      %v4048 = vpop.f32.mrb[0].mxu0
      %4049 = vmatprep.mubr.bf16.mxu0 0
      %4050 = vmatmul.mubr.bf16.gmra.mrb[0].mxu0 %v3977
      %v4051 = vpop.f32.mrb[0].mxu0
      %v4052 = vadd.f32 %v3932, %v4051
      %v4053 = vpop.f32.mrb[0].mxu0
      %v4054 = vpop.f32.mrb[0].mxu0
      %v4055 = vadd.f32 %v3933, %v4054
      %v4056 = vpop.f32.mrb[0].mxu0
      %4057 = vmatprep.mubr.bf16.mxu0 0
      %4058 = vmatmul.mubr.bf16.gmra.mrb[0].mxu0 %v3980
      %v4059 = vpop.f32.mrb[0].mxu0
      %v4060 = vadd.f32 %v3934, %v4059
      %v4061 = vpop.f32.mrb[0].mxu0
      %v4062 = vpop.f32.mrb[0].mxu0
      %v4063 = vpop.f32.mrb[0].mxu0
      %4064 = vdwg.mxu0
      %v4065 = vmax.f32 %v4020, 0.0
      %v4066 = vmax.f32 %v4023, 0.0
      %v4067 = vmax.f32 %v4028, 0.0
      %v4068 = vmax.f32 %v4031, 0.0
      %v4069 = vmax.f32 %v4036, 0.0
      %v4070 = vmax.f32 %v4039, 0.0
      %v4071 = vmax.f32 %v4044, 0.0
      %v4072 = vmax.f32 %v4047, 0.0
      %v4073 = vmax.f32 %v4052, 0.0
      %v4074 = vmax.f32 %v4055, 0.0
      %v4075 = vmax.f32 %v4060, 0.0
      %v4076 = vpack.c.bf16 %v4066, %v4065
      %v4077 = vpack.c.bf16 %v4068, %v4067
      %v4078 = vpack.c.bf16 %v4070, %v4069
      %v4079 = vpack.c.bf16 %v4072, %v4071
      %v4080 = vpack.c.bf16 %v4074, %v4073
      %v4081 = vpack.c.bf16 %v4075, %v4075
      %v4082 = vld [vmem:[%s9] sm:$0xf]
      %v4083 = vld [vmem:[%s9 + $0x4] sm:$0x1]
      %v4084 = vld [vmem:[%s10] sm:$0xff]
      %v4085 = vld [vmem:[%s10 + $0x8] sm:$0x3]
      %v4088 = vunpack.c.l.b16 %v4082
      %v4089 = vunpack.c.l.b16 %v4083
      %v4090 = vpack.c.b16 %v4089, %v4088
      %vm4091 = vcmask 687104
      %v4093 = vsel %vm4091, %v4090, 0
      %vm4095 = vcmask 1041408
      %v4097 = vsel %vm4095, %v4081, 0
      %4099 = vmatprep.subr.bf16.mxu0 0
      %4100 = vmatpush1.bf16.msra.mxu0 %v4076
      %4101 = vmatprep.subr.bf16.mxu0 0
      %4102 = vmatpush1.bf16.msra.mxu0 %v4077
      %4103 = vmatprep.subr.bf16.mxu0 0
      %4104 = vmatpush1.bf16.msra.mxu0 %v4078
      %4105 = vmatprep.subr.bf16.mxu0 0
      %4106 = vmatpush1.bf16.msra.mxu0 %v4079
      %4107 = vmatprep.subr.bf16.mxu0 0
      %4108 = vmatpush1.bf16.msra.mxu0 %v4080
      %4109 = vmatprep.subr.bf16.mxu0 0
      %4110 = vmatpush1.bf16.msra.mxu0 %v4097
      %4111 = vmatprep.subr.bf16.mxu0 0
      %4112 = vmatpush1.bf16.msra.mxu0 0
      %4113 = vmatprep.subr.bf16.mxu0 0
      %4114 = vmatpush1.bf16.msra.mxu0 0
      %4115 = vmatprep.subr.bf16.mxu0 0
      %4116 = vmatpush1.bf16.msra.mxu0 0
      %4117 = vmatprep.subr.bf16.mxu0 0
      %4118 = vmatpush1.bf16.msra.mxu0 0
      %4119 = vmatprep.subr.bf16.mxu0 0
      %4120 = vmatpush1.bf16.msra.mxu0 0
      %4121 = vmatprep.subr.bf16.mxu0 0
      %4122 = vmatpush1.bf16.msra.mxu0 0
      %4123 = vmatprep.subr.bf16.mxu0 0
      %4124 = vmatpush1.bf16.msra.mxu0 0
      %4125 = vmatprep.subr.bf16.mxu0 0
      %4126 = vmatpush1.bf16.msra.mxu0 0
      %4127 = vmatprep.subr.bf16.mxu0 0
      %4128 = vmatpush1.bf16.msra.mxu0 0
      %4129 = vmatprep.subr.bf16.mxu0 0
      %4130 = vmatpush1.bf16.msra.mxu0 0
      %4131 = vmatprep.mubr.bf16.mxu0 0
      %4132 = vmatmul.mubr.bf16.gmra.mrb[0].mxu0 %v4093
      %v4133 = vpop.f32.mrb[0].mxu0
      %v4134 = vadd.f32 %v4084, %v4133
      %v4135 = vpop.f32.mrb[0].mxu0
      %v4136 = vpop.f32.mrb[0].mxu0
      %v4137 = vadd.f32 %v4085, %v4136
      %v4138 = vpop.f32.mrb[0].mxu0
      %4139 = vdwg.mxu0
      %4140 = vst.msk [vmem:[%s388] sm:$0xff] %vm3327, %v4134
      %vm4141 = vcmask 1024
      %4142 = vst.msk [vmem:[%s388 + $0x8] sm:$0x3] %vm4141, %v4137
      %p4143 = scmp.lt.s32.totalorder %s22, 1
      %s4144 = scalar_select %p4143, %s22, 1
      %s4145 = smul.addr %s4144, 2
      %s4146 = smul.addr %s4145, 8
      %s4147 = scalar_lea.vmem %s11, %s4146
      // Predicated region
      $region65: #{lenet_forward.1} parent=63 // pred_check
        %p4148 = pneg %p276
      $region66: #{lenet_forward.1} parent=63 // pred_check_branch
        %4150 = sbr.rel (%p4148) target = $region68
      $region67: #{lenet_forward.1} parent=63 // pred_region
        _
      $region68: #{lenet_forward.1} parent=63 // pred_fallthru
        _
    $region64: #{lenet_forward.1} parent=5 // pred_fallthru
      _
    %p4151 = scmp.le.s32.totalorder 2, %s17
    // Predicated region
    $region69: #{lenet_forward.1} parent=5 // pred_check
      %p4152 = pneg %p4151
    $region70: #{lenet_forward.1} parent=5 // pred_check_branch
      %4154 = sbr.rel (%p4152) target = $region72
    $region71: #{lenet_forward.1} parent=5 // pred_region
      %s4155 = ssub.s32 %s17, 2
      // Predicated region
      $region73: #{lenet_forward.1} parent=71 // pred_check
        %p4156 = pneg %p282
      $region74: #{lenet_forward.1} parent=71 // pred_check_branch
        %4158 = sbr.rel (%p4156) target = $region76
      $region75: #{lenet_forward.1} parent=71 // pred_region
        %p4159 = scmp.lt.s32.totalorder %s23, 1
        %s4160 = scalar_select %p4159, %s23, 1
        %s4161 = smul.addr %s4160, 2
        %s4162 = smul.addr %s4161, 8
        %s4163 = scalar_lea.vmem %s11, %s4162
      $region76: #{lenet_forward.1} parent=71 // pred_fallthru
        _
    $region72: #{lenet_forward.1} parent=5 // pred_fallthru
      _
  $region6: #{lenet_forward.1} parent=0 // loop_footer
    %s21 = sadd.s32 1, %s17
  $region7: #{lenet_forward.1} parent=0 // loop_footer_branch
    %16 = sbr.rel target = $region3
  $region8: #{lenet_forward.1} parent=0 // loop_exit
    _

</llo_original>
